<compile_context>
chip_gen: v6e
topology: v6e:2x2x1
jax: 0.10.0
libtpu: 0.0.40
codegen_flags: <defaults>
</compile_context>

<pallas_src>
import jax
import jax.numpy as jnp
from jax.experimental import pallas as pl
from jax.experimental.pallas import tpu as pltpu

BLOCK_SIZE = 256
WINDOW_SIZE = BLOCK_SIZE * 2  # 512

H1 = 256          # fc1 out
H2 = 64           # fc2 out (logical)
H2P = 128         # fc2 out padded to full lane width
H3 = 256          # rfc1 out
OUT = WINDOW_SIZE # rfc2 out


def _round_up(x, m):
    return ((x + m - 1) // m) * m


def mlp_kernel(x_ref,
               w1_ref, b1_ref,
               w2_ref, b2_ref,
               w3_ref, b3_ref,
               w4_ref, b4_ref,
               o_ref):
    # x: bf16 [tile_b, 512]; weights bf16; biases f32; f32 MXU accumulation.
    x = x_ref[...]

    # fc1 + relu
    h = jnp.dot(x, w1_ref[...], preferred_element_type=jnp.float32)
    h = jnp.maximum(h + b1_ref[...], 0.0).astype(jnp.bfloat16)
    # dropout (eval) == identity

    # fc2 + relu  (output padded 64 -> 128 lanes; padded cols are exactly 0)
    h = jnp.dot(h, w2_ref[...], preferred_element_type=jnp.float32)
    h = jnp.maximum(h + b2_ref[...], 0.0).astype(jnp.bfloat16)

    # rfc1 + relu (padded input rows of w3 are 0, so math is unchanged)
    h = jnp.dot(h, w3_ref[...], preferred_element_type=jnp.float32)
    h = jnp.maximum(h + b3_ref[...], 0.0).astype(jnp.bfloat16)
    # dropout (eval) == identity

    # rfc2 (no activation), f32 output
    o = jnp.dot(h, w4_ref[...], preferred_element_type=jnp.float32) + b4_ref[...]
    o_ref[...] = o.astype(o_ref.dtype)


def _prepare_params(params):
    """Cast weights to bf16, keep biases f32, zero-pad the 64-wide bottleneck to 128."""
    w1 = params["w1"].astype(jnp.bfloat16)                    # (512, 256)
    b1 = params["b1"].astype(jnp.float32)                     # (1, 256)

    w2 = jnp.pad(params["w2"], ((0, 0), (0, H2P - H2)))       # (256, 128)
    w2 = w2.astype(jnp.bfloat16)
    b2 = jnp.pad(params["b2"], ((0, 0), (0, H2P - H2)))       # (1, 128)
    b2 = b2.astype(jnp.float32)

    w3 = jnp.pad(params["w3"], ((0, H2P - H2), (0, 0)))       # (128, 256)
    w3 = w3.astype(jnp.bfloat16)
    b3 = params["b3"].astype(jnp.float32)                     # (1, 256)

    w4 = params["w4"].astype(jnp.bfloat16)                    # (256, 512)
    b4 = params["b4"].astype(jnp.float32)                     # (1, 512)
    return w1, b1, w2, b2, w3, b3, w4, b4


def net_forward(x, params, *, tile_b=512):
    """x: [B, WINDOW_SIZE] float32. params: dict of (in,out) weights and (1,out) biases."""
    B, D = x.shape
    assert D == WINDOW_SIZE

    w1, b1, w2, b2, w3, b3, w4, b4 = _prepare_params(params)

    # Effective batch tile: big enough to feed the MXU, never bigger than the
    # (sublane-rounded) batch itself; batch is padded to a tile multiple.
    eff_tile = max(8, min(tile_b, _round_up(B, 8)))
    eff_tile = _round_up(eff_tile, 8)
    Bp = _round_up(B, eff_tile)

    x = x.astype(jnp.bfloat16)
    if Bp != B:
        x = jnp.pad(x, ((0, Bp - B), (0, 0)))

    grid = (Bp // eff_tile,)

    def full(arr):
        # invariant weight/bias block: whole array every grid step
        return pl.BlockSpec(arr.shape, lambda i: (0, 0))

    flops_per_row = 2 * (WINDOW_SIZE * H1 + H1 * H2P + H2P * H3 + H3 * OUT)
    weight_bytes = 2 * (WINDOW_SIZE * H1 + H1 * H2P + H2P * H3 + H3 * OUT)
    cost = pl.CostEstimate(
        flops=flops_per_row * Bp,
        transcendentals=0,
        bytes_accessed=Bp * WINDOW_SIZE * 2 + Bp * OUT * 4 + weight_bytes,
    )

    out = pl.pallas_call(
        mlp_kernel,
        out_shape=jax.ShapeDtypeStruct((Bp, OUT), jnp.float32),
        grid_spec=pltpu.PrefetchScalarGridSpec(
            num_scalar_prefetch=0,
            grid=grid,
            in_specs=[
                pl.BlockSpec((eff_tile, WINDOW_SIZE), lambda i: (i, 0)),
                full(w1), full(b1),
                full(w2), full(b2),
                full(w3), full(b3),
                full(w4), full(b4),
            ],
            out_specs=pl.BlockSpec((eff_tile, OUT), lambda i: (i, 0)),
        ),
        compiler_params=pltpu.CompilerParams(
            dimension_semantics=("parallel",),
            vmem_limit_bytes=32 * 1024 * 1024,
        ),
        cost_estimate=cost,
    )(x, w1, b1, w2, b2, w3, b3, w4, b4)

    return out[:B] if Bp != B else out


def init_params(key):
    """Deterministic init mirroring nn.Linear shapes; stored transposed as (in, out)."""
    ks = jax.random.split(key, 8)

    def linear(kw, kb, fan_in, fan_out):
        # PyTorch default: U(-1/sqrt(fan_in), 1/sqrt(fan_in))
        bound = 1.0 / jnp.sqrt(fan_in)
        w = jax.random.uniform(kw, (fan_in, fan_out), jnp.float32, -bound, bound)
        b = jax.random.uniform(kb, (1, fan_out), jnp.float32, -bound, bound)
        return w, b

    w1, b1 = linear(ks[0], ks[1], WINDOW_SIZE, H1)   # fc1:  512 -> 256
    w2, b2 = linear(ks[2], ks[3], H1, H2)            # fc2:  256 -> 64
    w3, b3 = linear(ks[4], ks[5], H2, H3)            # rfc1: 64  -> 256
    w4, b4 = linear(ks[6], ks[7], H3, OUT)           # rfc2: 256 -> 512
    return {"w1": w1, "b1": b1, "w2": w2, "b2": b2,
            "w3": w3, "b3": b3, "w4": w4, "b4": b4}


def net_forward_ref_f32(x, p):
    h = jnp.maximum(x @ p["w1"] + p["b1"], 0.0)
    h = jnp.maximum(h @ p["w2"] + p["b2"], 0.0)
    h = jnp.maximum(h @ p["w3"] + p["b3"], 0.0)
    return h @ p["w4"] + p["b4"]


def net_forward_ref_bf16(x, p):
    """Reference matching the kernel's bf16-operand / f32-accumulate numerics."""
    def dot(a, w):
        return jnp.dot(a.astype(jnp.bfloat16), w.astype(jnp.bfloat16),
                       preferred_element_type=jnp.float32)
    h = jnp.maximum(dot(x, p["w1"]) + p["b1"], 0.0)
    h = jnp.maximum(dot(h, p["w2"]) + p["b2"], 0.0)
    h = jnp.maximum(dot(h, p["w3"]) + p["b3"], 0.0)
    return dot(h, p["w4"]) + p["b4"]


if __name__ == "__main__":
    key = jax.random.PRNGKey(0)
    k_x, k_p = jax.random.split(key)
    params = init_params(k_p)

    # Case 1: batch large enough for a multi-step grid (2 tiles of 512).
    B1 = 1024
    x1 = jax.random.normal(k_x, (B1, WINDOW_SIZE), jnp.float32)
    out1 = jax.block_until_ready(net_forward(x1, params, tile_b=512))
    assert out1.shape == (B1, WINDOW_SIZE)
    ref1_bf16 = net_forward_ref_bf16(x1, params)
    ref1_f32 = net_forward_ref_f32(x1, params)
    assert jnp.allclose(out1, ref1_bf16, atol=1e-2, rtol=1e-2)
    assert jnp.allclose(out1, ref1_f32, atol=2.5e-1, rtol=2.5e-1)

    # Case 2: small, non-tile-multiple batch exercising the padding path.
    B2 = 200
    x2 = jax.random.normal(jax.random.PRNGKey(1), (B2, WINDOW_SIZE), jnp.float32)
    out2 = jax.block_until_ready(net_forward(x2, params, tile_b=512))
    assert out2.shape == (B2, WINDOW_SIZE)
    ref2_bf16 = net_forward_ref_bf16(x2, params)
    assert jnp.allclose(out2, ref2_bf16, atol=1e-2, rtol=1e-2)

    print("KERNEL_OK")
</pallas_src>

<mosaic_0001>
module attributes {stable_mosaic.version = 11 : i64} {
  func.func @mlp_kernel(%arg0: i32, %arg1: memref<512x512xbf16, #tpu.memory_space<vmem>>, %arg2: memref<512x256xbf16, #tpu.memory_space<vmem>>, %arg3: memref<1x256xf32, #tpu.memory_space<vmem>>, %arg4: memref<256x128xbf16, #tpu.memory_space<vmem>>, %arg5: memref<1x128xf32, #tpu.memory_space<vmem>>, %arg6: memref<128x256xbf16, #tpu.memory_space<vmem>>, %arg7: memref<1x256xf32, #tpu.memory_space<vmem>>, %arg8: memref<256x512xbf16, #tpu.memory_space<vmem>>, %arg9: memref<1x512xf32, #tpu.memory_space<vmem>>, %arg10: memref<512x512xf32, #tpu.memory_space<vmem>>) attributes {dimension_semantics = [#tpu.dimension_semantics<parallel>], iteration_bounds = array<i64: 2>, scalar_prefetch = 0 : i64, scratch_operands = 0 : i64, tpu.core_type = #tpu.core_type<tc>, window_params = [{transform_indices = @transform_0, window_bounds = array<i64: 512, 512>}, {pipeline_mode = #tpu.pipeline_mode<synchronous>, transform_indices = @transform_1, window_bounds = array<i64: 512, 256>}, {pipeline_mode = #tpu.pipeline_mode<synchronous>, transform_indices = @transform_2, window_bounds = array<i64: 1, 256>}, {pipeline_mode = #tpu.pipeline_mode<synchronous>, transform_indices = @transform_3, window_bounds = array<i64: 256, 128>}, {pipeline_mode = #tpu.pipeline_mode<synchronous>, transform_indices = @transform_4, window_bounds = array<i64: 1, 128>}, {pipeline_mode = #tpu.pipeline_mode<synchronous>, transform_indices = @transform_5, window_bounds = array<i64: 128, 256>}, {pipeline_mode = #tpu.pipeline_mode<synchronous>, transform_indices = @transform_6, window_bounds = array<i64: 1, 256>}, {pipeline_mode = #tpu.pipeline_mode<synchronous>, transform_indices = @transform_7, window_bounds = array<i64: 256, 512>}, {pipeline_mode = #tpu.pipeline_mode<synchronous>, transform_indices = @transform_8, window_bounds = array<i64: 1, 512>}, {transform_indices = @transform_9, window_bounds = array<i64: 512, 512>}]} {
    %c0 = arith.constant 0 : index
    %c0_0 = arith.constant 0 : index
    %0 = vector.load %arg1[%c0, %c0_0] : memref<512x512xbf16, #tpu.memory_space<vmem>>, vector<512x512xbf16>
    %c0_1 = arith.constant 0 : index
    %c0_2 = arith.constant 0 : index
    %1 = vector.load %arg2[%c0_1, %c0_2] : memref<512x256xbf16, #tpu.memory_space<vmem>>, vector<512x256xbf16>
    %cst = arith.constant dense<0.000000e+00> : vector<512x256xf32>
    %2 = tpu.matmul %0, %1, %cst {dimension_numbers = #tpu.dot_dimension_numbers<[1], [0], [0], [1], [0, 0, 1, 1], [], []>} : vector<512x512xbf16>, vector<512x256xbf16>, vector<512x256xf32> -> vector<512x256xf32>
    %c0_3 = arith.constant 0 : index
    %c0_4 = arith.constant 0 : index
    %3 = vector.load %arg3[%c0_3, %c0_4] : memref<1x256xf32, #tpu.memory_space<vmem>>, vector<1x256xf32>
    %4 = vector.broadcast %3 : vector<1x256xf32> to vector<512x256xf32>
    %5 = arith.addf %2, %4 : vector<512x256xf32>
    %cst_5 = arith.constant 0.000000e+00 : f32
    %6 = vector.broadcast %cst_5 : f32 to vector<512x256xf32>
    %7 = arith.maximumf %5, %6 : vector<512x256xf32>
    %8 = arith.truncf %7 : vector<512x256xf32> to vector<512x256xbf16>
    %c0_6 = arith.constant 0 : index
    %c0_7 = arith.constant 0 : index
    %9 = vector.load %arg4[%c0_6, %c0_7] : memref<256x128xbf16, #tpu.memory_space<vmem>>, vector<256x128xbf16>
    %cst_8 = arith.constant dense<0.000000e+00> : vector<512x128xf32>
    %10 = tpu.matmul %8, %9, %cst_8 {dimension_numbers = #tpu.dot_dimension_numbers<[1], [0], [0], [1], [0, 0, 1, 1], [], []>} : vector<512x256xbf16>, vector<256x128xbf16>, vector<512x128xf32> -> vector<512x128xf32>
    %c0_9 = arith.constant 0 : index
    %c0_10 = arith.constant 0 : index
    %11 = vector.load %arg5[%c0_9, %c0_10] : memref<1x128xf32, #tpu.memory_space<vmem>>, vector<1x128xf32>
    %12 = vector.broadcast %11 : vector<1x128xf32> to vector<512x128xf32>
    %13 = arith.addf %10, %12 : vector<512x128xf32>
    %cst_11 = arith.constant 0.000000e+00 : f32
    %14 = vector.broadcast %cst_11 : f32 to vector<512x128xf32>
    %15 = arith.maximumf %13, %14 : vector<512x128xf32>
    %16 = arith.truncf %15 : vector<512x128xf32> to vector<512x128xbf16>
    %c0_12 = arith.constant 0 : index
    %c0_13 = arith.constant 0 : index
    %17 = vector.load %arg6[%c0_12, %c0_13] : memref<128x256xbf16, #tpu.memory_space<vmem>>, vector<128x256xbf16>
    %cst_14 = arith.constant dense<0.000000e+00> : vector<512x256xf32>
    %18 = tpu.matmul %16, %17, %cst_14 {dimension_numbers = #tpu.dot_dimension_numbers<[1], [0], [0], [1], [0, 0, 1, 1], [], []>} : vector<512x128xbf16>, vector<128x256xbf16>, vector<512x256xf32> -> vector<512x256xf32>
    %c0_15 = arith.constant 0 : index
    %c0_16 = arith.constant 0 : index
    %19 = vector.load %arg7[%c0_15, %c0_16] : memref<1x256xf32, #tpu.memory_space<vmem>>, vector<1x256xf32>
    %20 = vector.broadcast %19 : vector<1x256xf32> to vector<512x256xf32>
    %21 = arith.addf %18, %20 : vector<512x256xf32>
    %cst_17 = arith.constant 0.000000e+00 : f32
    %22 = vector.broadcast %cst_17 : f32 to vector<512x256xf32>
    %23 = arith.maximumf %21, %22 : vector<512x256xf32>
    %24 = arith.truncf %23 : vector<512x256xf32> to vector<512x256xbf16>
    %c0_18 = arith.constant 0 : index
    %c0_19 = arith.constant 0 : index
    %25 = vector.load %arg8[%c0_18, %c0_19] : memref<256x512xbf16, #tpu.memory_space<vmem>>, vector<256x512xbf16>
    %cst_20 = arith.constant dense<0.000000e+00> : vector<512x512xf32>
    %26 = tpu.matmul %24, %25, %cst_20 {dimension_numbers = #tpu.dot_dimension_numbers<[1], [0], [0], [1], [0, 0, 1, 1], [], []>} : vector<512x256xbf16>, vector<256x512xbf16>, vector<512x512xf32> -> vector<512x512xf32>
    %c0_21 = arith.constant 0 : index
    %c0_22 = arith.constant 0 : index
    %27 = vector.load %arg9[%c0_21, %c0_22] : memref<1x512xf32, #tpu.memory_space<vmem>>, vector<1x512xf32>
    %28 = vector.broadcast %27 : vector<1x512xf32> to vector<512x512xf32>
    %29 = arith.addf %26, %28 : vector<512x512xf32>
    %c0_23 = arith.constant 0 : index
    %c0_24 = arith.constant 0 : index
    %30 = vector.load %arg10[%c0_23, %c0_24] : memref<512x512xf32, #tpu.memory_space<vmem>>, vector<512x512xf32>
    tpu.vector_store %arg10[%c0_23, %c0_24], %29 {strides = array<i32>} : memref<512x512xf32, #tpu.memory_space<vmem>>, vector<512x512xf32>,
    return
  }
  func.func @transform_0(%arg0: i32) -> (i32, i32) {
    %c0_i32 = arith.constant 0 : i32
    %c0_i32_0 = arith.constant 0 : i32
    return %arg0, %c0_i32 : i32, i32
  }
  func.func @transform_1(%arg0: i32) -> (i32, i32) {
    %c0_i32 = arith.constant 0 : i32
    %c0_i32_0 = arith.constant 0 : i32
    %c0_i32_1 = arith.constant 0 : i32
    return %c0_i32, %c0_i32_0 : i32, i32
  }
  func.func @transform_2(%arg0: i32) -> (i32, i32) {
    %c0_i32 = arith.constant 0 : i32
    %c0_i32_0 = arith.constant 0 : i32
    %c0_i32_1 = arith.constant 0 : i32
    return %c0_i32, %c0_i32_0 : i32, i32
  }
  func.func @transform_3(%arg0: i32) -> (i32, i32) {
    %c0_i32 = arith.constant 0 : i32
    %c0_i32_0 = arith.constant 0 : i32
    %c0_i32_1 = arith.constant 0 : i32
    return %c0_i32, %c0_i32_0 : i32, i32
  }
  func.func @transform_4(%arg0: i32) -> (i32, i32) {
    %c0_i32 = arith.constant 0 : i32
    %c0_i32_0 = arith.constant 0 : i32
    %c0_i32_1 = arith.constant 0 : i32
    return %c0_i32, %c0_i32_0 : i32, i32
  }
  func.func @transform_5(%arg0: i32) -> (i32, i32) {
    %c0_i32 = arith.constant 0 : i32
    %c0_i32_0 = arith.constant 0 : i32
    %c0_i32_1 = arith.constant 0 : i32
    return %c0_i32, %c0_i32_0 : i32, i32
  }
  func.func @transform_6(%arg0: i32) -> (i32, i32) {
    %c0_i32 = arith.constant 0 : i32
    %c0_i32_0 = arith.constant 0 : i32
    %c0_i32_1 = arith.constant 0 : i32
    return %c0_i32, %c0_i32_0 : i32, i32
  }
  func.func @transform_7(%arg0: i32) -> (i32, i32) {
    %c0_i32 = arith.constant 0 : i32
    %c0_i32_0 = arith.constant 0 : i32
    %c0_i32_1 = arith.constant 0 : i32
    return %c0_i32, %c0_i32_0 : i32, i32
  }
  func.func @transform_8(%arg0: i32) -> (i32, i32) {
    %c0_i32 = arith.constant 0 : i32
    %c0_i32_0 = arith.constant 0 : i32
    %c0_i32_1 = arith.constant 0 : i32
    return %c0_i32, %c0_i32_0 : i32, i32
  }
  func.func @transform_9(%arg0: i32) -> (i32, i32) {
    %c0_i32 = arith.constant 0 : i32
    %c0_i32_0 = arith.constant 0 : i32
    return %arg0, %c0_i32 : i32, i32
  }
}

</mosaic_0001>

<llo_original>
// kernel: tpu_custom_call.1
$region0: #{tpu_custom_call.1}
  #allocation0 [shape = 'u32[]', space=smem, size = 0x4, offset = 0x4, fixed_abs, tag = 'smem constant byte address 0x4 - core index']
  #allocation1 [shape = 'u32[144,128]{1,0:T(1,128)}', space=vmem, size = 0x12000, scoped, tag = 'internal scratch']
  %s0 = inlined_call_operand.hbm [shape: bf16[1024,512], index: 0, kind: input, shape index: {}]
  %s1 = inlined_call_operand.hbm [shape: bf16[512,256], index: 1, kind: input, shape index: {}]
  %s2 = inlined_call_operand.hbm [shape: f32[1,256], index: 2, kind: input, shape index: {}]
  %s3 = inlined_call_operand.hbm [shape: bf16[256,128], index: 3, kind: input, shape index: {}]
  %s4 = inlined_call_operand.hbm [shape: f32[1,128], index: 4, kind: input, shape index: {}]
  %s5 = inlined_call_operand.hbm [shape: bf16[128,256], index: 5, kind: input, shape index: {}]
  %s6 = inlined_call_operand.hbm [shape: f32[1,256], index: 6, kind: input, shape index: {}]
  %s7 = inlined_call_operand.hbm [shape: bf16[256,512], index: 7, kind: input, shape index: {}]
  %s8 = inlined_call_operand.hbm [shape: f32[1,512], index: 8, kind: input, shape index: {}]
  %s9 = inlined_call_operand.hbm [shape: f32[1024,512], index: 9, kind: output, shape index: {}]
  %s10 = sld [smem:[#allocation0]]
  $region105: #{tpu_custom_call.1} parent=0
    _
  %s12 = ssub.s32 1, %s10
  %s13 = scalar_select 0, %s12, %s10
  $region1: #{tpu_custom_call.1} parent=0
    #allocation2 [shape = 'u8[1048576]{0}', space=vmem, size = 0x100000, scoped, tag = 'input window, operand 0']
    #allocation3 [shape = 's32[2]{0}', space=sflag, size = 0x8, scoped, tag = 'scoped memory for tpu_custom_call.1']
    #allocation4 [shape = 's32[2]{0}', space=sflag, size = 0x8, scoped, tag = 'scoped memory for tpu_custom_call.1']
    #allocation5 [shape = 'u8[262144]{0}', space=vmem, size = 0x40000, scoped, tag = 'input window, operand 1, single buffered']
    #allocation6 [shape = 's32[1]{0}', space=sflag, size = 0x4, scoped, tag = 'scoped memory for tpu_custom_call.1']
    #allocation7 [shape = 'u8[1024]{0}', space=vmem, size = 0x400, scoped, tag = 'input window, operand 2, single buffered']
    #allocation8 [shape = 'u8[65536]{0}', space=vmem, size = 0x10000, scoped, tag = 'input window, operand 3, single buffered']
    #allocation9 [shape = 's32[1]{0}', space=sflag, size = 0x4, scoped, tag = 'scoped memory for tpu_custom_call.1']
    #allocation10 [shape = 'u8[512]{0}', space=vmem, size = 0x400, scoped, tag = 'input window, operand 4, single buffered']
    #allocation11 [shape = 'u8[65536]{0}', space=vmem, size = 0x10000, scoped, tag = 'input window, operand 5, single buffered']
    #allocation12 [shape = 's32[1]{0}', space=sflag, size = 0x4, scoped, tag = 'scoped memory for tpu_custom_call.1']
    #allocation13 [shape = 'u8[1024]{0}', space=vmem, size = 0x400, scoped, tag = 'input window, operand 6, single buffered']
    #allocation14 [shape = 'u8[262144]{0}', space=vmem, size = 0x40000, scoped, tag = 'input window, operand 7, single buffered']
    #allocation15 [shape = 's32[1]{0}', space=sflag, size = 0x4, scoped, tag = 'scoped memory for tpu_custom_call.1']
    #allocation16 [shape = 'u8[2048]{0}', space=vmem, size = 0x800, scoped, tag = 'input window, operand 8, single buffered']
    #allocation17 [shape = 'u8[2097152]{0}', space=vmem, size = 0x200000, scoped, tag = 'output window, operand 0']
    %14 = vsyncpa [#allocation3], 0
    %s15 = scalar_lea.sflag [#allocation3], 1
    %16 = vsyncpa %s15, 0
    %17 = vsyncpa [#allocation6], 0
    %18 = vsyncpa [#allocation9], 0
    %19 = vsyncpa [#allocation12], 0
    %20 = vsyncpa [#allocation15], 0
    %21 = vsyncpa [#allocation4], 0
    %s22 = scalar_lea.sflag [#allocation4], 1
    %23 = vsyncpa %s22, 0
    loop: start=0, step=1, limit=4
    $region2: #{tpu_custom_call.1} parent=1 // loop_pre_header
      _
    $region3: #{tpu_custom_call.1} parent=1 // loop_header
      %s25 = sphi 0, %s29
      %p26 = scmp.ge.s32.totalorder %s25, 4
      %s35 = sphi 0, %s37
      %s38 = sphi 0, %s35
      %s39 = sphi 0, %s38
      %s55 = sphi 0, %s39
      %s59 = sphi 0, %s59
      %s61 = sphi 0, %s59
      %s62 = sphi 0, %s61
      %s76 = sphi 0, %s62
      %s80 = sphi 0, %s80
      %s82 = sphi 0, %s80
      %s83 = sphi 0, %s82
      %s97 = sphi 0, %s83
      %s101 = sphi 0, %s101
      %s103 = sphi 0, %s101
      %s104 = sphi 0, %s103
      %s118 = sphi 0, %s104
      %s122 = sphi 0, %s122
      %s124 = sphi 0, %s122
      %s125 = sphi 0, %s124
      %s139 = sphi 0, %s125
      %s143 = sphi 0, %s143
      %s145 = sphi 0, %s143
      %s146 = sphi 0, %s145
      %s160 = sphi 0, %s146
      %s164 = sphi 0, %s164
      %s166 = sphi 0, %s164
      %s167 = sphi 0, %s166
      %s181 = sphi 0, %s167
      %s185 = sphi 0, %s185
      %s187 = sphi 0, %s185
      %s188 = sphi 0, %s187
      %s202 = sphi 0, %s188
      %s206 = sphi 0, %s206
      %s208 = sphi 0, %s206
      %s209 = sphi 0, %s208
      %s223 = sphi 0, %s209
      %s229 = sphi 0, %s231
      %s232 = sphi 0, %s229
      %s233 = sphi 0, %s232
      %s249 = sphi 0, %s233
    $region4: #{tpu_custom_call.1} parent=1 // loop_header_branch
      %28 = sbr.rel (%p26) target = $region8
    $region5: #{tpu_custom_call.1} parent=1 // loop_body
      %s30 = ssub.s32 %s25, 1
      %s31 = ssub.s32 %s25, 2
      %s32 = sadd.s32 %s25, 1
      %s33 = ssub.s32 %s25, %s32
      %p34 = scmp.eq.s32.totalorder %s33, 0
      %s36 = sadd.s32 %s35, 1
      %s37 = scalar_select %p34, %s35, %s36
      %p40 = pneg %p34
      %p41 = scmp.eq.s32.totalorder %s25, 1
      %p42 = por %p40, %p41
      %p43 = scmp.ne.s32.totalorder %s35, %s38
      %p44 = scmp.eq.s32.totalorder %s25, 0
      %p45 = por %p43, %p44
      %p46 = scmp.ne.s32.totalorder %s35, %s38
      %p47 = scmp.eq.s32.totalorder %s30, 1
      %p48 = por %p46, %p47
      %p49 = scmp.ne.s32.totalorder %s38, %s39
      %p50 = scmp.eq.s32.totalorder %s30, 0
      %p51 = por %p49, %p50
      %p52 = scmp.ne.s32.totalorder %s38, %s39
      %p53 = scmp.eq.s32.totalorder %s31, 1
      %p54 = por %p52, %p53
      %p56 = scmp.ne.s32.totalorder %s39, %s55
      %p57 = scmp.eq.s32.totalorder %s31, 0
      %p58 = por %p56, %p57
      %s60 = sadd.s32 %s59, 1
      %p63 = scmp.eq.s32.totalorder %s25, 1
      %p64 = scmp.ne.s32.totalorder %s59, %s61
      %p65 = scmp.eq.s32.totalorder %s25, 0
      %p66 = por %p64, %p65
      %p67 = scmp.ne.s32.totalorder %s59, %s61
      %p68 = scmp.eq.s32.totalorder %s30, 1
      %p69 = por %p67, %p68
      %p70 = scmp.ne.s32.totalorder %s61, %s62
      %p71 = scmp.eq.s32.totalorder %s30, 0
      %p72 = por %p70, %p71
      %p73 = scmp.ne.s32.totalorder %s61, %s62
      %p74 = scmp.eq.s32.totalorder %s31, 1
      %p75 = por %p73, %p74
      %p77 = scmp.ne.s32.totalorder %s62, %s76
      %p78 = scmp.eq.s32.totalorder %s31, 0
      %p79 = por %p77, %p78
      %s81 = sadd.s32 %s80, 1
      %p84 = scmp.eq.s32.totalorder %s25, 1
      %p85 = scmp.ne.s32.totalorder %s80, %s82
      %p86 = scmp.eq.s32.totalorder %s25, 0
      %p87 = por %p85, %p86
      %p88 = scmp.ne.s32.totalorder %s80, %s82
      %p89 = scmp.eq.s32.totalorder %s30, 1
      %p90 = por %p88, %p89
      %p91 = scmp.ne.s32.totalorder %s82, %s83
      %p92 = scmp.eq.s32.totalorder %s30, 0
      %p93 = por %p91, %p92
      %p94 = scmp.ne.s32.totalorder %s82, %s83
      %p95 = scmp.eq.s32.totalorder %s31, 1
      %p96 = por %p94, %p95
      %p98 = scmp.ne.s32.totalorder %s83, %s97
      %p99 = scmp.eq.s32.totalorder %s31, 0
      %p100 = por %p98, %p99
      %s102 = sadd.s32 %s101, 1
      %p105 = scmp.eq.s32.totalorder %s25, 1
      %p106 = scmp.ne.s32.totalorder %s101, %s103
      %p107 = scmp.eq.s32.totalorder %s25, 0
      %p108 = por %p106, %p107
      %p109 = scmp.ne.s32.totalorder %s101, %s103
      %p110 = scmp.eq.s32.totalorder %s30, 1
      %p111 = por %p109, %p110
      %p112 = scmp.ne.s32.totalorder %s103, %s104
      %p113 = scmp.eq.s32.totalorder %s30, 0
      %p114 = por %p112, %p113
      %p115 = scmp.ne.s32.totalorder %s103, %s104
      %p116 = scmp.eq.s32.totalorder %s31, 1
      %p117 = por %p115, %p116
      %p119 = scmp.ne.s32.totalorder %s104, %s118
      %p120 = scmp.eq.s32.totalorder %s31, 0
      %p121 = por %p119, %p120
      %s123 = sadd.s32 %s122, 1
      %p126 = scmp.eq.s32.totalorder %s25, 1
      %p127 = scmp.ne.s32.totalorder %s122, %s124
      %p128 = scmp.eq.s32.totalorder %s25, 0
      %p129 = por %p127, %p128
      %p130 = scmp.ne.s32.totalorder %s122, %s124
      %p131 = scmp.eq.s32.totalorder %s30, 1
      %p132 = por %p130, %p131
      %p133 = scmp.ne.s32.totalorder %s124, %s125
      %p134 = scmp.eq.s32.totalorder %s30, 0
      %p135 = por %p133, %p134
      %p136 = scmp.ne.s32.totalorder %s124, %s125
      %p137 = scmp.eq.s32.totalorder %s31, 1
      %p138 = por %p136, %p137
      %p140 = scmp.ne.s32.totalorder %s125, %s139
      %p141 = scmp.eq.s32.totalorder %s31, 0
      %p142 = por %p140, %p141
      %s144 = sadd.s32 %s143, 1
      %p147 = scmp.eq.s32.totalorder %s25, 1
      %p148 = scmp.ne.s32.totalorder %s143, %s145
      %p149 = scmp.eq.s32.totalorder %s25, 0
      %p150 = por %p148, %p149
      %p151 = scmp.ne.s32.totalorder %s143, %s145
      %p152 = scmp.eq.s32.totalorder %s30, 1
      %p153 = por %p151, %p152
      %p154 = scmp.ne.s32.totalorder %s145, %s146
      %p155 = scmp.eq.s32.totalorder %s30, 0
      %p156 = por %p154, %p155
      %p157 = scmp.ne.s32.totalorder %s145, %s146
      %p158 = scmp.eq.s32.totalorder %s31, 1
      %p159 = por %p157, %p158
      %p161 = scmp.ne.s32.totalorder %s146, %s160
      %p162 = scmp.eq.s32.totalorder %s31, 0
      %p163 = por %p161, %p162
      %s165 = sadd.s32 %s164, 1
      %p168 = scmp.eq.s32.totalorder %s25, 1
      %p169 = scmp.ne.s32.totalorder %s164, %s166
      %p170 = scmp.eq.s32.totalorder %s25, 0
      %p171 = por %p169, %p170
      %p172 = scmp.ne.s32.totalorder %s164, %s166
      %p173 = scmp.eq.s32.totalorder %s30, 1
      %p174 = por %p172, %p173
      %p175 = scmp.ne.s32.totalorder %s166, %s167
      %p176 = scmp.eq.s32.totalorder %s30, 0
      %p177 = por %p175, %p176
      %p178 = scmp.ne.s32.totalorder %s166, %s167
      %p179 = scmp.eq.s32.totalorder %s31, 1
      %p180 = por %p178, %p179
      %p182 = scmp.ne.s32.totalorder %s167, %s181
      %p183 = scmp.eq.s32.totalorder %s31, 0
      %p184 = por %p182, %p183
      %s186 = sadd.s32 %s185, 1
      %p189 = scmp.eq.s32.totalorder %s25, 1
      %p190 = scmp.ne.s32.totalorder %s185, %s187
      %p191 = scmp.eq.s32.totalorder %s25, 0
      %p192 = por %p190, %p191
      %p193 = scmp.ne.s32.totalorder %s185, %s187
      %p194 = scmp.eq.s32.totalorder %s30, 1
      %p195 = por %p193, %p194
      %p196 = scmp.ne.s32.totalorder %s187, %s188
      %p197 = scmp.eq.s32.totalorder %s30, 0
      %p198 = por %p196, %p197
      %p199 = scmp.ne.s32.totalorder %s187, %s188
      %p200 = scmp.eq.s32.totalorder %s31, 1
      %p201 = por %p199, %p200
      %p203 = scmp.ne.s32.totalorder %s188, %s202
      %p204 = scmp.eq.s32.totalorder %s31, 0
      %p205 = por %p203, %p204
      %s207 = sadd.s32 %s206, 1
      %p210 = scmp.eq.s32.totalorder %s25, 1
      %p211 = scmp.ne.s32.totalorder %s206, %s208
      %p212 = scmp.eq.s32.totalorder %s25, 0
      %p213 = por %p211, %p212
      %p214 = scmp.ne.s32.totalorder %s206, %s208
      %p215 = scmp.eq.s32.totalorder %s30, 1
      %p216 = por %p214, %p215
      %p217 = scmp.ne.s32.totalorder %s208, %s209
      %p218 = scmp.eq.s32.totalorder %s30, 0
      %p219 = por %p217, %p218
      %p220 = scmp.ne.s32.totalorder %s208, %s209
      %p221 = scmp.eq.s32.totalorder %s31, 1
      %p222 = por %p220, %p221
      %p224 = scmp.ne.s32.totalorder %s209, %s223
      %p225 = scmp.eq.s32.totalorder %s31, 0
      %p226 = por %p224, %p225
      %s227 = ssub.s32 %s25, %s32
      %p228 = scmp.eq.s32.totalorder %s227, 0
      %s230 = sadd.s32 %s229, 1
      %s231 = scalar_select %p228, %s229, %s230
      %p234 = pneg %p228
      %p235 = scmp.eq.s32.totalorder %s25, 1
      %p236 = por %p234, %p235
      %p237 = scmp.ne.s32.totalorder %s229, %s232
      %p238 = scmp.eq.s32.totalorder %s25, 0
      %p239 = por %p237, %p238
      %p240 = scmp.ne.s32.totalorder %s229, %s232
      %p241 = scmp.eq.s32.totalorder %s30, 1
      %p242 = por %p240, %p241
      %p243 = scmp.ne.s32.totalorder %s232, %s233
      %p244 = scmp.eq.s32.totalorder %s30, 0
      %p245 = por %p243, %p244
      %p246 = scmp.ne.s32.totalorder %s232, %s233
      %p247 = scmp.eq.s32.totalorder %s31, 1
      %p248 = por %p246, %p247
      %p250 = scmp.ne.s32.totalorder %s233, %s249
      %p251 = scmp.eq.s32.totalorder %s31, 0
      %p252 = por %p250, %p251
      %p253 = scmp.le.s32.totalorder 1, %s25
      %p254 = scmp.lt.s32.totalorder %s25, 3
      %p255 = pnand %p253, %p254
      %p256 = pneg %p255
      // Predicated region
      $region9: #{tpu_custom_call.1} parent=5 // pred_check
        _
      $region10: #{tpu_custom_call.1} parent=5 // pred_check_branch
        %258 = sbr.rel (%p255) target = $region12
      $region11: #{tpu_custom_call.1} parent=5 // pred_region
        %s259 = ssub.s32 %s25, 1
        // Predicated region
        $region13: #{tpu_custom_call.1} parent=11 // pred_check
          %p260 = pneg %p72
        $region14: #{tpu_custom_call.1} parent=11 // pred_check_branch
          %262 = sbr.rel (%p260) target = $region16
        $region15: #{tpu_custom_call.1} parent=11 // pred_region
          %s264 = ssub.s32 8192, 8192
          %265 = vsyncadd [#allocation6], %s264
          %s266 = sshll.u32 [#allocation5], 4
          %s267 = int_to_ptr.vmem [resolvable:$true] %s266
          %272 = dma.hbm_to_vmem [thread:$0]  %s1, 8192, %s267, [#allocation6], 128, 128, 8
        $region16: #{tpu_custom_call.1} parent=11 // pred_fallthru
          _
        // Predicated region
        $region17: #{tpu_custom_call.1} parent=11 // pred_check
          %p273 = pneg %p93
        $region18: #{tpu_custom_call.1} parent=11 // pred_check_branch
          %275 = sbr.rel (%p273) target = $region20
        $region19: #{tpu_custom_call.1} parent=11 // pred_region
          %s277 = ssub.s32 32, 32
          %278 = vsyncadd [#allocation6], %s277
          %s280 = sshll.u32 [#allocation7], 4
          %s281 = int_to_ptr.vmem [resolvable:$true] %s280
          %283 = dma.hbm_to_vmem [thread:$0]  %s2, 32, %s281, [#allocation6]
        $region20: #{tpu_custom_call.1} parent=11 // pred_fallthru
          _
        // Predicated region
        $region21: #{tpu_custom_call.1} parent=11 // pred_check
          %p284 = pneg %p114
        $region22: #{tpu_custom_call.1} parent=11 // pred_check_branch
          %286 = sbr.rel (%p284) target = $region24
        $region23: #{tpu_custom_call.1} parent=11 // pred_region
          %s288 = ssub.s32 2048, 2048
          %289 = vsyncadd [#allocation9], %s288
          %s290 = sshll.u32 [#allocation8], 4
          %s291 = int_to_ptr.vmem [resolvable:$true] %s290
          %296 = dma.hbm_to_vmem [thread:$0]  %s3, 2048, %s291, [#allocation9], 64, 64, 4
        $region24: #{tpu_custom_call.1} parent=11 // pred_fallthru
          _
        // Predicated region
        $region25: #{tpu_custom_call.1} parent=11 // pred_check
          %p297 = pneg %p135
        $region26: #{tpu_custom_call.1} parent=11 // pred_check_branch
          %299 = sbr.rel (%p297) target = $region28
        $region27: #{tpu_custom_call.1} parent=11 // pred_region
          %s301 = ssub.s32 16, 16
          %302 = vsyncadd [#allocation9], %s301
          %s304 = sshll.u32 [#allocation10], 4
          %s305 = int_to_ptr.vmem [resolvable:$true] %s304
          %307 = dma.hbm_to_vmem [thread:$0]  %s4, 16, %s305, [#allocation9]
        $region28: #{tpu_custom_call.1} parent=11 // pred_fallthru
          _
        // Predicated region
        $region29: #{tpu_custom_call.1} parent=11 // pred_check
          %p308 = pneg %p156
        $region30: #{tpu_custom_call.1} parent=11 // pred_check_branch
          %310 = sbr.rel (%p308) target = $region32
        $region31: #{tpu_custom_call.1} parent=11 // pred_region
          %s312 = ssub.s32 2048, 2048
          %313 = vsyncadd [#allocation12], %s312
          %s314 = sshll.u32 [#allocation11], 4
          %s315 = int_to_ptr.vmem [resolvable:$true] %s314
          %320 = dma.hbm_to_vmem [thread:$0]  %s5, 2048, %s315, [#allocation12], 128, 128, 8
        $region32: #{tpu_custom_call.1} parent=11 // pred_fallthru
          _
        // Predicated region
        $region33: #{tpu_custom_call.1} parent=11 // pred_check
          %p321 = pneg %p177
        $region34: #{tpu_custom_call.1} parent=11 // pred_check_branch
          %323 = sbr.rel (%p321) target = $region36
        $region35: #{tpu_custom_call.1} parent=11 // pred_region
          %s325 = ssub.s32 32, 32
          %326 = vsyncadd [#allocation12], %s325
          %s328 = sshll.u32 [#allocation13], 4
          %s329 = int_to_ptr.vmem [resolvable:$true] %s328
          %331 = dma.hbm_to_vmem [thread:$0]  %s6, 32, %s329, [#allocation12]
        $region36: #{tpu_custom_call.1} parent=11 // pred_fallthru
          _
        // Predicated region
        $region37: #{tpu_custom_call.1} parent=11 // pred_check
          %p332 = pneg %p198
        $region38: #{tpu_custom_call.1} parent=11 // pred_check_branch
          %334 = sbr.rel (%p332) target = $region40
        $region39: #{tpu_custom_call.1} parent=11 // pred_region
          %s336 = ssub.s32 8192, 8192
          %337 = vsyncadd [#allocation15], %s336
          %s338 = sshll.u32 [#allocation14], 4
          %s339 = int_to_ptr.vmem [resolvable:$true] %s338
          %344 = dma.hbm_to_vmem [thread:$0]  %s7, 8192, %s339, [#allocation15], 256, 256, 16
        $region40: #{tpu_custom_call.1} parent=11 // pred_fallthru
          _
        // Predicated region
        $region41: #{tpu_custom_call.1} parent=11 // pred_check
          %p345 = pneg %p219
        $region42: #{tpu_custom_call.1} parent=11 // pred_check_branch
          %347 = sbr.rel (%p345) target = $region44
        $region43: #{tpu_custom_call.1} parent=11 // pred_region
          %s349 = ssub.s32 64, 64
          %350 = vsyncadd [#allocation15], %s349
          %s352 = sshll.u32 [#allocation16], 4
          %s353 = int_to_ptr.vmem [resolvable:$true] %s352
          %355 = dma.hbm_to_vmem [thread:$0]  %s8, 64, %s353, [#allocation15]
        $region44: #{tpu_custom_call.1} parent=11 // pred_fallthru
          _
      $region12: #{tpu_custom_call.1} parent=5 // pred_fallthru
        _
      %p356 = scmp.lt.s32.totalorder %s25, 2
      // Predicated region
      $region45: #{tpu_custom_call.1} parent=5 // pred_check
        %p357 = pneg %p356
      $region46: #{tpu_custom_call.1} parent=5 // pred_check_branch
        %359 = sbr.rel (%p357) target = $region48
      $region47: #{tpu_custom_call.1} parent=5 // pred_region
        // Predicated region
        $region49: #{tpu_custom_call.1} parent=47 // pred_check
          %p360 = pneg %p45
        $region50: #{tpu_custom_call.1} parent=47 // pred_check_branch
          %362 = sbr.rel (%p360) target = $region52
        $region51: #{tpu_custom_call.1} parent=47 // pred_region
          %s363 = sand.u32 %s35, 1
          %s364 = scalar_lea.sflag [#allocation3], %s363
          %s365 = sand.u32 %s35, 1
          %s366 = smul.addr %s365, 1024
          %s367 = scalar_lea.vmem [#allocation2], %s366
          %s368 = smul.u32 64, %s25
          %s370 = ssub.s32 16384, 16384
          %371 = vsyncadd %s364, %s370
          %s372 = smul.addr %s368, 4
          %s373 = smul.addr %s372, 64
          %s374 = scalar_lea.hbm %s0, %s373
          %s375 = sshll.u32 %s367, 4
          %s376 = int_to_ptr.vmem [resolvable:$true] %s375
          %381 = dma.hbm_to_vmem [thread:$0]  %s374, 16384, %s376, %s364, 256, 256, 16
        $region52: #{tpu_custom_call.1} parent=47 // pred_fallthru
          _
      $region48: #{tpu_custom_call.1} parent=5 // pred_fallthru
        _
      %p382 = scmp.le.s32.totalorder 1, %s25
      %p383 = scmp.lt.s32.totalorder %s25, 3
      %p384 = pnand %p382, %p383
      %p385 = pneg %p384
      // Predicated region
      $region53: #{tpu_custom_call.1} parent=5 // pred_check
        _
      $region54: #{tpu_custom_call.1} parent=5 // pred_check_branch
        %387 = sbr.rel (%p384) target = $region56
      $region55: #{tpu_custom_call.1} parent=5 // pred_region
        %s388 = ssub.s32 %s25, 1
        %s389 = sand.u32 %s38, 1
        %s390 = scalar_lea.sflag [#allocation3], %s389
        %s391 = sand.u32 %s38, 1
        %s392 = smul.addr %s391, 1024
        %s393 = scalar_lea.vmem [#allocation2], %s392
        // Predicated region
        $region57: #{tpu_custom_call.1} parent=55 // pred_check
          %p394 = pneg %p51
        $region58: #{tpu_custom_call.1} parent=55 // pred_check_branch
          %396 = sbr.rel (%p394) target = $region60
        $region59: #{tpu_custom_call.1} parent=55 // pred_region
          %397 = dma.done %s390, 16384
        $region60: #{tpu_custom_call.1} parent=55 // pred_fallthru
          _
        // Predicated region
        $region61: #{tpu_custom_call.1} parent=55 // pred_check
          %p398 = pneg %p72
        $region62: #{tpu_custom_call.1} parent=55 // pred_check_branch
          %400 = sbr.rel (%p398) target = $region64
        $region63: #{tpu_custom_call.1} parent=55 // pred_region
          %401 = dma.done [#allocation6], 8192
        $region64: #{tpu_custom_call.1} parent=55 // pred_fallthru
          _
        // Predicated region
        $region65: #{tpu_custom_call.1} parent=55 // pred_check
          %p402 = pneg %p93
        $region66: #{tpu_custom_call.1} parent=55 // pred_check_branch
          %404 = sbr.rel (%p402) target = $region68
        $region67: #{tpu_custom_call.1} parent=55 // pred_region
          %405 = dma.done [#allocation6], 32
        $region68: #{tpu_custom_call.1} parent=55 // pred_fallthru
          _
        // Predicated region
        $region69: #{tpu_custom_call.1} parent=55 // pred_check
          %p406 = pneg %p114
        $region70: #{tpu_custom_call.1} parent=55 // pred_check_branch
          %408 = sbr.rel (%p406) target = $region72
        $region71: #{tpu_custom_call.1} parent=55 // pred_region
          %409 = dma.done [#allocation9], 2048
        $region72: #{tpu_custom_call.1} parent=55 // pred_fallthru
          _
        // Predicated region
        $region73: #{tpu_custom_call.1} parent=55 // pred_check
          %p410 = pneg %p135
        $region74: #{tpu_custom_call.1} parent=55 // pred_check_branch
          %412 = sbr.rel (%p410) target = $region76
        $region75: #{tpu_custom_call.1} parent=55 // pred_region
          %413 = dma.done [#allocation9], 16
        $region76: #{tpu_custom_call.1} parent=55 // pred_fallthru
          _
        // Predicated region
        $region77: #{tpu_custom_call.1} parent=55 // pred_check
          %p414 = pneg %p156
        $region78: #{tpu_custom_call.1} parent=55 // pred_check_branch
          %416 = sbr.rel (%p414) target = $region80
        $region79: #{tpu_custom_call.1} parent=55 // pred_region
          %417 = dma.done [#allocation12], 2048
        $region80: #{tpu_custom_call.1} parent=55 // pred_fallthru
          _
        // Predicated region
        $region81: #{tpu_custom_call.1} parent=55 // pred_check
          %p418 = pneg %p177
        $region82: #{tpu_custom_call.1} parent=55 // pred_check_branch
          %420 = sbr.rel (%p418) target = $region84
        $region83: #{tpu_custom_call.1} parent=55 // pred_region
          %421 = dma.done [#allocation12], 32
        $region84: #{tpu_custom_call.1} parent=55 // pred_fallthru
          _
        // Predicated region
        $region85: #{tpu_custom_call.1} parent=55 // pred_check
          %p422 = pneg %p198
        $region86: #{tpu_custom_call.1} parent=55 // pred_check_branch
          %424 = sbr.rel (%p422) target = $region88
        $region87: #{tpu_custom_call.1} parent=55 // pred_region
          %425 = dma.done [#allocation15], 8192
        $region88: #{tpu_custom_call.1} parent=55 // pred_fallthru
          _
        // Predicated region
        $region89: #{tpu_custom_call.1} parent=55 // pred_check
          %p426 = pneg %p219
        $region90: #{tpu_custom_call.1} parent=55 // pred_check_branch
          %428 = sbr.rel (%p426) target = $region92
        $region91: #{tpu_custom_call.1} parent=55 // pred_region
          %429 = dma.done [#allocation15], 64
        $region92: #{tpu_custom_call.1} parent=55 // pred_fallthru
          _
        %s430 = sand.u32 %s38, 1
        %s431 = scalar_lea.sflag [#allocation3], %s430
        %s432 = sand.u32 %s38, 1
        %s433 = smul.addr %s432, 1024
        %s434 = scalar_lea.vmem [#allocation2], %s433
        %p435 = pneg %p51
        %p436 = pneg %p48
        %p437 = pneg %p72
        %p438 = pneg %p69
        %p439 = pneg %p93
        %p440 = pneg %p90
        %p441 = pneg %p114
        %p442 = pneg %p111
        %p443 = pneg %p135
        %p444 = pneg %p132
        %p445 = pneg %p156
        %p446 = pneg %p153
        %p447 = pneg %p177
        %p448 = pneg %p174
        %p449 = pneg %p198
        %p450 = pneg %p195
        %p451 = pneg %p219
        %p452 = pneg %p216
        %p453 = pneg %p245
        %p454 = pneg %p242
        %s455 = sand.u32 %s232, 1
        %s456 = scalar_lea.sflag [#allocation4], %s455
        %s457 = sand.u32 %s232, 1
        %s458 = smul.addr %s457, 2048
        %s459 = scalar_lea.vmem [#allocation17], %s458
        %s460 = smul.u32 64, %s30
        %s461 = smul.u32 64, %s30
        %v463 = vld [vmem:[%s393] sm:$0xff]
        %v464 = vld [vmem:[%s393 + $0x8] sm:$0xff]
        %v465 = vld [vmem:[%s393 + $0x10] sm:$0xff]
        %v466 = vld [vmem:[%s393 + $0x18] sm:$0xff]
        %v467 = vld [vmem:[%s393 + $0x20] sm:$0xff]
        %v468 = vld [vmem:[%s393 + $0x28] sm:$0xff]
        %v469 = vld [vmem:[%s393 + $0x30] sm:$0xff]
        %v470 = vld [vmem:[%s393 + $0x38] sm:$0xff]
        %v471 = vld [vmem:[%s393 + $0x40] sm:$0xff]
        %v472 = vld [vmem:[%s393 + $0x48] sm:$0xff]
        %v473 = vld [vmem:[%s393 + $0x50] sm:$0xff]
        %v474 = vld [vmem:[%s393 + $0x58] sm:$0xff]
        %v475 = vld [vmem:[%s393 + $0x60] sm:$0xff]
        %v476 = vld [vmem:[%s393 + $0x68] sm:$0xff]
        %v477 = vld [vmem:[%s393 + $0x70] sm:$0xff]
        %v478 = vld [vmem:[%s393 + $0x78] sm:$0xff]
        %v479 = vld [vmem:[%s393 + $0x80] sm:$0xff]
        %v480 = vld [vmem:[%s393 + $0x88] sm:$0xff]
        %v481 = vld [vmem:[%s393 + $0x90] sm:$0xff]
        %v482 = vld [vmem:[%s393 + $0x98] sm:$0xff]
        %v483 = vld [vmem:[%s393 + $0xa0] sm:$0xff]
        %v484 = vld [vmem:[%s393 + $0xa8] sm:$0xff]
        %v485 = vld [vmem:[%s393 + $0xb0] sm:$0xff]
        %v486 = vld [vmem:[%s393 + $0xb8] sm:$0xff]
        %v487 = vld [vmem:[%s393 + $0xc0] sm:$0xff]
        %v488 = vld [vmem:[%s393 + $0xc8] sm:$0xff]
        %v489 = vld [vmem:[%s393 + $0xd0] sm:$0xff]
        %v490 = vld [vmem:[%s393 + $0xd8] sm:$0xff]
        %v491 = vld [vmem:[%s393 + $0xe0] sm:$0xff]
        %v492 = vld [vmem:[%s393 + $0xe8] sm:$0xff]
        %v493 = vld [vmem:[%s393 + $0xf0] sm:$0xff]
        %v494 = vld [vmem:[%s393 + $0xf8] sm:$0xff]
        %v495 = vld [vmem:[%s393 + $0x100] sm:$0xff]
        %v496 = vld [vmem:[%s393 + $0x108] sm:$0xff]
        %v497 = vld [vmem:[%s393 + $0x110] sm:$0xff]
        %v498 = vld [vmem:[%s393 + $0x118] sm:$0xff]
        %v499 = vld [vmem:[%s393 + $0x120] sm:$0xff]
        %v500 = vld [vmem:[%s393 + $0x128] sm:$0xff]
        %v501 = vld [vmem:[%s393 + $0x130] sm:$0xff]
        %v502 = vld [vmem:[%s393 + $0x138] sm:$0xff]
        %v503 = vld [vmem:[%s393 + $0x140] sm:$0xff]
        %v504 = vld [vmem:[%s393 + $0x148] sm:$0xff]
        %v505 = vld [vmem:[%s393 + $0x150] sm:$0xff]
        %v506 = vld [vmem:[%s393 + $0x158] sm:$0xff]
        %v507 = vld [vmem:[%s393 + $0x160] sm:$0xff]
        %v508 = vld [vmem:[%s393 + $0x168] sm:$0xff]
        %v509 = vld [vmem:[%s393 + $0x170] sm:$0xff]
        %v510 = vld [vmem:[%s393 + $0x178] sm:$0xff]
        %v511 = vld [vmem:[%s393 + $0x180] sm:$0xff]
        %v512 = vld [vmem:[%s393 + $0x188] sm:$0xff]
        %v513 = vld [vmem:[%s393 + $0x190] sm:$0xff]
        %v514 = vld [vmem:[%s393 + $0x198] sm:$0xff]
        %v515 = vld [vmem:[%s393 + $0x1a0] sm:$0xff]
        %v516 = vld [vmem:[%s393 + $0x1a8] sm:$0xff]
        %v517 = vld [vmem:[%s393 + $0x1b0] sm:$0xff]
        %v518 = vld [vmem:[%s393 + $0x1b8] sm:$0xff]
        %v519 = vld [vmem:[%s393 + $0x1c0] sm:$0xff]
        %v520 = vld [vmem:[%s393 + $0x1c8] sm:$0xff]
        %v521 = vld [vmem:[%s393 + $0x1d0] sm:$0xff]
        %v522 = vld [vmem:[%s393 + $0x1d8] sm:$0xff]
        %v523 = vld [vmem:[%s393 + $0x1e0] sm:$0xff]
        %v524 = vld [vmem:[%s393 + $0x1e8] sm:$0xff]
        %v525 = vld [vmem:[%s393 + $0x1f0] sm:$0xff]
        %v526 = vld [vmem:[%s393 + $0x1f8] sm:$0xff]
        %v527 = vld [vmem:[%s393 + $0x200] sm:$0xff]
        %v528 = vld [vmem:[%s393 + $0x208] sm:$0xff]
        %v529 = vld [vmem:[%s393 + $0x210] sm:$0xff]
        %v530 = vld [vmem:[%s393 + $0x218] sm:$0xff]
        %v531 = vld [vmem:[%s393 + $0x220] sm:$0xff]
        %v532 = vld [vmem:[%s393 + $0x228] sm:$0xff]
        %v533 = vld [vmem:[%s393 + $0x230] sm:$0xff]
        %v534 = vld [vmem:[%s393 + $0x238] sm:$0xff]
        %v535 = vld [vmem:[%s393 + $0x240] sm:$0xff]
        %v536 = vld [vmem:[%s393 + $0x248] sm:$0xff]
        %v537 = vld [vmem:[%s393 + $0x250] sm:$0xff]
        %v538 = vld [vmem:[%s393 + $0x258] sm:$0xff]
        %v539 = vld [vmem:[%s393 + $0x260] sm:$0xff]
        %v540 = vld [vmem:[%s393 + $0x268] sm:$0xff]
        %v541 = vld [vmem:[%s393 + $0x270] sm:$0xff]
        %v542 = vld [vmem:[%s393 + $0x278] sm:$0xff]
        %v543 = vld [vmem:[%s393 + $0x280] sm:$0xff]
        %v544 = vld [vmem:[%s393 + $0x288] sm:$0xff]
        %v545 = vld [vmem:[%s393 + $0x290] sm:$0xff]
        %v546 = vld [vmem:[%s393 + $0x298] sm:$0xff]
        %v547 = vld [vmem:[%s393 + $0x2a0] sm:$0xff]
        %v548 = vld [vmem:[%s393 + $0x2a8] sm:$0xff]
        %v549 = vld [vmem:[%s393 + $0x2b0] sm:$0xff]
        %v550 = vld [vmem:[%s393 + $0x2b8] sm:$0xff]
        %v551 = vld [vmem:[%s393 + $0x2c0] sm:$0xff]
        %v552 = vld [vmem:[%s393 + $0x2c8] sm:$0xff]
        %v553 = vld [vmem:[%s393 + $0x2d0] sm:$0xff]
        %v554 = vld [vmem:[%s393 + $0x2d8] sm:$0xff]
        %v555 = vld [vmem:[%s393 + $0x2e0] sm:$0xff]
        %v556 = vld [vmem:[%s393 + $0x2e8] sm:$0xff]
        %v557 = vld [vmem:[%s393 + $0x2f0] sm:$0xff]
        %v558 = vld [vmem:[%s393 + $0x2f8] sm:$0xff]
        %v559 = vld [vmem:[%s393 + $0x300] sm:$0xff]
        %v560 = vld [vmem:[%s393 + $0x308] sm:$0xff]
        %v561 = vld [vmem:[%s393 + $0x310] sm:$0xff]
        %v562 = vld [vmem:[%s393 + $0x318] sm:$0xff]
        %v563 = vld [vmem:[%s393 + $0x320] sm:$0xff]
        %v564 = vld [vmem:[%s393 + $0x328] sm:$0xff]
        %v565 = vld [vmem:[%s393 + $0x330] sm:$0xff]
        %v566 = vld [vmem:[%s393 + $0x338] sm:$0xff]
        %v567 = vld [vmem:[%s393 + $0x340] sm:$0xff]
        %v568 = vld [vmem:[%s393 + $0x348] sm:$0xff]
        %v569 = vld [vmem:[%s393 + $0x350] sm:$0xff]
        %v570 = vld [vmem:[%s393 + $0x358] sm:$0xff]
        %v571 = vld [vmem:[%s393 + $0x360] sm:$0xff]
        %v572 = vld [vmem:[%s393 + $0x368] sm:$0xff]
        %v573 = vld [vmem:[%s393 + $0x370] sm:$0xff]
        %v574 = vld [vmem:[%s393 + $0x378] sm:$0xff]
        %v575 = vld [vmem:[%s393 + $0x380] sm:$0xff]
        %v576 = vld [vmem:[%s393 + $0x388] sm:$0xff]
        %v577 = vld [vmem:[%s393 + $0x390] sm:$0xff]
        %v578 = vld [vmem:[%s393 + $0x398] sm:$0xff]
        %v579 = vld [vmem:[%s393 + $0x3a0] sm:$0xff]
        %v580 = vld [vmem:[%s393 + $0x3a8] sm:$0xff]
        %v581 = vld [vmem:[%s393 + $0x3b0] sm:$0xff]
        %v582 = vld [vmem:[%s393 + $0x3b8] sm:$0xff]
        %v583 = vld [vmem:[%s393 + $0x3c0] sm:$0xff]
        %v584 = vld [vmem:[%s393 + $0x3c8] sm:$0xff]
        %v585 = vld [vmem:[%s393 + $0x3d0] sm:$0xff]
        %v586 = vld [vmem:[%s393 + $0x3d8] sm:$0xff]
        %v587 = vld [vmem:[%s393 + $0x3e0] sm:$0xff]
        %v588 = vld [vmem:[%s393 + $0x3e8] sm:$0xff]
        %v589 = vld [vmem:[%s393 + $0x3f0] sm:$0xff]
        %v590 = vld [vmem:[%s393 + $0x3f8] sm:$0xff]
        %v591 = vld [vmem:[#allocation5] sm:$0xff]
        %v592 = vld [vmem:[#allocation5 + $0x8] sm:$0xff]
        %v593 = vld [vmem:[#allocation5 + $0x10] sm:$0xff]
        %v594 = vld [vmem:[#allocation5 + $0x18] sm:$0xff]
        %v595 = vld [vmem:[#allocation5 + $0x20] sm:$0xff]
        %v596 = vld [vmem:[#allocation5 + $0x28] sm:$0xff]
        %v597 = vld [vmem:[#allocation5 + $0x30] sm:$0xff]
        %v598 = vld [vmem:[#allocation5 + $0x38] sm:$0xff]
        %v599 = vld [vmem:[#allocation5 + $0x40] sm:$0xff]
        %v600 = vld [vmem:[#allocation5 + $0x48] sm:$0xff]
        %v601 = vld [vmem:[#allocation5 + $0x50] sm:$0xff]
        %v602 = vld [vmem:[#allocation5 + $0x58] sm:$0xff]
        %v603 = vld [vmem:[#allocation5 + $0x60] sm:$0xff]
        %v604 = vld [vmem:[#allocation5 + $0x68] sm:$0xff]
        %v605 = vld [vmem:[#allocation5 + $0x70] sm:$0xff]
        %v606 = vld [vmem:[#allocation5 + $0x78] sm:$0xff]
        %v607 = vld [vmem:[#allocation5 + $0x80] sm:$0xff]
        %v608 = vld [vmem:[#allocation5 + $0x88] sm:$0xff]
        %v609 = vld [vmem:[#allocation5 + $0x90] sm:$0xff]
        %v610 = vld [vmem:[#allocation5 + $0x98] sm:$0xff]
        %v611 = vld [vmem:[#allocation5 + $0xa0] sm:$0xff]
        %v612 = vld [vmem:[#allocation5 + $0xa8] sm:$0xff]
        %v613 = vld [vmem:[#allocation5 + $0xb0] sm:$0xff]
        %v614 = vld [vmem:[#allocation5 + $0xb8] sm:$0xff]
        %v615 = vld [vmem:[#allocation5 + $0xc0] sm:$0xff]
        %v616 = vld [vmem:[#allocation5 + $0xc8] sm:$0xff]
        %v617 = vld [vmem:[#allocation5 + $0xd0] sm:$0xff]
        %v618 = vld [vmem:[#allocation5 + $0xd8] sm:$0xff]
        %v619 = vld [vmem:[#allocation5 + $0xe0] sm:$0xff]
        %v620 = vld [vmem:[#allocation5 + $0xe8] sm:$0xff]
        %v621 = vld [vmem:[#allocation5 + $0xf0] sm:$0xff]
        %v622 = vld [vmem:[#allocation5 + $0xf8] sm:$0xff]
        %v623 = vld [vmem:[#allocation5 + $0x100] sm:$0xff]
        %v624 = vld [vmem:[#allocation5 + $0x108] sm:$0xff]
        %v625 = vld [vmem:[#allocation5 + $0x110] sm:$0xff]
        %v626 = vld [vmem:[#allocation5 + $0x118] sm:$0xff]
        %v627 = vld [vmem:[#allocation5 + $0x120] sm:$0xff]
        %v628 = vld [vmem:[#allocation5 + $0x128] sm:$0xff]
        %v629 = vld [vmem:[#allocation5 + $0x130] sm:$0xff]
        %v630 = vld [vmem:[#allocation5 + $0x138] sm:$0xff]
        %v631 = vld [vmem:[#allocation5 + $0x140] sm:$0xff]
        %v632 = vld [vmem:[#allocation5 + $0x148] sm:$0xff]
        %v633 = vld [vmem:[#allocation5 + $0x150] sm:$0xff]
        %v634 = vld [vmem:[#allocation5 + $0x158] sm:$0xff]
        %v635 = vld [vmem:[#allocation5 + $0x160] sm:$0xff]
        %v636 = vld [vmem:[#allocation5 + $0x168] sm:$0xff]
        %v637 = vld [vmem:[#allocation5 + $0x170] sm:$0xff]
        %v638 = vld [vmem:[#allocation5 + $0x178] sm:$0xff]
        %v639 = vld [vmem:[#allocation5 + $0x180] sm:$0xff]
        %v640 = vld [vmem:[#allocation5 + $0x188] sm:$0xff]
        %v641 = vld [vmem:[#allocation5 + $0x190] sm:$0xff]
        %v642 = vld [vmem:[#allocation5 + $0x198] sm:$0xff]
        %v643 = vld [vmem:[#allocation5 + $0x1a0] sm:$0xff]
        %v644 = vld [vmem:[#allocation5 + $0x1a8] sm:$0xff]
        %v645 = vld [vmem:[#allocation5 + $0x1b0] sm:$0xff]
        %v646 = vld [vmem:[#allocation5 + $0x1b8] sm:$0xff]
        %v647 = vld [vmem:[#allocation5 + $0x1c0] sm:$0xff]
        %v648 = vld [vmem:[#allocation5 + $0x1c8] sm:$0xff]
        %v649 = vld [vmem:[#allocation5 + $0x1d0] sm:$0xff]
        %v650 = vld [vmem:[#allocation5 + $0x1d8] sm:$0xff]
        %v651 = vld [vmem:[#allocation5 + $0x1e0] sm:$0xff]
        %v652 = vld [vmem:[#allocation5 + $0x1e8] sm:$0xff]
        %v653 = vld [vmem:[#allocation5 + $0x1f0] sm:$0xff]
        %v654 = vld [vmem:[#allocation5 + $0x1f8] sm:$0xff]
        %v655 = vld [vmem:[#allocation7] sm:$0x3]
        %v657 = vlaneseq
        %v658 = vshrl.u32 %v657, 7
        %v659 = vsub.s32 0, %v658
        %v660 = vrot.slane %v655, %v659
        %v661 = vlaneseq
        %v662 = vshrl.u32 %v661, 7
        %v663 = vsub.s32 1, %v662
        %v664 = vrot.slane %v655, %v663
        %v795 = vunpack.c.l.b16 %v463
        %v796 = vunpack.c.h.b16 %v463
        %v797 = vunpack.c.l.b16 %v464
        %v798 = vunpack.c.h.b16 %v464
        %v799 = vunpack.c.l.b16 %v465
        %v800 = vunpack.c.h.b16 %v465
        %v801 = vunpack.c.l.b16 %v466
        %v802 = vunpack.c.h.b16 %v466
        %v803 = vunpack.c.l.b16 %v467
        %v804 = vunpack.c.h.b16 %v467
        %v805 = vunpack.c.l.b16 %v468
        %v806 = vunpack.c.h.b16 %v468
        %v807 = vunpack.c.l.b16 %v469
        %v808 = vunpack.c.h.b16 %v469
        %v809 = vunpack.c.l.b16 %v470
        %v810 = vunpack.c.h.b16 %v470
        %v811 = vunpack.c.l.b16 %v471
        %v812 = vunpack.c.h.b16 %v471
        %v813 = vunpack.c.l.b16 %v472
        %v814 = vunpack.c.h.b16 %v472
        %v815 = vunpack.c.l.b16 %v473
        %v816 = vunpack.c.h.b16 %v473
        %v817 = vunpack.c.l.b16 %v474
        %v818 = vunpack.c.h.b16 %v474
        %v819 = vunpack.c.l.b16 %v475
        %v820 = vunpack.c.h.b16 %v475
        %v821 = vunpack.c.l.b16 %v476
        %v822 = vunpack.c.h.b16 %v476
        %v823 = vunpack.c.l.b16 %v477
        %v824 = vunpack.c.h.b16 %v477
        %v825 = vunpack.c.l.b16 %v478
        %v826 = vunpack.c.h.b16 %v478
        %v827 = vunpack.c.l.b16 %v479
        %v828 = vunpack.c.h.b16 %v479
        %v829 = vunpack.c.l.b16 %v480
        %v830 = vunpack.c.h.b16 %v480
        %v831 = vunpack.c.l.b16 %v481
        %v832 = vunpack.c.h.b16 %v481
        %v833 = vunpack.c.l.b16 %v482
        %v834 = vunpack.c.h.b16 %v482
        %v835 = vunpack.c.l.b16 %v483
        %v836 = vunpack.c.h.b16 %v483
        %v837 = vunpack.c.l.b16 %v484
        %v838 = vunpack.c.h.b16 %v484
        %v839 = vunpack.c.l.b16 %v485
        %v840 = vunpack.c.h.b16 %v485
        %v841 = vunpack.c.l.b16 %v486
        %v842 = vunpack.c.h.b16 %v486
        %v843 = vunpack.c.l.b16 %v487
        %v844 = vunpack.c.h.b16 %v487
        %v845 = vunpack.c.l.b16 %v488
        %v846 = vunpack.c.h.b16 %v488
        %v847 = vunpack.c.l.b16 %v489
        %v848 = vunpack.c.h.b16 %v489
        %v849 = vunpack.c.l.b16 %v490
        %v850 = vunpack.c.h.b16 %v490
        %v851 = vunpack.c.l.b16 %v491
        %v852 = vunpack.c.h.b16 %v491
        %v853 = vunpack.c.l.b16 %v492
        %v854 = vunpack.c.h.b16 %v492
        %v855 = vunpack.c.l.b16 %v493
        %v856 = vunpack.c.h.b16 %v493
        %v857 = vunpack.c.l.b16 %v494
        %v858 = vunpack.c.h.b16 %v494
        %v859 = vunpack.c.l.b16 %v495
        %v860 = vunpack.c.h.b16 %v495
        %v861 = vunpack.c.l.b16 %v496
        %v862 = vunpack.c.h.b16 %v496
        %v863 = vunpack.c.l.b16 %v497
        %v864 = vunpack.c.h.b16 %v497
        %v865 = vunpack.c.l.b16 %v498
        %v866 = vunpack.c.h.b16 %v498
        %v867 = vunpack.c.l.b16 %v499
        %v868 = vunpack.c.h.b16 %v499
        %v869 = vunpack.c.l.b16 %v500
        %v870 = vunpack.c.h.b16 %v500
        %v871 = vunpack.c.l.b16 %v501
        %v872 = vunpack.c.h.b16 %v501
        %v873 = vunpack.c.l.b16 %v502
        %v874 = vunpack.c.h.b16 %v502
        %v875 = vunpack.c.l.b16 %v503
        %v876 = vunpack.c.h.b16 %v503
        %v877 = vunpack.c.l.b16 %v504
        %v878 = vunpack.c.h.b16 %v504
        %v879 = vunpack.c.l.b16 %v505
        %v880 = vunpack.c.h.b16 %v505
        %v881 = vunpack.c.l.b16 %v506
        %v882 = vunpack.c.h.b16 %v506
        %v883 = vunpack.c.l.b16 %v507
        %v884 = vunpack.c.h.b16 %v507
        %v885 = vunpack.c.l.b16 %v508
        %v886 = vunpack.c.h.b16 %v508
        %v887 = vunpack.c.l.b16 %v509
        %v888 = vunpack.c.h.b16 %v509
        %v889 = vunpack.c.l.b16 %v510
        %v890 = vunpack.c.h.b16 %v510
        %v891 = vunpack.c.l.b16 %v511
        %v892 = vunpack.c.h.b16 %v511
        %v893 = vunpack.c.l.b16 %v512
        %v894 = vunpack.c.h.b16 %v512
        %v895 = vunpack.c.l.b16 %v513
        %v896 = vunpack.c.h.b16 %v513
        %v897 = vunpack.c.l.b16 %v514
        %v898 = vunpack.c.h.b16 %v514
        %v899 = vunpack.c.l.b16 %v515
        %v900 = vunpack.c.h.b16 %v515
        %v901 = vunpack.c.l.b16 %v516
        %v902 = vunpack.c.h.b16 %v516
        %v903 = vunpack.c.l.b16 %v517
        %v904 = vunpack.c.h.b16 %v517
        %v905 = vunpack.c.l.b16 %v518
        %v906 = vunpack.c.h.b16 %v518
        %v907 = vunpack.c.l.b16 %v519
        %v908 = vunpack.c.h.b16 %v519
        %v909 = vunpack.c.l.b16 %v520
        %v910 = vunpack.c.h.b16 %v520
        %v911 = vunpack.c.l.b16 %v521
        %v912 = vunpack.c.h.b16 %v521
        %v913 = vunpack.c.l.b16 %v522
        %v914 = vunpack.c.h.b16 %v522
        %v915 = vunpack.c.l.b16 %v523
        %v916 = vunpack.c.h.b16 %v523
        %v917 = vunpack.c.l.b16 %v524
        %v918 = vunpack.c.h.b16 %v524
        %v919 = vunpack.c.l.b16 %v525
        %v920 = vunpack.c.h.b16 %v525
        %v921 = vunpack.c.l.b16 %v526
        %v922 = vunpack.c.h.b16 %v526
        %v923 = vunpack.c.l.b16 %v527
        %v924 = vunpack.c.h.b16 %v527
        %v925 = vunpack.c.l.b16 %v528
        %v926 = vunpack.c.h.b16 %v528
        %v927 = vunpack.c.l.b16 %v529
        %v928 = vunpack.c.h.b16 %v529
        %v929 = vunpack.c.l.b16 %v530
        %v930 = vunpack.c.h.b16 %v530
        %v931 = vunpack.c.l.b16 %v531
        %v932 = vunpack.c.h.b16 %v531
        %v933 = vunpack.c.l.b16 %v532
        %v934 = vunpack.c.h.b16 %v532
        %v935 = vunpack.c.l.b16 %v533
        %v936 = vunpack.c.h.b16 %v533
        %v937 = vunpack.c.l.b16 %v534
        %v938 = vunpack.c.h.b16 %v534
        %v939 = vunpack.c.l.b16 %v535
        %v940 = vunpack.c.h.b16 %v535
        %v941 = vunpack.c.l.b16 %v536
        %v942 = vunpack.c.h.b16 %v536
        %v943 = vunpack.c.l.b16 %v537
        %v944 = vunpack.c.h.b16 %v537
        %v945 = vunpack.c.l.b16 %v538
        %v946 = vunpack.c.h.b16 %v538
        %v947 = vunpack.c.l.b16 %v539
        %v948 = vunpack.c.h.b16 %v539
        %v949 = vunpack.c.l.b16 %v540
        %v950 = vunpack.c.h.b16 %v540
        %v951 = vunpack.c.l.b16 %v541
        %v952 = vunpack.c.h.b16 %v541
        %v953 = vunpack.c.l.b16 %v542
        %v954 = vunpack.c.h.b16 %v542
        %v955 = vunpack.c.l.b16 %v543
        %v956 = vunpack.c.h.b16 %v543
        %v957 = vunpack.c.l.b16 %v544
        %v958 = vunpack.c.h.b16 %v544
        %v959 = vunpack.c.l.b16 %v545
        %v960 = vunpack.c.h.b16 %v545
        %v961 = vunpack.c.l.b16 %v546
        %v962 = vunpack.c.h.b16 %v546
        %v963 = vunpack.c.l.b16 %v547
        %v964 = vunpack.c.h.b16 %v547
        %v965 = vunpack.c.l.b16 %v548
        %v966 = vunpack.c.h.b16 %v548
        %v967 = vunpack.c.l.b16 %v549
        %v968 = vunpack.c.h.b16 %v549
        %v969 = vunpack.c.l.b16 %v550
        %v970 = vunpack.c.h.b16 %v550
        %v971 = vunpack.c.l.b16 %v551
        %v972 = vunpack.c.h.b16 %v551
        %v973 = vunpack.c.l.b16 %v552
        %v974 = vunpack.c.h.b16 %v552
        %v975 = vunpack.c.l.b16 %v553
        %v976 = vunpack.c.h.b16 %v553
        %v977 = vunpack.c.l.b16 %v554
        %v978 = vunpack.c.h.b16 %v554
        %v979 = vunpack.c.l.b16 %v555
        %v980 = vunpack.c.h.b16 %v555
        %v981 = vunpack.c.l.b16 %v556
        %v982 = vunpack.c.h.b16 %v556
        %v983 = vunpack.c.l.b16 %v557
        %v984 = vunpack.c.h.b16 %v557
        %v985 = vunpack.c.l.b16 %v558
        %v986 = vunpack.c.h.b16 %v558
        %v987 = vunpack.c.l.b16 %v559
        %v988 = vunpack.c.h.b16 %v559
        %v989 = vunpack.c.l.b16 %v560
        %v990 = vunpack.c.h.b16 %v560
        %v991 = vunpack.c.l.b16 %v561
        %v992 = vunpack.c.h.b16 %v561
        %v993 = vunpack.c.l.b16 %v562
        %v994 = vunpack.c.h.b16 %v562
        %v995 = vunpack.c.l.b16 %v563
        %v996 = vunpack.c.h.b16 %v563
        %v997 = vunpack.c.l.b16 %v564
        %v998 = vunpack.c.h.b16 %v564
        %v999 = vunpack.c.l.b16 %v565
        %v1000 = vunpack.c.h.b16 %v565
        %v1001 = vunpack.c.l.b16 %v566
        %v1002 = vunpack.c.h.b16 %v566
        %v1003 = vunpack.c.l.b16 %v567
        %v1004 = vunpack.c.h.b16 %v567
        %v1005 = vunpack.c.l.b16 %v568
        %v1006 = vunpack.c.h.b16 %v568
        %v1007 = vunpack.c.l.b16 %v569
        %v1008 = vunpack.c.h.b16 %v569
        %v1009 = vunpack.c.l.b16 %v570
        %v1010 = vunpack.c.h.b16 %v570
        %v1011 = vunpack.c.l.b16 %v571
        %v1012 = vunpack.c.h.b16 %v571
        %v1013 = vunpack.c.l.b16 %v572
        %v1014 = vunpack.c.h.b16 %v572
        %v1015 = vunpack.c.l.b16 %v573
        %v1016 = vunpack.c.h.b16 %v573
        %v1017 = vunpack.c.l.b16 %v574
        %v1018 = vunpack.c.h.b16 %v574
        %v1019 = vunpack.c.l.b16 %v575
        %v1020 = vunpack.c.h.b16 %v575
        %v1021 = vunpack.c.l.b16 %v576
        %v1022 = vunpack.c.h.b16 %v576
        %v1023 = vunpack.c.l.b16 %v577
        %v1024 = vunpack.c.h.b16 %v577
        %v1025 = vunpack.c.l.b16 %v578
        %v1026 = vunpack.c.h.b16 %v578
        %v1027 = vunpack.c.l.b16 %v579
        %v1028 = vunpack.c.h.b16 %v579
        %v1029 = vunpack.c.l.b16 %v580
        %v1030 = vunpack.c.h.b16 %v580
        %v1031 = vunpack.c.l.b16 %v581
        %v1032 = vunpack.c.h.b16 %v581
        %v1033 = vunpack.c.l.b16 %v582
        %v1034 = vunpack.c.h.b16 %v582
        %v1035 = vunpack.c.l.b16 %v583
        %v1036 = vunpack.c.h.b16 %v583
        %v1037 = vunpack.c.l.b16 %v584
        %v1038 = vunpack.c.h.b16 %v584
        %v1039 = vunpack.c.l.b16 %v585
        %v1040 = vunpack.c.h.b16 %v585
        %v1041 = vunpack.c.l.b16 %v586
        %v1042 = vunpack.c.h.b16 %v586
        %v1043 = vunpack.c.l.b16 %v587
        %v1044 = vunpack.c.h.b16 %v587
        %v1045 = vunpack.c.l.b16 %v588
        %v1046 = vunpack.c.h.b16 %v588
        %v1047 = vunpack.c.l.b16 %v589
        %v1048 = vunpack.c.h.b16 %v589
        %v1049 = vunpack.c.l.b16 %v590
        %v1050 = vunpack.c.h.b16 %v590
        %v1051 = vpack.c.b16 %v799, %v795
        %v1052 = vpack.c.b16 %v800, %v796
        %v1053 = vpack.c.b16 %v801, %v797
        %v1054 = vpack.c.b16 %v802, %v798
        %v1055 = vpack.c.b16 %v807, %v803
        %v1056 = vpack.c.b16 %v808, %v804
        %v1057 = vpack.c.b16 %v809, %v805
        %v1058 = vpack.c.b16 %v810, %v806
        %v1059 = vpack.c.b16 %v815, %v811
        %v1060 = vpack.c.b16 %v816, %v812
        %v1061 = vpack.c.b16 %v817, %v813
        %v1062 = vpack.c.b16 %v818, %v814
        %v1063 = vpack.c.b16 %v823, %v819
        %v1064 = vpack.c.b16 %v824, %v820
        %v1065 = vpack.c.b16 %v825, %v821
        %v1066 = vpack.c.b16 %v826, %v822
        %v1067 = vpack.c.b16 %v831, %v827
        %v1068 = vpack.c.b16 %v832, %v828
        %v1069 = vpack.c.b16 %v833, %v829
        %v1070 = vpack.c.b16 %v834, %v830
        %v1071 = vpack.c.b16 %v839, %v835
        %v1072 = vpack.c.b16 %v840, %v836
        %v1073 = vpack.c.b16 %v841, %v837
        %v1074 = vpack.c.b16 %v842, %v838
        %v1075 = vpack.c.b16 %v847, %v843
        %v1076 = vpack.c.b16 %v848, %v844
        %v1077 = vpack.c.b16 %v849, %v845
        %v1078 = vpack.c.b16 %v850, %v846
        %v1079 = vpack.c.b16 %v855, %v851
        %v1080 = vpack.c.b16 %v856, %v852
        %v1081 = vpack.c.b16 %v857, %v853
        %v1082 = vpack.c.b16 %v858, %v854
        %v1083 = vpack.c.b16 %v863, %v859
        %v1084 = vpack.c.b16 %v864, %v860
        %v1085 = vpack.c.b16 %v865, %v861
        %v1086 = vpack.c.b16 %v866, %v862
        %v1087 = vpack.c.b16 %v871, %v867
        %v1088 = vpack.c.b16 %v872, %v868
        %v1089 = vpack.c.b16 %v873, %v869
        %v1090 = vpack.c.b16 %v874, %v870
        %v1091 = vpack.c.b16 %v879, %v875
        %v1092 = vpack.c.b16 %v880, %v876
        %v1093 = vpack.c.b16 %v881, %v877
        %v1094 = vpack.c.b16 %v882, %v878
        %v1095 = vpack.c.b16 %v887, %v883
        %v1096 = vpack.c.b16 %v888, %v884
        %v1097 = vpack.c.b16 %v889, %v885
        %v1098 = vpack.c.b16 %v890, %v886
        %v1099 = vpack.c.b16 %v895, %v891
        %v1100 = vpack.c.b16 %v896, %v892
        %v1101 = vpack.c.b16 %v897, %v893
        %v1102 = vpack.c.b16 %v898, %v894
        %v1103 = vpack.c.b16 %v903, %v899
        %v1104 = vpack.c.b16 %v904, %v900
        %v1105 = vpack.c.b16 %v905, %v901
        %v1106 = vpack.c.b16 %v906, %v902
        %v1107 = vpack.c.b16 %v911, %v907
        %v1108 = vpack.c.b16 %v912, %v908
        %v1109 = vpack.c.b16 %v913, %v909
        %v1110 = vpack.c.b16 %v914, %v910
        %v1111 = vpack.c.b16 %v919, %v915
        %v1112 = vpack.c.b16 %v920, %v916
        %v1113 = vpack.c.b16 %v921, %v917
        %v1114 = vpack.c.b16 %v922, %v918
        %v1115 = vpack.c.b16 %v927, %v923
        %v1116 = vpack.c.b16 %v928, %v924
        %v1117 = vpack.c.b16 %v929, %v925
        %v1118 = vpack.c.b16 %v930, %v926
        %v1119 = vpack.c.b16 %v935, %v931
        %v1120 = vpack.c.b16 %v936, %v932
        %v1121 = vpack.c.b16 %v937, %v933
        %v1122 = vpack.c.b16 %v938, %v934
        %v1123 = vpack.c.b16 %v943, %v939
        %v1124 = vpack.c.b16 %v944, %v940
        %v1125 = vpack.c.b16 %v945, %v941
        %v1126 = vpack.c.b16 %v946, %v942
        %v1127 = vpack.c.b16 %v951, %v947
        %v1128 = vpack.c.b16 %v952, %v948
        %v1129 = vpack.c.b16 %v953, %v949
        %v1130 = vpack.c.b16 %v954, %v950
        %v1131 = vpack.c.b16 %v959, %v955
        %v1132 = vpack.c.b16 %v960, %v956
        %v1133 = vpack.c.b16 %v961, %v957
        %v1134 = vpack.c.b16 %v962, %v958
        %v1135 = vpack.c.b16 %v967, %v963
        %v1136 = vpack.c.b16 %v968, %v964
        %v1137 = vpack.c.b16 %v969, %v965
        %v1138 = vpack.c.b16 %v970, %v966
        %v1139 = vpack.c.b16 %v975, %v971
        %v1140 = vpack.c.b16 %v976, %v972
        %v1141 = vpack.c.b16 %v977, %v973
        %v1142 = vpack.c.b16 %v978, %v974
        %v1143 = vpack.c.b16 %v983, %v979
        %v1144 = vpack.c.b16 %v984, %v980
        %v1145 = vpack.c.b16 %v985, %v981
        %v1146 = vpack.c.b16 %v986, %v982
        %v1147 = vpack.c.b16 %v991, %v987
        %v1148 = vpack.c.b16 %v992, %v988
        %v1149 = vpack.c.b16 %v993, %v989
        %v1150 = vpack.c.b16 %v994, %v990
        %v1151 = vpack.c.b16 %v999, %v995
        %v1152 = vpack.c.b16 %v1000, %v996
        %v1153 = vpack.c.b16 %v1001, %v997
        %v1154 = vpack.c.b16 %v1002, %v998
        %v1155 = vpack.c.b16 %v1007, %v1003
        %v1156 = vpack.c.b16 %v1008, %v1004
        %v1157 = vpack.c.b16 %v1009, %v1005
        %v1158 = vpack.c.b16 %v1010, %v1006
        %v1159 = vpack.c.b16 %v1015, %v1011
        %v1160 = vpack.c.b16 %v1016, %v1012
        %v1161 = vpack.c.b16 %v1017, %v1013
        %v1162 = vpack.c.b16 %v1018, %v1014
        %v1163 = vpack.c.b16 %v1023, %v1019
        %v1164 = vpack.c.b16 %v1024, %v1020
        %v1165 = vpack.c.b16 %v1025, %v1021
        %v1166 = vpack.c.b16 %v1026, %v1022
        %v1167 = vpack.c.b16 %v1031, %v1027
        %v1168 = vpack.c.b16 %v1032, %v1028
        %v1169 = vpack.c.b16 %v1033, %v1029
        %v1170 = vpack.c.b16 %v1034, %v1030
        %v1171 = vpack.c.b16 %v1039, %v1035
        %v1172 = vpack.c.b16 %v1040, %v1036
        %v1173 = vpack.c.b16 %v1041, %v1037
        %v1174 = vpack.c.b16 %v1042, %v1038
        %v1175 = vpack.c.b16 %v1047, %v1043
        %v1176 = vpack.c.b16 %v1048, %v1044
        %v1177 = vpack.c.b16 %v1049, %v1045
        %v1178 = vpack.c.b16 %v1050, %v1046
        %v1371 = vunpack.c.l.b16 %v591
        %v1372 = vunpack.c.h.b16 %v591
        %v1373 = vunpack.c.l.b16 %v592
        %v1374 = vunpack.c.h.b16 %v592
        %v1375 = vunpack.c.l.b16 %v593
        %v1376 = vunpack.c.h.b16 %v593
        %v1377 = vunpack.c.l.b16 %v594
        %v1378 = vunpack.c.h.b16 %v594
        %v1379 = vunpack.c.l.b16 %v595
        %v1380 = vunpack.c.h.b16 %v595
        %v1381 = vunpack.c.l.b16 %v596
        %v1382 = vunpack.c.h.b16 %v596
        %v1383 = vunpack.c.l.b16 %v597
        %v1384 = vunpack.c.h.b16 %v597
        %v1385 = vunpack.c.l.b16 %v598
        %v1386 = vunpack.c.h.b16 %v598
        %v1387 = vunpack.c.l.b16 %v599
        %v1388 = vunpack.c.h.b16 %v599
        %v1389 = vunpack.c.l.b16 %v600
        %v1390 = vunpack.c.h.b16 %v600
        %v1391 = vunpack.c.l.b16 %v601
        %v1392 = vunpack.c.h.b16 %v601
        %v1393 = vunpack.c.l.b16 %v602
        %v1394 = vunpack.c.h.b16 %v602
        %v1395 = vunpack.c.l.b16 %v603
        %v1396 = vunpack.c.h.b16 %v603
        %v1397 = vunpack.c.l.b16 %v604
        %v1398 = vunpack.c.h.b16 %v604
        %v1399 = vunpack.c.l.b16 %v605
        %v1400 = vunpack.c.h.b16 %v605
        %v1401 = vunpack.c.l.b16 %v606
        %v1402 = vunpack.c.h.b16 %v606
        %v1403 = vunpack.c.l.b16 %v607
        %v1404 = vunpack.c.h.b16 %v607
        %v1405 = vunpack.c.l.b16 %v608
        %v1406 = vunpack.c.h.b16 %v608
        %v1407 = vunpack.c.l.b16 %v609
        %v1408 = vunpack.c.h.b16 %v609
        %v1409 = vunpack.c.l.b16 %v610
        %v1410 = vunpack.c.h.b16 %v610
        %v1411 = vunpack.c.l.b16 %v611
        %v1412 = vunpack.c.h.b16 %v611
        %v1413 = vunpack.c.l.b16 %v612
        %v1414 = vunpack.c.h.b16 %v612
        %v1415 = vunpack.c.l.b16 %v613
        %v1416 = vunpack.c.h.b16 %v613
        %v1417 = vunpack.c.l.b16 %v614
        %v1418 = vunpack.c.h.b16 %v614
        %v1419 = vunpack.c.l.b16 %v615
        %v1420 = vunpack.c.h.b16 %v615
        %v1421 = vunpack.c.l.b16 %v616
        %v1422 = vunpack.c.h.b16 %v616
        %v1423 = vunpack.c.l.b16 %v617
        %v1424 = vunpack.c.h.b16 %v617
        %v1425 = vunpack.c.l.b16 %v618
        %v1426 = vunpack.c.h.b16 %v618
        %v1427 = vunpack.c.l.b16 %v619
        %v1428 = vunpack.c.h.b16 %v619
        %v1429 = vunpack.c.l.b16 %v620
        %v1430 = vunpack.c.h.b16 %v620
        %v1431 = vunpack.c.l.b16 %v621
        %v1432 = vunpack.c.h.b16 %v621
        %v1433 = vunpack.c.l.b16 %v622
        %v1434 = vunpack.c.h.b16 %v622
        %v1435 = vunpack.c.l.b16 %v623
        %v1436 = vunpack.c.h.b16 %v623
        %v1437 = vunpack.c.l.b16 %v624
        %v1438 = vunpack.c.h.b16 %v624
        %v1439 = vunpack.c.l.b16 %v625
        %v1440 = vunpack.c.h.b16 %v625
        %v1441 = vunpack.c.l.b16 %v626
        %v1442 = vunpack.c.h.b16 %v626
        %v1443 = vunpack.c.l.b16 %v627
        %v1444 = vunpack.c.h.b16 %v627
        %v1445 = vunpack.c.l.b16 %v628
        %v1446 = vunpack.c.h.b16 %v628
        %v1447 = vunpack.c.l.b16 %v629
        %v1448 = vunpack.c.h.b16 %v629
        %v1449 = vunpack.c.l.b16 %v630
        %v1450 = vunpack.c.h.b16 %v630
        %v1451 = vunpack.c.l.b16 %v631
        %v1452 = vunpack.c.h.b16 %v631
        %v1453 = vunpack.c.l.b16 %v632
        %v1454 = vunpack.c.h.b16 %v632
        %v1455 = vunpack.c.l.b16 %v633
        %v1456 = vunpack.c.h.b16 %v633
        %v1457 = vunpack.c.l.b16 %v634
        %v1458 = vunpack.c.h.b16 %v634
        %v1459 = vunpack.c.l.b16 %v635
        %v1460 = vunpack.c.h.b16 %v635
        %v1461 = vunpack.c.l.b16 %v636
        %v1462 = vunpack.c.h.b16 %v636
        %v1463 = vunpack.c.l.b16 %v637
        %v1464 = vunpack.c.h.b16 %v637
        %v1465 = vunpack.c.l.b16 %v638
        %v1466 = vunpack.c.h.b16 %v638
        %v1467 = vunpack.c.l.b16 %v639
        %v1468 = vunpack.c.h.b16 %v639
        %v1469 = vunpack.c.l.b16 %v640
        %v1470 = vunpack.c.h.b16 %v640
        %v1471 = vunpack.c.l.b16 %v641
        %v1472 = vunpack.c.h.b16 %v641
        %v1473 = vunpack.c.l.b16 %v642
        %v1474 = vunpack.c.h.b16 %v642
        %v1475 = vunpack.c.l.b16 %v643
        %v1476 = vunpack.c.h.b16 %v643
        %v1477 = vunpack.c.l.b16 %v644
        %v1478 = vunpack.c.h.b16 %v644
        %v1479 = vunpack.c.l.b16 %v645
        %v1480 = vunpack.c.h.b16 %v645
        %v1481 = vunpack.c.l.b16 %v646
        %v1482 = vunpack.c.h.b16 %v646
        %v1483 = vunpack.c.l.b16 %v647
        %v1484 = vunpack.c.h.b16 %v647
        %v1485 = vunpack.c.l.b16 %v648
        %v1486 = vunpack.c.h.b16 %v648
        %v1487 = vunpack.c.l.b16 %v649
        %v1488 = vunpack.c.h.b16 %v649
        %v1489 = vunpack.c.l.b16 %v650
        %v1490 = vunpack.c.h.b16 %v650
        %v1491 = vunpack.c.l.b16 %v651
        %v1492 = vunpack.c.h.b16 %v651
        %v1493 = vunpack.c.l.b16 %v652
        %v1494 = vunpack.c.h.b16 %v652
        %v1495 = vunpack.c.l.b16 %v653
        %v1496 = vunpack.c.h.b16 %v653
        %v1497 = vunpack.c.l.b16 %v654
        %v1498 = vunpack.c.h.b16 %v654
        %v1499 = vpack.c.b16 %v1373, %v1371
        %v1500 = vpack.c.b16 %v1374, %v1372
        %v1501 = vpack.c.b16 %v1377, %v1375
        %v1502 = vpack.c.b16 %v1378, %v1376
        %v1503 = vpack.c.b16 %v1381, %v1379
        %v1504 = vpack.c.b16 %v1382, %v1380
        %v1505 = vpack.c.b16 %v1385, %v1383
        %v1506 = vpack.c.b16 %v1386, %v1384
        %v1507 = vpack.c.b16 %v1389, %v1387
        %v1508 = vpack.c.b16 %v1390, %v1388
        %v1509 = vpack.c.b16 %v1393, %v1391
        %v1510 = vpack.c.b16 %v1394, %v1392
        %v1511 = vpack.c.b16 %v1397, %v1395
        %v1512 = vpack.c.b16 %v1398, %v1396
        %v1513 = vpack.c.b16 %v1401, %v1399
        %v1514 = vpack.c.b16 %v1402, %v1400
        %v1515 = vpack.c.b16 %v1405, %v1403
        %v1516 = vpack.c.b16 %v1406, %v1404
        %v1517 = vpack.c.b16 %v1409, %v1407
        %v1518 = vpack.c.b16 %v1410, %v1408
        %v1519 = vpack.c.b16 %v1413, %v1411
        %v1520 = vpack.c.b16 %v1414, %v1412
        %v1521 = vpack.c.b16 %v1417, %v1415
        %v1522 = vpack.c.b16 %v1418, %v1416
        %v1523 = vpack.c.b16 %v1421, %v1419
        %v1524 = vpack.c.b16 %v1422, %v1420
        %v1525 = vpack.c.b16 %v1425, %v1423
        %v1526 = vpack.c.b16 %v1426, %v1424
        %v1527 = vpack.c.b16 %v1429, %v1427
        %v1528 = vpack.c.b16 %v1430, %v1428
        %v1529 = vpack.c.b16 %v1433, %v1431
        %v1530 = vpack.c.b16 %v1434, %v1432
        %v1531 = vpack.c.b16 %v1437, %v1435
        %v1532 = vpack.c.b16 %v1438, %v1436
        %v1533 = vpack.c.b16 %v1441, %v1439
        %v1534 = vpack.c.b16 %v1442, %v1440
        %v1535 = vpack.c.b16 %v1445, %v1443
        %v1536 = vpack.c.b16 %v1446, %v1444
        %v1537 = vpack.c.b16 %v1449, %v1447
        %v1538 = vpack.c.b16 %v1450, %v1448
        %v1539 = vpack.c.b16 %v1453, %v1451
        %v1540 = vpack.c.b16 %v1454, %v1452
        %v1541 = vpack.c.b16 %v1457, %v1455
        %v1542 = vpack.c.b16 %v1458, %v1456
        %v1543 = vpack.c.b16 %v1461, %v1459
        %v1544 = vpack.c.b16 %v1462, %v1460
        %v1545 = vpack.c.b16 %v1465, %v1463
        %v1546 = vpack.c.b16 %v1466, %v1464
        %v1547 = vpack.c.b16 %v1469, %v1467
        %v1548 = vpack.c.b16 %v1470, %v1468
        %v1549 = vpack.c.b16 %v1473, %v1471
        %v1550 = vpack.c.b16 %v1474, %v1472
        %v1551 = vpack.c.b16 %v1477, %v1475
        %v1552 = vpack.c.b16 %v1478, %v1476
        %v1553 = vpack.c.b16 %v1481, %v1479
        %v1554 = vpack.c.b16 %v1482, %v1480
        %v1555 = vpack.c.b16 %v1485, %v1483
        %v1556 = vpack.c.b16 %v1486, %v1484
        %v1557 = vpack.c.b16 %v1489, %v1487
        %v1558 = vpack.c.b16 %v1490, %v1488
        %v1559 = vpack.c.b16 %v1493, %v1491
        %v1560 = vpack.c.b16 %v1494, %v1492
        %v1561 = vpack.c.b16 %v1497, %v1495
        %v1562 = vpack.c.b16 %v1498, %v1496
        %1627 = vmatprep.subr.bf16.mxu0 %v1514
        %1628 = vmatpush1.bf16.msra.mxu0 %v1513
        %1629 = vmatprep.subr.bf16.mxu0 %v1512
        %1630 = vmatpush1.bf16.msra.mxu0 %v1511
        %1631 = vmatprep.subr.bf16.mxu0 %v1510
        %1632 = vmatpush1.bf16.msra.mxu0 %v1509
        %1633 = vmatprep.subr.bf16.mxu0 %v1508
        %1634 = vmatpush1.bf16.msra.mxu0 %v1507
        %1635 = vmatprep.subr.bf16.mxu0 %v1506
        %1636 = vmatpush1.bf16.msra.mxu0 %v1505
        %1637 = vmatprep.subr.bf16.mxu0 %v1504
        %1638 = vmatpush1.bf16.msra.mxu0 %v1503
        %1639 = vmatprep.subr.bf16.mxu0 %v1502
        %1640 = vmatpush1.bf16.msra.mxu0 %v1501
        %1641 = vmatprep.subr.bf16.mxu0 %v1500
        %1642 = vmatpush1.bf16.msra.mxu0 %v1499
        %1643 = vmatprep.subr.bf16.mxu0 %v1530
        %1644 = vmatpush2.bf16.msra.mxu0 %v1529
        %1645 = vmatprep.subr.bf16.mxu0 %v1528
        %1646 = vmatpush2.bf16.msra.mxu0 %v1527
        %1647 = vmatprep.subr.bf16.mxu0 %v1526
        %1648 = vmatpush2.bf16.msra.mxu0 %v1525
        %1649 = vmatprep.subr.bf16.mxu0 %v1524
        %1650 = vmatpush2.bf16.msra.mxu0 %v1523
        %1651 = vmatprep.subr.bf16.mxu0 %v1522
        %1652 = vmatpush2.bf16.msra.mxu0 %v1521
        %1653 = vmatprep.subr.bf16.mxu0 %v1520
        %1654 = vmatpush2.bf16.msra.mxu0 %v1519
        %1655 = vmatprep.subr.bf16.mxu0 %v1518
        %1656 = vmatpush2.bf16.msra.mxu0 %v1517
        %1657 = vmatprep.subr.bf16.mxu0 %v1516
        %1658 = vmatpush2.bf16.msra.mxu0 %v1515
        %1659 = vmatprep.mubr.bf16.mxu0 %v1052
        %1660 = vmatmul.mubr.bf16.gmra.mxu0 %v1051
        %v1661 = vpop.f32.mrf.mxu0
        %v1662 = vadd.f32 %v660, %v1661
        %v1663 = vpop.f32.mrf.mxu0
        %v1664 = vadd.f32 %v664, %v1663
        %v1665 = vpop.f32.mrf.mxu0
        %v1666 = vadd.f32 %v660, %v1665
        %v1667 = vpop.f32.mrf.mxu0
        %v1668 = vadd.f32 %v664, %v1667
        %1669 = vmatprep.mubr.bf16.mxu0 %v1056
        %1670 = vmatmul.mubr.bf16.gmra.mxu0 %v1055
        %v1671 = vpop.f32.mrf.mxu0
        %v1672 = vadd.f32 %v660, %v1671
        %v1673 = vpop.f32.mrf.mxu0
        %v1674 = vadd.f32 %v664, %v1673
        %v1675 = vpop.f32.mrf.mxu0
        %v1676 = vadd.f32 %v660, %v1675
        %v1677 = vpop.f32.mrf.mxu0
        %v1678 = vadd.f32 %v664, %v1677
        %1679 = vmatprep.mubr.bf16.mxu0 %v1060
        %1680 = vmatmul.mubr.bf16.gmra.mxu0 %v1059
        %v1681 = vpop.f32.mrf.mxu0
        %v1682 = vadd.f32 %v660, %v1681
        %v1683 = vpop.f32.mrf.mxu0
        %v1684 = vadd.f32 %v664, %v1683
        %v1685 = vpop.f32.mrf.mxu0
        %v1686 = vadd.f32 %v660, %v1685
        %v1687 = vpop.f32.mrf.mxu0
        %v1688 = vadd.f32 %v664, %v1687
        %1689 = vmatprep.mubr.bf16.mxu0 %v1064
        %1690 = vmatmul.mubr.bf16.gmra.mxu0 %v1063
        %v1691 = vpop.f32.mrf.mxu0
        %v1692 = vadd.f32 %v660, %v1691
        %v1693 = vpop.f32.mrf.mxu0
        %v1694 = vadd.f32 %v664, %v1693
        %v1695 = vpop.f32.mrf.mxu0
        %v1696 = vadd.f32 %v660, %v1695
        %v1697 = vpop.f32.mrf.mxu0
        %v1698 = vadd.f32 %v664, %v1697
        %1699 = vmatprep.mubr.bf16.mxu0 %v1068
        %1700 = vmatmul.mubr.bf16.gmra.mxu0 %v1067
        %v1701 = vpop.f32.mrf.mxu0
        %v1702 = vadd.f32 %v660, %v1701
        %v1703 = vpop.f32.mrf.mxu0
        %v1704 = vadd.f32 %v664, %v1703
        %v1705 = vpop.f32.mrf.mxu0
        %v1706 = vadd.f32 %v660, %v1705
        %v1707 = vpop.f32.mrf.mxu0
        %v1708 = vadd.f32 %v664, %v1707
        %1709 = vmatprep.mubr.bf16.mxu0 %v1072
        %1710 = vmatmul.mubr.bf16.gmra.mxu0 %v1071
        %v1711 = vpop.f32.mrf.mxu0
        %v1712 = vadd.f32 %v660, %v1711
        %v1713 = vpop.f32.mrf.mxu0
        %v1714 = vadd.f32 %v664, %v1713
        %v1715 = vpop.f32.mrf.mxu0
        %v1716 = vadd.f32 %v660, %v1715
        %v1717 = vpop.f32.mrf.mxu0
        %v1718 = vadd.f32 %v664, %v1717
        %1719 = vmatprep.mubr.bf16.mxu0 %v1076
        %1720 = vmatmul.mubr.bf16.gmra.mxu0 %v1075
        %v1721 = vpop.f32.mrf.mxu0
        %v1722 = vadd.f32 %v660, %v1721
        %v1723 = vpop.f32.mrf.mxu0
        %v1724 = vadd.f32 %v664, %v1723
        %v1725 = vpop.f32.mrf.mxu0
        %v1726 = vadd.f32 %v660, %v1725
        %v1727 = vpop.f32.mrf.mxu0
        %v1728 = vadd.f32 %v664, %v1727
        %1729 = vmatprep.mubr.bf16.mxu0 %v1080
        %1730 = vmatmul.mubr.bf16.gmra.mxu0 %v1079
        %v1731 = vpop.f32.mrf.mxu0
        %v1732 = vadd.f32 %v660, %v1731
        %v1733 = vpop.f32.mrf.mxu0
        %v1734 = vadd.f32 %v664, %v1733
        %v1735 = vpop.f32.mrf.mxu0
        %v1736 = vadd.f32 %v660, %v1735
        %v1737 = vpop.f32.mrf.mxu0
        %v1738 = vadd.f32 %v664, %v1737
        %1739 = vmatprep.mubr.bf16.mxu0 %v1084
        %1740 = vmatmul.mubr.bf16.gmra.mxu0 %v1083
        %v1741 = vpop.f32.mrf.mxu0
        %v1742 = vadd.f32 %v660, %v1741
        %v1743 = vpop.f32.mrf.mxu0
        %v1744 = vadd.f32 %v664, %v1743
        %v1745 = vpop.f32.mrf.mxu0
        %v1746 = vadd.f32 %v660, %v1745
        %v1747 = vpop.f32.mrf.mxu0
        %v1748 = vadd.f32 %v664, %v1747
        %1749 = vmatprep.mubr.bf16.mxu0 %v1088
        %1750 = vmatmul.mubr.bf16.gmra.mxu0 %v1087
        %v1751 = vpop.f32.mrf.mxu0
        %v1752 = vadd.f32 %v660, %v1751
        %v1753 = vpop.f32.mrf.mxu0
        %v1754 = vadd.f32 %v664, %v1753
        %v1755 = vpop.f32.mrf.mxu0
        %v1756 = vadd.f32 %v660, %v1755
        %v1757 = vpop.f32.mrf.mxu0
        %v1758 = vadd.f32 %v664, %v1757
        %1759 = vmatprep.mubr.bf16.mxu0 %v1092
        %1760 = vmatmul.mubr.bf16.gmra.mxu0 %v1091
        %v1761 = vpop.f32.mrf.mxu0
        %v1762 = vadd.f32 %v660, %v1761
        %v1763 = vpop.f32.mrf.mxu0
        %v1764 = vadd.f32 %v664, %v1763
        %v1765 = vpop.f32.mrf.mxu0
        %v1766 = vadd.f32 %v660, %v1765
        %v1767 = vpop.f32.mrf.mxu0
        %v1768 = vadd.f32 %v664, %v1767
        %1769 = vmatprep.mubr.bf16.mxu0 %v1096
        %1770 = vmatmul.mubr.bf16.gmra.mxu0 %v1095
        %v1771 = vpop.f32.mrf.mxu0
        %v1772 = vadd.f32 %v660, %v1771
        %v1773 = vpop.f32.mrf.mxu0
        %v1774 = vadd.f32 %v664, %v1773
        %v1775 = vpop.f32.mrf.mxu0
        %v1776 = vadd.f32 %v660, %v1775
        %v1777 = vpop.f32.mrf.mxu0
        %v1778 = vadd.f32 %v664, %v1777
        %1779 = vmatprep.mubr.bf16.mxu0 %v1100
        %1780 = vmatmul.mubr.bf16.gmra.mxu0 %v1099
        %v1781 = vpop.f32.mrf.mxu0
        %v1782 = vadd.f32 %v660, %v1781
        %v1783 = vpop.f32.mrf.mxu0
        %v1784 = vadd.f32 %v664, %v1783
        %v1785 = vpop.f32.mrf.mxu0
        %v1786 = vadd.f32 %v660, %v1785
        %v1787 = vpop.f32.mrf.mxu0
        %v1788 = vadd.f32 %v664, %v1787
        %1789 = vmatprep.mubr.bf16.mxu0 %v1104
        %1790 = vmatmul.mubr.bf16.gmra.mxu0 %v1103
        %v1791 = vpop.f32.mrf.mxu0
        %v1792 = vadd.f32 %v660, %v1791
        %v1793 = vpop.f32.mrf.mxu0
        %v1794 = vadd.f32 %v664, %v1793
        %v1795 = vpop.f32.mrf.mxu0
        %v1796 = vadd.f32 %v660, %v1795
        %v1797 = vpop.f32.mrf.mxu0
        %v1798 = vadd.f32 %v664, %v1797
        %1799 = vmatprep.mubr.bf16.mxu0 %v1108
        %1800 = vmatmul.mubr.bf16.gmra.mxu0 %v1107
        %v1801 = vpop.f32.mrf.mxu0
        %v1802 = vadd.f32 %v660, %v1801
        %v1803 = vpop.f32.mrf.mxu0
        %v1804 = vadd.f32 %v664, %v1803
        %v1805 = vpop.f32.mrf.mxu0
        %v1806 = vadd.f32 %v660, %v1805
        %v1807 = vpop.f32.mrf.mxu0
        %v1808 = vadd.f32 %v664, %v1807
        %1809 = vmatprep.mubr.bf16.mxu0 %v1112
        %1810 = vmatmul.mubr.bf16.gmra.mxu0 %v1111
        %v1811 = vpop.f32.mrf.mxu0
        %v1812 = vadd.f32 %v660, %v1811
        %v1813 = vpop.f32.mrf.mxu0
        %v1814 = vadd.f32 %v664, %v1813
        %v1815 = vpop.f32.mrf.mxu0
        %v1816 = vadd.f32 %v660, %v1815
        %v1817 = vpop.f32.mrf.mxu0
        %v1818 = vadd.f32 %v664, %v1817
        %1819 = vmatprep.mubr.bf16.mxu0 %v1116
        %1820 = vmatmul.mubr.bf16.gmra.mxu0 %v1115
        %v1821 = vpop.f32.mrf.mxu0
        %v1822 = vadd.f32 %v660, %v1821
        %v1823 = vpop.f32.mrf.mxu0
        %v1824 = vadd.f32 %v664, %v1823
        %v1825 = vpop.f32.mrf.mxu0
        %v1826 = vadd.f32 %v660, %v1825
        %v1827 = vpop.f32.mrf.mxu0
        %v1828 = vadd.f32 %v664, %v1827
        %1829 = vmatprep.mubr.bf16.mxu0 %v1120
        %1830 = vmatmul.mubr.bf16.gmra.mxu0 %v1119
        %v1831 = vpop.f32.mrf.mxu0
        %v1832 = vadd.f32 %v660, %v1831
        %v1833 = vpop.f32.mrf.mxu0
        %v1834 = vadd.f32 %v664, %v1833
        %v1835 = vpop.f32.mrf.mxu0
        %v1836 = vadd.f32 %v660, %v1835
        %v1837 = vpop.f32.mrf.mxu0
        %v1838 = vadd.f32 %v664, %v1837
        %1839 = vmatprep.mubr.bf16.mxu0 %v1124
        %1840 = vmatmul.mubr.bf16.gmra.mxu0 %v1123
        %v1841 = vpop.f32.mrf.mxu0
        %v1842 = vadd.f32 %v660, %v1841
        %v1843 = vpop.f32.mrf.mxu0
        %v1844 = vadd.f32 %v664, %v1843
        %v1845 = vpop.f32.mrf.mxu0
        %v1846 = vadd.f32 %v660, %v1845
        %v1847 = vpop.f32.mrf.mxu0
        %v1848 = vadd.f32 %v664, %v1847
        %1849 = vmatprep.mubr.bf16.mxu0 %v1128
        %1850 = vmatmul.mubr.bf16.gmra.mxu0 %v1127
        %v1851 = vpop.f32.mrf.mxu0
        %v1852 = vadd.f32 %v660, %v1851
        %v1853 = vpop.f32.mrf.mxu0
        %v1854 = vadd.f32 %v664, %v1853
        %v1855 = vpop.f32.mrf.mxu0
        %v1856 = vadd.f32 %v660, %v1855
        %v1857 = vpop.f32.mrf.mxu0
        %v1858 = vadd.f32 %v664, %v1857
        %1859 = vmatprep.mubr.bf16.mxu0 %v1132
        %1860 = vmatmul.mubr.bf16.gmra.mxu0 %v1131
        %v1861 = vpop.f32.mrf.mxu0
        %v1862 = vadd.f32 %v660, %v1861
        %v1863 = vpop.f32.mrf.mxu0
        %v1864 = vadd.f32 %v664, %v1863
        %v1865 = vpop.f32.mrf.mxu0
        %v1866 = vadd.f32 %v660, %v1865
        %v1867 = vpop.f32.mrf.mxu0
        %v1868 = vadd.f32 %v664, %v1867
        %1869 = vmatprep.mubr.bf16.mxu0 %v1136
        %1870 = vmatmul.mubr.bf16.gmra.mxu0 %v1135
        %v1871 = vpop.f32.mrf.mxu0
        %v1872 = vadd.f32 %v660, %v1871
        %v1873 = vpop.f32.mrf.mxu0
        %v1874 = vadd.f32 %v664, %v1873
        %v1875 = vpop.f32.mrf.mxu0
        %v1876 = vadd.f32 %v660, %v1875
        %v1877 = vpop.f32.mrf.mxu0
        %v1878 = vadd.f32 %v664, %v1877
        %1879 = vmatprep.mubr.bf16.mxu0 %v1140
        %1880 = vmatmul.mubr.bf16.gmra.mxu0 %v1139
        %v1881 = vpop.f32.mrf.mxu0
        %v1882 = vadd.f32 %v660, %v1881
        %v1883 = vpop.f32.mrf.mxu0
        %v1884 = vadd.f32 %v664, %v1883
        %v1885 = vpop.f32.mrf.mxu0
        %v1886 = vadd.f32 %v660, %v1885
        %v1887 = vpop.f32.mrf.mxu0
        %v1888 = vadd.f32 %v664, %v1887
        %1889 = vmatprep.mubr.bf16.mxu0 %v1144
        %1890 = vmatmul.mubr.bf16.gmra.mxu0 %v1143
        %v1891 = vpop.f32.mrf.mxu0
        %v1892 = vadd.f32 %v660, %v1891
        %v1893 = vpop.f32.mrf.mxu0
        %v1894 = vadd.f32 %v664, %v1893
        %v1895 = vpop.f32.mrf.mxu0
        %v1896 = vadd.f32 %v660, %v1895
        %v1897 = vpop.f32.mrf.mxu0
        %v1898 = vadd.f32 %v664, %v1897
        %1899 = vmatprep.mubr.bf16.mxu0 %v1148
        %1900 = vmatmul.mubr.bf16.gmra.mxu0 %v1147
        %v1901 = vpop.f32.mrf.mxu0
        %v1902 = vadd.f32 %v660, %v1901
        %v1903 = vpop.f32.mrf.mxu0
        %v1904 = vadd.f32 %v664, %v1903
        %v1905 = vpop.f32.mrf.mxu0
        %v1906 = vadd.f32 %v660, %v1905
        %v1907 = vpop.f32.mrf.mxu0
        %v1908 = vadd.f32 %v664, %v1907
        %1909 = vmatprep.mubr.bf16.mxu0 %v1152
        %1910 = vmatmul.mubr.bf16.gmra.mxu0 %v1151
        %v1911 = vpop.f32.mrf.mxu0
        %v1912 = vadd.f32 %v660, %v1911
        %v1913 = vpop.f32.mrf.mxu0
        %v1914 = vadd.f32 %v664, %v1913
        %v1915 = vpop.f32.mrf.mxu0
        %v1916 = vadd.f32 %v660, %v1915
        %v1917 = vpop.f32.mrf.mxu0
        %v1918 = vadd.f32 %v664, %v1917
        %1919 = vmatprep.mubr.bf16.mxu0 %v1156
        %1920 = vmatmul.mubr.bf16.gmra.mxu0 %v1155
        %v1921 = vpop.f32.mrf.mxu0
        %v1922 = vadd.f32 %v660, %v1921
        %v1923 = vpop.f32.mrf.mxu0
        %v1924 = vadd.f32 %v664, %v1923
        %v1925 = vpop.f32.mrf.mxu0
        %v1926 = vadd.f32 %v660, %v1925
        %v1927 = vpop.f32.mrf.mxu0
        %v1928 = vadd.f32 %v664, %v1927
        %1929 = vmatprep.mubr.bf16.mxu0 %v1160
        %1930 = vmatmul.mubr.bf16.gmra.mxu0 %v1159
        %v1931 = vpop.f32.mrf.mxu0
        %v1932 = vadd.f32 %v660, %v1931
        %v1933 = vpop.f32.mrf.mxu0
        %v1934 = vadd.f32 %v664, %v1933
        %v1935 = vpop.f32.mrf.mxu0
        %v1936 = vadd.f32 %v660, %v1935
        %v1937 = vpop.f32.mrf.mxu0
        %v1938 = vadd.f32 %v664, %v1937
        %1939 = vmatprep.mubr.bf16.mxu0 %v1164
        %1940 = vmatmul.mubr.bf16.gmra.mxu0 %v1163
        %v1941 = vpop.f32.mrf.mxu0
        %v1942 = vadd.f32 %v660, %v1941
        %v1943 = vpop.f32.mrf.mxu0
        %v1944 = vadd.f32 %v664, %v1943
        %v1945 = vpop.f32.mrf.mxu0
        %v1946 = vadd.f32 %v660, %v1945
        %v1947 = vpop.f32.mrf.mxu0
        %v1948 = vadd.f32 %v664, %v1947
        %1949 = vmatprep.mubr.bf16.mxu0 %v1168
        %1950 = vmatmul.mubr.bf16.gmra.mxu0 %v1167
        %v1951 = vpop.f32.mrf.mxu0
        %v1952 = vadd.f32 %v660, %v1951
        %v1953 = vpop.f32.mrf.mxu0
        %v1954 = vadd.f32 %v664, %v1953
        %v1955 = vpop.f32.mrf.mxu0
        %v1956 = vadd.f32 %v660, %v1955
        %v1957 = vpop.f32.mrf.mxu0
        %v1958 = vadd.f32 %v664, %v1957
        %1959 = vmatprep.mubr.bf16.mxu0 %v1172
        %1960 = vmatmul.mubr.bf16.gmra.mxu0 %v1171
        %v1961 = vpop.f32.mrf.mxu0
        %v1962 = vadd.f32 %v660, %v1961
        %v1963 = vpop.f32.mrf.mxu0
        %v1964 = vadd.f32 %v664, %v1963
        %v1965 = vpop.f32.mrf.mxu0
        %v1966 = vadd.f32 %v660, %v1965
        %v1967 = vpop.f32.mrf.mxu0
        %v1968 = vadd.f32 %v664, %v1967
        %1969 = vmatprep.mubr.bf16.mxu0 %v1176
        %1970 = vmatmul.mubr.bf16.gmra.mxu0 %v1175
        %v1971 = vpop.f32.mrf.mxu0
        %v1972 = vadd.f32 %v660, %v1971
        %v1973 = vpop.f32.mrf.mxu0
        %v1974 = vadd.f32 %v664, %v1973
        %v1975 = vpop.f32.mrf.mxu0
        %v1976 = vadd.f32 %v660, %v1975
        %v1977 = vpop.f32.mrf.mxu0
        %v1978 = vadd.f32 %v664, %v1977
        %1979 = vdwg.mxu0
        %1980 = vmatprep.subr.bf16.mxu0 %v1546
        %1981 = vmatpush1.bf16.msra.mxu0 %v1545
        %1982 = vmatprep.subr.bf16.mxu0 %v1544
        %1983 = vmatpush1.bf16.msra.mxu0 %v1543
        %1984 = vmatprep.subr.bf16.mxu0 %v1542
        %1985 = vmatpush1.bf16.msra.mxu0 %v1541
        %1986 = vmatprep.subr.bf16.mxu0 %v1540
        %1987 = vmatpush1.bf16.msra.mxu0 %v1539
        %1988 = vmatprep.subr.bf16.mxu0 %v1538
        %1989 = vmatpush1.bf16.msra.mxu0 %v1537
        %1990 = vmatprep.subr.bf16.mxu0 %v1536
        %1991 = vmatpush1.bf16.msra.mxu0 %v1535
        %1992 = vmatprep.subr.bf16.mxu0 %v1534
        %1993 = vmatpush1.bf16.msra.mxu0 %v1533
        %1994 = vmatprep.subr.bf16.mxu0 %v1532
        %1995 = vmatpush1.bf16.msra.mxu0 %v1531
        %1996 = vmatprep.subr.bf16.mxu0 %v1562
        %1997 = vmatpush2.bf16.msra.mxu0 %v1561
        %1998 = vmatprep.subr.bf16.mxu0 %v1560
        %1999 = vmatpush2.bf16.msra.mxu0 %v1559
        %2000 = vmatprep.subr.bf16.mxu0 %v1558
        %2001 = vmatpush2.bf16.msra.mxu0 %v1557
        %2002 = vmatprep.subr.bf16.mxu0 %v1556
        %2003 = vmatpush2.bf16.msra.mxu0 %v1555
        %2004 = vmatprep.subr.bf16.mxu0 %v1554
        %2005 = vmatpush2.bf16.msra.mxu0 %v1553
        %2006 = vmatprep.subr.bf16.mxu0 %v1552
        %2007 = vmatpush2.bf16.msra.mxu0 %v1551
        %2008 = vmatprep.subr.bf16.mxu0 %v1550
        %2009 = vmatpush2.bf16.msra.mxu0 %v1549
        %2010 = vmatprep.subr.bf16.mxu0 %v1548
        %2011 = vmatpush2.bf16.msra.mxu0 %v1547
        %2012 = vmatprep.mubr.bf16.mxu0 %v1054
        %2013 = vmatmul.mubr.bf16.gmra.mxu0 %v1053
        %v2014 = vpop.f32.mrf.mxu0
        %v2015 = vadd.f32 %v1662, %v2014
        %v2016 = vpop.f32.mrf.mxu0
        %v2017 = vadd.f32 %v1664, %v2016
        %v2018 = vpop.f32.mrf.mxu0
        %v2019 = vadd.f32 %v1666, %v2018
        %v2020 = vpop.f32.mrf.mxu0
        %v2021 = vadd.f32 %v1668, %v2020
        %2022 = vmatprep.mubr.bf16.mxu0 %v1058
        %2023 = vmatmul.mubr.bf16.gmra.mxu0 %v1057
        %v2024 = vpop.f32.mrf.mxu0
        %v2025 = vadd.f32 %v1672, %v2024
        %v2026 = vpop.f32.mrf.mxu0
        %v2027 = vadd.f32 %v1674, %v2026
        %v2028 = vpop.f32.mrf.mxu0
        %v2029 = vadd.f32 %v1676, %v2028
        %v2030 = vpop.f32.mrf.mxu0
        %v2031 = vadd.f32 %v1678, %v2030
        %2032 = vmatprep.mubr.bf16.mxu0 %v1062
        %2033 = vmatmul.mubr.bf16.gmra.mxu0 %v1061
        %v2034 = vpop.f32.mrf.mxu0
        %v2035 = vadd.f32 %v1682, %v2034
        %v2036 = vpop.f32.mrf.mxu0
        %v2037 = vadd.f32 %v1684, %v2036
        %v2038 = vpop.f32.mrf.mxu0
        %v2039 = vadd.f32 %v1686, %v2038
        %v2040 = vpop.f32.mrf.mxu0
        %v2041 = vadd.f32 %v1688, %v2040
        %2042 = vmatprep.mubr.bf16.mxu0 %v1066
        %2043 = vmatmul.mubr.bf16.gmra.mxu0 %v1065
        %v2044 = vpop.f32.mrf.mxu0
        %v2045 = vadd.f32 %v1692, %v2044
        %v2046 = vpop.f32.mrf.mxu0
        %v2047 = vadd.f32 %v1694, %v2046
        %v2048 = vpop.f32.mrf.mxu0
        %v2049 = vadd.f32 %v1696, %v2048
        %v2050 = vpop.f32.mrf.mxu0
        %v2051 = vadd.f32 %v1698, %v2050
        %2052 = vmatprep.mubr.bf16.mxu0 %v1070
        %2053 = vmatmul.mubr.bf16.gmra.mxu0 %v1069
        %v2054 = vpop.f32.mrf.mxu0
        %v2055 = vadd.f32 %v1702, %v2054
        %v2056 = vpop.f32.mrf.mxu0
        %v2057 = vadd.f32 %v1704, %v2056
        %v2058 = vpop.f32.mrf.mxu0
        %v2059 = vadd.f32 %v1706, %v2058
        %v2060 = vpop.f32.mrf.mxu0
        %v2061 = vadd.f32 %v1708, %v2060
        %2062 = vmatprep.mubr.bf16.mxu0 %v1074
        %2063 = vmatmul.mubr.bf16.gmra.mxu0 %v1073
        %v2064 = vpop.f32.mrf.mxu0
        %v2065 = vadd.f32 %v1712, %v2064
        %v2066 = vpop.f32.mrf.mxu0
        %v2067 = vadd.f32 %v1714, %v2066
        %v2068 = vpop.f32.mrf.mxu0
        %v2069 = vadd.f32 %v1716, %v2068
        %v2070 = vpop.f32.mrf.mxu0
        %v2071 = vadd.f32 %v1718, %v2070
        %2072 = vmatprep.mubr.bf16.mxu0 %v1078
        %2073 = vmatmul.mubr.bf16.gmra.mxu0 %v1077
        %v2074 = vpop.f32.mrf.mxu0
        %v2075 = vadd.f32 %v1722, %v2074
        %v2076 = vpop.f32.mrf.mxu0
        %v2077 = vadd.f32 %v1724, %v2076
        %v2078 = vpop.f32.mrf.mxu0
        %v2079 = vadd.f32 %v1726, %v2078
        %v2080 = vpop.f32.mrf.mxu0
        %v2081 = vadd.f32 %v1728, %v2080
        %2082 = vmatprep.mubr.bf16.mxu0 %v1082
        %2083 = vmatmul.mubr.bf16.gmra.mxu0 %v1081
        %v2084 = vpop.f32.mrf.mxu0
        %v2085 = vadd.f32 %v1732, %v2084
        %v2086 = vpop.f32.mrf.mxu0
        %v2087 = vadd.f32 %v1734, %v2086
        %v2088 = vpop.f32.mrf.mxu0
        %v2089 = vadd.f32 %v1736, %v2088
        %v2090 = vpop.f32.mrf.mxu0
        %v2091 = vadd.f32 %v1738, %v2090
        %2092 = vmatprep.mubr.bf16.mxu0 %v1086
        %2093 = vmatmul.mubr.bf16.gmra.mxu0 %v1085
        %v2094 = vpop.f32.mrf.mxu0
        %v2095 = vadd.f32 %v1742, %v2094
        %v2096 = vpop.f32.mrf.mxu0
        %v2097 = vadd.f32 %v1744, %v2096
        %v2098 = vpop.f32.mrf.mxu0
        %v2099 = vadd.f32 %v1746, %v2098
        %v2100 = vpop.f32.mrf.mxu0
        %v2101 = vadd.f32 %v1748, %v2100
        %2102 = vmatprep.mubr.bf16.mxu0 %v1090
        %2103 = vmatmul.mubr.bf16.gmra.mxu0 %v1089
        %v2104 = vpop.f32.mrf.mxu0
        %v2105 = vadd.f32 %v1752, %v2104
        %v2106 = vpop.f32.mrf.mxu0
        %v2107 = vadd.f32 %v1754, %v2106
        %v2108 = vpop.f32.mrf.mxu0
        %v2109 = vadd.f32 %v1756, %v2108
        %v2110 = vpop.f32.mrf.mxu0
        %v2111 = vadd.f32 %v1758, %v2110
        %2112 = vmatprep.mubr.bf16.mxu0 %v1094
        %2113 = vmatmul.mubr.bf16.gmra.mxu0 %v1093
        %v2114 = vpop.f32.mrf.mxu0
        %v2115 = vadd.f32 %v1762, %v2114
        %v2116 = vpop.f32.mrf.mxu0
        %v2117 = vadd.f32 %v1764, %v2116
        %v2118 = vpop.f32.mrf.mxu0
        %v2119 = vadd.f32 %v1766, %v2118
        %v2120 = vpop.f32.mrf.mxu0
        %v2121 = vadd.f32 %v1768, %v2120
        %2122 = vmatprep.mubr.bf16.mxu0 %v1098
        %2123 = vmatmul.mubr.bf16.gmra.mxu0 %v1097
        %v2124 = vpop.f32.mrf.mxu0
        %v2125 = vadd.f32 %v1772, %v2124
        %v2126 = vpop.f32.mrf.mxu0
        %v2127 = vadd.f32 %v1774, %v2126
        %v2128 = vpop.f32.mrf.mxu0
        %v2129 = vadd.f32 %v1776, %v2128
        %v2130 = vpop.f32.mrf.mxu0
        %v2131 = vadd.f32 %v1778, %v2130
        %2132 = vmatprep.mubr.bf16.mxu0 %v1102
        %2133 = vmatmul.mubr.bf16.gmra.mxu0 %v1101
        %v2134 = vpop.f32.mrf.mxu0
        %v2135 = vadd.f32 %v1782, %v2134
        %v2136 = vpop.f32.mrf.mxu0
        %v2137 = vadd.f32 %v1784, %v2136
        %v2138 = vpop.f32.mrf.mxu0
        %v2139 = vadd.f32 %v1786, %v2138
        %v2140 = vpop.f32.mrf.mxu0
        %v2141 = vadd.f32 %v1788, %v2140
        %2142 = vmatprep.mubr.bf16.mxu0 %v1106
        %2143 = vmatmul.mubr.bf16.gmra.mxu0 %v1105
        %v2144 = vpop.f32.mrf.mxu0
        %v2145 = vadd.f32 %v1792, %v2144
        %v2146 = vpop.f32.mrf.mxu0
        %v2147 = vadd.f32 %v1794, %v2146
        %v2148 = vpop.f32.mrf.mxu0
        %v2149 = vadd.f32 %v1796, %v2148
        %v2150 = vpop.f32.mrf.mxu0
        %v2151 = vadd.f32 %v1798, %v2150
        %2152 = vmatprep.mubr.bf16.mxu0 %v1110
        %2153 = vmatmul.mubr.bf16.gmra.mxu0 %v1109
        %v2154 = vpop.f32.mrf.mxu0
        %v2155 = vadd.f32 %v1802, %v2154
        %v2156 = vpop.f32.mrf.mxu0
        %v2157 = vadd.f32 %v1804, %v2156
        %v2158 = vpop.f32.mrf.mxu0
        %v2159 = vadd.f32 %v1806, %v2158
        %v2160 = vpop.f32.mrf.mxu0
        %v2161 = vadd.f32 %v1808, %v2160
        %2162 = vmatprep.mubr.bf16.mxu0 %v1114
        %2163 = vmatmul.mubr.bf16.gmra.mxu0 %v1113
        %v2164 = vpop.f32.mrf.mxu0
        %v2165 = vadd.f32 %v1812, %v2164
        %v2166 = vpop.f32.mrf.mxu0
        %v2167 = vadd.f32 %v1814, %v2166
        %v2168 = vpop.f32.mrf.mxu0
        %v2169 = vadd.f32 %v1816, %v2168
        %v2170 = vpop.f32.mrf.mxu0
        %v2171 = vadd.f32 %v1818, %v2170
        %2172 = vmatprep.mubr.bf16.mxu0 %v1118
        %2173 = vmatmul.mubr.bf16.gmra.mxu0 %v1117
        %v2174 = vpop.f32.mrf.mxu0
        %v2175 = vadd.f32 %v1822, %v2174
        %v2176 = vpop.f32.mrf.mxu0
        %v2177 = vadd.f32 %v1824, %v2176
        %v2178 = vpop.f32.mrf.mxu0
        %v2179 = vadd.f32 %v1826, %v2178
        %v2180 = vpop.f32.mrf.mxu0
        %v2181 = vadd.f32 %v1828, %v2180
        %2182 = vmatprep.mubr.bf16.mxu0 %v1122
        %2183 = vmatmul.mubr.bf16.gmra.mxu0 %v1121
        %v2184 = vpop.f32.mrf.mxu0
        %v2185 = vadd.f32 %v1832, %v2184
        %v2186 = vpop.f32.mrf.mxu0
        %v2187 = vadd.f32 %v1834, %v2186
        %v2188 = vpop.f32.mrf.mxu0
        %v2189 = vadd.f32 %v1836, %v2188
        %v2190 = vpop.f32.mrf.mxu0
        %v2191 = vadd.f32 %v1838, %v2190
        %2192 = vmatprep.mubr.bf16.mxu0 %v1126
        %2193 = vmatmul.mubr.bf16.gmra.mxu0 %v1125
        %v2194 = vpop.f32.mrf.mxu0
        %v2195 = vadd.f32 %v1842, %v2194
        %v2196 = vpop.f32.mrf.mxu0
        %v2197 = vadd.f32 %v1844, %v2196
        %v2198 = vpop.f32.mrf.mxu0
        %v2199 = vadd.f32 %v1846, %v2198
        %v2200 = vpop.f32.mrf.mxu0
        %v2201 = vadd.f32 %v1848, %v2200
        %2202 = vmatprep.mubr.bf16.mxu0 %v1130
        %2203 = vmatmul.mubr.bf16.gmra.mxu0 %v1129
        %v2204 = vpop.f32.mrf.mxu0
        %v2205 = vadd.f32 %v1852, %v2204
        %v2206 = vpop.f32.mrf.mxu0
        %v2207 = vadd.f32 %v1854, %v2206
        %v2208 = vpop.f32.mrf.mxu0
        %v2209 = vadd.f32 %v1856, %v2208
        %v2210 = vpop.f32.mrf.mxu0
        %v2211 = vadd.f32 %v1858, %v2210
        %2212 = vmatprep.mubr.bf16.mxu0 %v1134
        %2213 = vmatmul.mubr.bf16.gmra.mxu0 %v1133
        %v2214 = vpop.f32.mrf.mxu0
        %v2215 = vadd.f32 %v1862, %v2214
        %v2216 = vpop.f32.mrf.mxu0
        %v2217 = vadd.f32 %v1864, %v2216
        %v2218 = vpop.f32.mrf.mxu0
        %v2219 = vadd.f32 %v1866, %v2218
        %v2220 = vpop.f32.mrf.mxu0
        %v2221 = vadd.f32 %v1868, %v2220
        %2222 = vmatprep.mubr.bf16.mxu0 %v1138
        %2223 = vmatmul.mubr.bf16.gmra.mxu0 %v1137
        %v2224 = vpop.f32.mrf.mxu0
        %v2225 = vadd.f32 %v1872, %v2224
        %v2226 = vpop.f32.mrf.mxu0
        %v2227 = vadd.f32 %v1874, %v2226
        %v2228 = vpop.f32.mrf.mxu0
        %v2229 = vadd.f32 %v1876, %v2228
        %v2230 = vpop.f32.mrf.mxu0
        %v2231 = vadd.f32 %v1878, %v2230
        %2232 = vmatprep.mubr.bf16.mxu0 %v1142
        %2233 = vmatmul.mubr.bf16.gmra.mxu0 %v1141
        %v2234 = vpop.f32.mrf.mxu0
        %v2235 = vadd.f32 %v1882, %v2234
        %v2236 = vpop.f32.mrf.mxu0
        %v2237 = vadd.f32 %v1884, %v2236
        %v2238 = vpop.f32.mrf.mxu0
        %v2239 = vadd.f32 %v1886, %v2238
        %v2240 = vpop.f32.mrf.mxu0
        %v2241 = vadd.f32 %v1888, %v2240
        %2242 = vmatprep.mubr.bf16.mxu0 %v1146
        %2243 = vmatmul.mubr.bf16.gmra.mxu0 %v1145
        %v2244 = vpop.f32.mrf.mxu0
        %v2245 = vadd.f32 %v1892, %v2244
        %v2246 = vpop.f32.mrf.mxu0
        %v2247 = vadd.f32 %v1894, %v2246
        %v2248 = vpop.f32.mrf.mxu0
        %v2249 = vadd.f32 %v1896, %v2248
        %v2250 = vpop.f32.mrf.mxu0
        %v2251 = vadd.f32 %v1898, %v2250
        %2252 = vmatprep.mubr.bf16.mxu0 %v1150
        %2253 = vmatmul.mubr.bf16.gmra.mxu0 %v1149
        %v2254 = vpop.f32.mrf.mxu0
        %v2255 = vadd.f32 %v1902, %v2254
        %v2256 = vpop.f32.mrf.mxu0
        %v2257 = vadd.f32 %v1904, %v2256
        %v2258 = vpop.f32.mrf.mxu0
        %v2259 = vadd.f32 %v1906, %v2258
        %v2260 = vpop.f32.mrf.mxu0
        %v2261 = vadd.f32 %v1908, %v2260
        %2262 = vmatprep.mubr.bf16.mxu0 %v1154
        %2263 = vmatmul.mubr.bf16.gmra.mxu0 %v1153
        %v2264 = vpop.f32.mrf.mxu0
        %v2265 = vadd.f32 %v1912, %v2264
        %v2266 = vpop.f32.mrf.mxu0
        %v2267 = vadd.f32 %v1914, %v2266
        %v2268 = vpop.f32.mrf.mxu0
        %v2269 = vadd.f32 %v1916, %v2268
        %v2270 = vpop.f32.mrf.mxu0
        %v2271 = vadd.f32 %v1918, %v2270
        %2272 = vmatprep.mubr.bf16.mxu0 %v1158
        %2273 = vmatmul.mubr.bf16.gmra.mxu0 %v1157
        %v2274 = vpop.f32.mrf.mxu0
        %v2275 = vadd.f32 %v1922, %v2274
        %v2276 = vpop.f32.mrf.mxu0
        %v2277 = vadd.f32 %v1924, %v2276
        %v2278 = vpop.f32.mrf.mxu0
        %v2279 = vadd.f32 %v1926, %v2278
        %v2280 = vpop.f32.mrf.mxu0
        %v2281 = vadd.f32 %v1928, %v2280
        %2282 = vmatprep.mubr.bf16.mxu0 %v1162
        %2283 = vmatmul.mubr.bf16.gmra.mxu0 %v1161
        %v2284 = vpop.f32.mrf.mxu0
        %v2285 = vadd.f32 %v1932, %v2284
        %v2286 = vpop.f32.mrf.mxu0
        %v2287 = vadd.f32 %v1934, %v2286
        %v2288 = vpop.f32.mrf.mxu0
        %v2289 = vadd.f32 %v1936, %v2288
        %v2290 = vpop.f32.mrf.mxu0
        %v2291 = vadd.f32 %v1938, %v2290
        %2292 = vmatprep.mubr.bf16.mxu0 %v1166
        %2293 = vmatmul.mubr.bf16.gmra.mxu0 %v1165
        %v2294 = vpop.f32.mrf.mxu0
        %v2295 = vadd.f32 %v1942, %v2294
        %v2296 = vpop.f32.mrf.mxu0
        %v2297 = vadd.f32 %v1944, %v2296
        %v2298 = vpop.f32.mrf.mxu0
        %v2299 = vadd.f32 %v1946, %v2298
        %v2300 = vpop.f32.mrf.mxu0
        %v2301 = vadd.f32 %v1948, %v2300
        %2302 = vmatprep.mubr.bf16.mxu0 %v1170
        %2303 = vmatmul.mubr.bf16.gmra.mxu0 %v1169
        %v2304 = vpop.f32.mrf.mxu0
        %v2305 = vadd.f32 %v1952, %v2304
        %v2306 = vpop.f32.mrf.mxu0
        %v2307 = vadd.f32 %v1954, %v2306
        %v2308 = vpop.f32.mrf.mxu0
        %v2309 = vadd.f32 %v1956, %v2308
        %v2310 = vpop.f32.mrf.mxu0
        %v2311 = vadd.f32 %v1958, %v2310
        %2312 = vmatprep.mubr.bf16.mxu0 %v1174
        %2313 = vmatmul.mubr.bf16.gmra.mxu0 %v1173
        %v2314 = vpop.f32.mrf.mxu0
        %v2315 = vadd.f32 %v1962, %v2314
        %v2316 = vpop.f32.mrf.mxu0
        %v2317 = vadd.f32 %v1964, %v2316
        %v2318 = vpop.f32.mrf.mxu0
        %v2319 = vadd.f32 %v1966, %v2318
        %v2320 = vpop.f32.mrf.mxu0
        %v2321 = vadd.f32 %v1968, %v2320
        %2322 = vmatprep.mubr.bf16.mxu0 %v1178
        %2323 = vmatmul.mubr.bf16.gmra.mxu0 %v1177
        %v2324 = vpop.f32.mrf.mxu0
        %v2325 = vadd.f32 %v1972, %v2324
        %v2326 = vpop.f32.mrf.mxu0
        %v2327 = vadd.f32 %v1974, %v2326
        %v2328 = vpop.f32.mrf.mxu0
        %v2329 = vadd.f32 %v1976, %v2328
        %v2330 = vpop.f32.mrf.mxu0
        %v2331 = vadd.f32 %v1978, %v2330
        %2332 = vdwg.mxu0
        %v2333 = vmax.f32 %v2015, 0.0
        %v2334 = vmax.f32 %v2017, 0.0
        %v2335 = vmax.f32 %v2019, 0.0
        %v2336 = vmax.f32 %v2021, 0.0
        %v2337 = vmax.f32 %v2025, 0.0
        %v2338 = vmax.f32 %v2027, 0.0
        %v2339 = vmax.f32 %v2029, 0.0
        %v2340 = vmax.f32 %v2031, 0.0
        %v2341 = vmax.f32 %v2035, 0.0
        %v2342 = vmax.f32 %v2037, 0.0
        %v2343 = vmax.f32 %v2039, 0.0
        %v2344 = vmax.f32 %v2041, 0.0
        %v2345 = vmax.f32 %v2045, 0.0
        %v2346 = vmax.f32 %v2047, 0.0
        %v2347 = vmax.f32 %v2049, 0.0
        %v2348 = vmax.f32 %v2051, 0.0
        %v2349 = vmax.f32 %v2055, 0.0
        %v2350 = vmax.f32 %v2057, 0.0
        %v2351 = vmax.f32 %v2059, 0.0
        %v2352 = vmax.f32 %v2061, 0.0
        %v2353 = vmax.f32 %v2065, 0.0
        %v2354 = vmax.f32 %v2067, 0.0
        %v2355 = vmax.f32 %v2069, 0.0
        %v2356 = vmax.f32 %v2071, 0.0
        %v2357 = vmax.f32 %v2075, 0.0
        %v2358 = vmax.f32 %v2077, 0.0
        %v2359 = vmax.f32 %v2079, 0.0
        %v2360 = vmax.f32 %v2081, 0.0
        %v2361 = vmax.f32 %v2085, 0.0
        %v2362 = vmax.f32 %v2087, 0.0
        %v2363 = vmax.f32 %v2089, 0.0
        %v2364 = vmax.f32 %v2091, 0.0
        %v2365 = vmax.f32 %v2095, 0.0
        %v2366 = vmax.f32 %v2097, 0.0
        %v2367 = vmax.f32 %v2099, 0.0
        %v2368 = vmax.f32 %v2101, 0.0
        %v2369 = vmax.f32 %v2105, 0.0
        %v2370 = vmax.f32 %v2107, 0.0
        %v2371 = vmax.f32 %v2109, 0.0
        %v2372 = vmax.f32 %v2111, 0.0
        %v2373 = vmax.f32 %v2115, 0.0
        %v2374 = vmax.f32 %v2117, 0.0
        %v2375 = vmax.f32 %v2119, 0.0
        %v2376 = vmax.f32 %v2121, 0.0
        %v2377 = vmax.f32 %v2125, 0.0
        %v2378 = vmax.f32 %v2127, 0.0
        %v2379 = vmax.f32 %v2129, 0.0
        %v2380 = vmax.f32 %v2131, 0.0
        %v2381 = vmax.f32 %v2135, 0.0
        %v2382 = vmax.f32 %v2137, 0.0
        %v2383 = vmax.f32 %v2139, 0.0
        %v2384 = vmax.f32 %v2141, 0.0
        %v2385 = vmax.f32 %v2145, 0.0
        %v2386 = vmax.f32 %v2147, 0.0
        %v2387 = vmax.f32 %v2149, 0.0
        %v2388 = vmax.f32 %v2151, 0.0
        %v2389 = vmax.f32 %v2155, 0.0
        %v2390 = vmax.f32 %v2157, 0.0
        %v2391 = vmax.f32 %v2159, 0.0
        %v2392 = vmax.f32 %v2161, 0.0
        %v2393 = vmax.f32 %v2165, 0.0
        %v2394 = vmax.f32 %v2167, 0.0
        %v2395 = vmax.f32 %v2169, 0.0
        %v2396 = vmax.f32 %v2171, 0.0
        %v2397 = vmax.f32 %v2175, 0.0
        %v2398 = vmax.f32 %v2177, 0.0
        %v2399 = vmax.f32 %v2179, 0.0
        %v2400 = vmax.f32 %v2181, 0.0
        %v2401 = vmax.f32 %v2185, 0.0
        %v2402 = vmax.f32 %v2187, 0.0
        %v2403 = vmax.f32 %v2189, 0.0
        %v2404 = vmax.f32 %v2191, 0.0
        %v2405 = vmax.f32 %v2195, 0.0
        %v2406 = vmax.f32 %v2197, 0.0
        %v2407 = vmax.f32 %v2199, 0.0
        %v2408 = vmax.f32 %v2201, 0.0
        %v2409 = vmax.f32 %v2205, 0.0
        %v2410 = vmax.f32 %v2207, 0.0
        %v2411 = vmax.f32 %v2209, 0.0
        %v2412 = vmax.f32 %v2211, 0.0
        %v2413 = vmax.f32 %v2215, 0.0
        %v2414 = vmax.f32 %v2217, 0.0
        %v2415 = vmax.f32 %v2219, 0.0
        %v2416 = vmax.f32 %v2221, 0.0
        %v2417 = vmax.f32 %v2225, 0.0
        %v2418 = vmax.f32 %v2227, 0.0
        %v2419 = vmax.f32 %v2229, 0.0
        %v2420 = vmax.f32 %v2231, 0.0
        %v2421 = vmax.f32 %v2235, 0.0
        %v2422 = vmax.f32 %v2237, 0.0
        %v2423 = vmax.f32 %v2239, 0.0
        %v2424 = vmax.f32 %v2241, 0.0
        %v2425 = vmax.f32 %v2245, 0.0
        %v2426 = vmax.f32 %v2247, 0.0
        %v2427 = vmax.f32 %v2249, 0.0
        %v2428 = vmax.f32 %v2251, 0.0
        %v2429 = vmax.f32 %v2255, 0.0
        %v2430 = vmax.f32 %v2257, 0.0
        %v2431 = vmax.f32 %v2259, 0.0
        %v2432 = vmax.f32 %v2261, 0.0
        %v2433 = vmax.f32 %v2265, 0.0
        %v2434 = vmax.f32 %v2267, 0.0
        %v2435 = vmax.f32 %v2269, 0.0
        %v2436 = vmax.f32 %v2271, 0.0
        %v2437 = vmax.f32 %v2275, 0.0
        %v2438 = vmax.f32 %v2277, 0.0
        %v2439 = vmax.f32 %v2279, 0.0
        %v2440 = vmax.f32 %v2281, 0.0
        %v2441 = vmax.f32 %v2285, 0.0
        %v2442 = vmax.f32 %v2287, 0.0
        %v2443 = vmax.f32 %v2289, 0.0
        %v2444 = vmax.f32 %v2291, 0.0
        %v2445 = vmax.f32 %v2295, 0.0
        %v2446 = vmax.f32 %v2297, 0.0
        %v2447 = vmax.f32 %v2299, 0.0
        %v2448 = vmax.f32 %v2301, 0.0
        %v2449 = vmax.f32 %v2305, 0.0
        %v2450 = vmax.f32 %v2307, 0.0
        %v2451 = vmax.f32 %v2309, 0.0
        %v2452 = vmax.f32 %v2311, 0.0
        %v2453 = vmax.f32 %v2315, 0.0
        %v2454 = vmax.f32 %v2317, 0.0
        %v2455 = vmax.f32 %v2319, 0.0
        %v2456 = vmax.f32 %v2321, 0.0
        %v2457 = vmax.f32 %v2325, 0.0
        %v2458 = vmax.f32 %v2327, 0.0
        %v2459 = vmax.f32 %v2329, 0.0
        %v2460 = vmax.f32 %v2331, 0.0
        %v2461 = vpack.c.bf16 %v2335, %v2333
        %v2462 = vpack.c.bf16 %v2336, %v2334
        %v2463 = vpack.c.bf16 %v2339, %v2337
        %v2464 = vpack.c.bf16 %v2340, %v2338
        %v2465 = vpack.c.bf16 %v2343, %v2341
        %v2466 = vpack.c.bf16 %v2344, %v2342
        %v2467 = vpack.c.bf16 %v2347, %v2345
        %v2468 = vpack.c.bf16 %v2348, %v2346
        %v2469 = vpack.c.bf16 %v2351, %v2349
        %v2470 = vpack.c.bf16 %v2352, %v2350
        %v2471 = vpack.c.bf16 %v2355, %v2353
        %v2472 = vpack.c.bf16 %v2356, %v2354
        %v2473 = vpack.c.bf16 %v2359, %v2357
        %v2474 = vpack.c.bf16 %v2360, %v2358
        %v2475 = vpack.c.bf16 %v2363, %v2361
        %v2476 = vpack.c.bf16 %v2364, %v2362
        %v2477 = vpack.c.bf16 %v2367, %v2365
        %v2478 = vpack.c.bf16 %v2368, %v2366
        %v2479 = vpack.c.bf16 %v2371, %v2369
        %v2480 = vpack.c.bf16 %v2372, %v2370
        %v2481 = vpack.c.bf16 %v2375, %v2373
        %v2482 = vpack.c.bf16 %v2376, %v2374
        %v2483 = vpack.c.bf16 %v2379, %v2377
        %v2484 = vpack.c.bf16 %v2380, %v2378
        %v2485 = vpack.c.bf16 %v2383, %v2381
        %v2486 = vpack.c.bf16 %v2384, %v2382
        %v2487 = vpack.c.bf16 %v2387, %v2385
        %v2488 = vpack.c.bf16 %v2388, %v2386
        %v2489 = vpack.c.bf16 %v2391, %v2389
        %v2490 = vpack.c.bf16 %v2392, %v2390
        %v2491 = vpack.c.bf16 %v2395, %v2393
        %v2492 = vpack.c.bf16 %v2396, %v2394
        %v2493 = vpack.c.bf16 %v2399, %v2397
        %v2494 = vpack.c.bf16 %v2400, %v2398
        %v2495 = vpack.c.bf16 %v2403, %v2401
        %v2496 = vpack.c.bf16 %v2404, %v2402
        %v2497 = vpack.c.bf16 %v2407, %v2405
        %v2498 = vpack.c.bf16 %v2408, %v2406
        %v2499 = vpack.c.bf16 %v2411, %v2409
        %v2500 = vpack.c.bf16 %v2412, %v2410
        %v2501 = vpack.c.bf16 %v2415, %v2413
        %v2502 = vpack.c.bf16 %v2416, %v2414
        %v2503 = vpack.c.bf16 %v2419, %v2417
        %v2504 = vpack.c.bf16 %v2420, %v2418
        %v2505 = vpack.c.bf16 %v2423, %v2421
        %v2506 = vpack.c.bf16 %v2424, %v2422
        %v2507 = vpack.c.bf16 %v2427, %v2425
        %v2508 = vpack.c.bf16 %v2428, %v2426
        %v2509 = vpack.c.bf16 %v2431, %v2429
        %v2510 = vpack.c.bf16 %v2432, %v2430
        %v2511 = vpack.c.bf16 %v2435, %v2433
        %v2512 = vpack.c.bf16 %v2436, %v2434
        %v2513 = vpack.c.bf16 %v2439, %v2437
        %v2514 = vpack.c.bf16 %v2440, %v2438
        %v2515 = vpack.c.bf16 %v2443, %v2441
        %v2516 = vpack.c.bf16 %v2444, %v2442
        %v2517 = vpack.c.bf16 %v2447, %v2445
        %v2518 = vpack.c.bf16 %v2448, %v2446
        %v2519 = vpack.c.bf16 %v2451, %v2449
        %v2520 = vpack.c.bf16 %v2452, %v2450
        %v2521 = vpack.c.bf16 %v2455, %v2453
        %v2522 = vpack.c.bf16 %v2456, %v2454
        %v2523 = vpack.c.bf16 %v2459, %v2457
        %v2524 = vpack.c.bf16 %v2460, %v2458
        %v2525 = vld [vmem:[#allocation8] sm:$0xf]
        %v2526 = vld [vmem:[#allocation8 + $0x4] sm:$0xf]
        %v2527 = vld [vmem:[#allocation8 + $0x8] sm:$0xf]
        %v2528 = vld [vmem:[#allocation8 + $0xc] sm:$0xf]
        %v2529 = vld [vmem:[#allocation8 + $0x10] sm:$0xf]
        %v2530 = vld [vmem:[#allocation8 + $0x14] sm:$0xf]
        %v2531 = vld [vmem:[#allocation8 + $0x18] sm:$0xf]
        %v2532 = vld [vmem:[#allocation8 + $0x1c] sm:$0xf]
        %v2533 = vld [vmem:[#allocation8 + $0x20] sm:$0xf]
        %v2534 = vld [vmem:[#allocation8 + $0x24] sm:$0xf]
        %v2535 = vld [vmem:[#allocation8 + $0x28] sm:$0xf]
        %v2536 = vld [vmem:[#allocation8 + $0x2c] sm:$0xf]
        %v2537 = vld [vmem:[#allocation8 + $0x30] sm:$0xf]
        %v2538 = vld [vmem:[#allocation8 + $0x34] sm:$0xf]
        %v2539 = vld [vmem:[#allocation8 + $0x38] sm:$0xf]
        %v2540 = vld [vmem:[#allocation8 + $0x3c] sm:$0xf]
        %v2541 = vld [vmem:[#allocation8 + $0x40] sm:$0xf]
        %v2542 = vld [vmem:[#allocation8 + $0x44] sm:$0xf]
        %v2543 = vld [vmem:[#allocation8 + $0x48] sm:$0xf]
        %v2544 = vld [vmem:[#allocation8 + $0x4c] sm:$0xf]
        %v2545 = vld [vmem:[#allocation8 + $0x50] sm:$0xf]
        %v2546 = vld [vmem:[#allocation8 + $0x54] sm:$0xf]
        %v2547 = vld [vmem:[#allocation8 + $0x58] sm:$0xf]
        %v2548 = vld [vmem:[#allocation8 + $0x5c] sm:$0xf]
        %v2549 = vld [vmem:[#allocation8 + $0x60] sm:$0xf]
        %v2550 = vld [vmem:[#allocation8 + $0x64] sm:$0xf]
        %v2551 = vld [vmem:[#allocation8 + $0x68] sm:$0xf]
        %v2552 = vld [vmem:[#allocation8 + $0x6c] sm:$0xf]
        %v2553 = vld [vmem:[#allocation8 + $0x70] sm:$0xf]
        %v2554 = vld [vmem:[#allocation8 + $0x74] sm:$0xf]
        %v2555 = vld [vmem:[#allocation8 + $0x78] sm:$0xf]
        %v2556 = vld [vmem:[#allocation8 + $0x7c] sm:$0xf]
        %v2557 = vld [vmem:[#allocation10] sm:$0x1]
        %v2559 = vlaneseq
        %v2560 = vshrl.u32 %v2559, 7
        %v2561 = vsub.s32 0, %v2560
        %v2562 = vrot.slane %v2557, %v2561
        %v2596 = vunpack.c.l.b16 %v2525
        %v2597 = vunpack.c.l.b16 %v2526
        %v2598 = vunpack.c.l.b16 %v2527
        %v2599 = vunpack.c.l.b16 %v2528
        %v2600 = vunpack.c.l.b16 %v2529
        %v2601 = vunpack.c.l.b16 %v2530
        %v2602 = vunpack.c.l.b16 %v2531
        %v2603 = vunpack.c.l.b16 %v2532
        %v2604 = vunpack.c.l.b16 %v2533
        %v2605 = vunpack.c.l.b16 %v2534
        %v2606 = vunpack.c.l.b16 %v2535
        %v2607 = vunpack.c.l.b16 %v2536
        %v2608 = vunpack.c.l.b16 %v2537
        %v2609 = vunpack.c.l.b16 %v2538
        %v2610 = vunpack.c.l.b16 %v2539
        %v2611 = vunpack.c.l.b16 %v2540
        %v2612 = vunpack.c.l.b16 %v2541
        %v2613 = vunpack.c.l.b16 %v2542
        %v2614 = vunpack.c.l.b16 %v2543
        %v2615 = vunpack.c.l.b16 %v2544
        %v2616 = vunpack.c.l.b16 %v2545
        %v2617 = vunpack.c.l.b16 %v2546
        %v2618 = vunpack.c.l.b16 %v2547
        %v2619 = vunpack.c.l.b16 %v2548
        %v2620 = vunpack.c.l.b16 %v2549
        %v2621 = vunpack.c.l.b16 %v2550
        %v2622 = vunpack.c.l.b16 %v2551
        %v2623 = vunpack.c.l.b16 %v2552
        %v2624 = vunpack.c.l.b16 %v2553
        %v2625 = vunpack.c.l.b16 %v2554
        %v2626 = vunpack.c.l.b16 %v2555
        %v2627 = vunpack.c.l.b16 %v2556
        %v2628 = vpack.c.b16 %v2597, %v2596
        %v2629 = vpack.c.b16 %v2599, %v2598
        %v2630 = vpack.c.b16 %v2601, %v2600
        %v2631 = vpack.c.b16 %v2603, %v2602
        %v2632 = vpack.c.b16 %v2605, %v2604
        %v2633 = vpack.c.b16 %v2607, %v2606
        %v2634 = vpack.c.b16 %v2609, %v2608
        %v2635 = vpack.c.b16 %v2611, %v2610
        %v2636 = vpack.c.b16 %v2613, %v2612
        %v2637 = vpack.c.b16 %v2615, %v2614
        %v2638 = vpack.c.b16 %v2617, %v2616
        %v2639 = vpack.c.b16 %v2619, %v2618
        %v2640 = vpack.c.b16 %v2621, %v2620
        %v2641 = vpack.c.b16 %v2623, %v2622
        %v2642 = vpack.c.b16 %v2625, %v2624
        %v2643 = vpack.c.b16 %v2627, %v2626
        %2660 = vmatprep.subr.bf16.mxu0 0
        %2661 = vmatpush1.bf16.msra.mxu0 %v2635
        %2662 = vmatprep.subr.bf16.mxu0 0
        %2663 = vmatpush1.bf16.msra.mxu0 %v2634
        %2664 = vmatprep.subr.bf16.mxu0 0
        %2665 = vmatpush1.bf16.msra.mxu0 %v2633
        %2666 = vmatprep.subr.bf16.mxu0 0
        %2667 = vmatpush1.bf16.msra.mxu0 %v2632
        %2668 = vmatprep.subr.bf16.mxu0 0
        %2669 = vmatpush1.bf16.msra.mxu0 %v2631
        %2670 = vmatprep.subr.bf16.mxu0 0
        %2671 = vmatpush1.bf16.msra.mxu0 %v2630
        %2672 = vmatprep.subr.bf16.mxu0 0
        %2673 = vmatpush1.bf16.msra.mxu0 %v2629
        %2674 = vmatprep.subr.bf16.mxu0 0
        %2675 = vmatpush1.bf16.msra.mxu0 %v2628
        %2676 = vmatprep.subr.bf16.mxu0 0
        %2677 = vmatpush2.bf16.msra.mxu0 %v2643
        %2678 = vmatprep.subr.bf16.mxu0 0
        %2679 = vmatpush2.bf16.msra.mxu0 %v2642
        %2680 = vmatprep.subr.bf16.mxu0 0
        %2681 = vmatpush2.bf16.msra.mxu0 %v2641
        %2682 = vmatprep.subr.bf16.mxu0 0
        %2683 = vmatpush2.bf16.msra.mxu0 %v2640
        %2684 = vmatprep.subr.bf16.mxu0 0
        %2685 = vmatpush2.bf16.msra.mxu0 %v2639
        %2686 = vmatprep.subr.bf16.mxu0 0
        %2687 = vmatpush2.bf16.msra.mxu0 %v2638
        %2688 = vmatprep.subr.bf16.mxu0 0
        %2689 = vmatpush2.bf16.msra.mxu0 %v2637
        %2690 = vmatprep.subr.bf16.mxu0 0
        %2691 = vmatpush2.bf16.msra.mxu0 %v2636
        %2692 = vmatprep.mubr.bf16.mxu0 %v2462
        %2693 = vmatmul.mubr.bf16.gmra.mxu0 %v2461
        %v2694 = vpop.f32.mrf.mxu0
        %v2695 = vadd.f32 %v2562, %v2694
        %v2696 = vpop.f32.mrf.mxu0
        %v2697 = vpop.f32.mrf.mxu0
        %v2698 = vadd.f32 %v2562, %v2697
        %v2699 = vpop.f32.mrf.mxu0
        %2700 = vmatprep.mubr.bf16.mxu0 %v2464
        %2701 = vmatmul.mubr.bf16.gmra.mxu0 %v2463
        %v2702 = vpop.f32.mrf.mxu0
        %v2703 = vadd.f32 %v2562, %v2702
        %v2704 = vpop.f32.mrf.mxu0
        %v2705 = vpop.f32.mrf.mxu0
        %v2706 = vadd.f32 %v2562, %v2705
        %v2707 = vpop.f32.mrf.mxu0
        %2708 = vmatprep.mubr.bf16.mxu0 %v2466
        %2709 = vmatmul.mubr.bf16.gmra.mxu0 %v2465
        %v2710 = vpop.f32.mrf.mxu0
        %v2711 = vadd.f32 %v2562, %v2710
        %v2712 = vpop.f32.mrf.mxu0
        %v2713 = vpop.f32.mrf.mxu0
        %v2714 = vadd.f32 %v2562, %v2713
        %v2715 = vpop.f32.mrf.mxu0
        %2716 = vmatprep.mubr.bf16.mxu0 %v2468
        %2717 = vmatmul.mubr.bf16.gmra.mxu0 %v2467
        %v2718 = vpop.f32.mrf.mxu0
        %v2719 = vadd.f32 %v2562, %v2718
        %v2720 = vpop.f32.mrf.mxu0
        %v2721 = vpop.f32.mrf.mxu0
        %v2722 = vadd.f32 %v2562, %v2721
        %v2723 = vpop.f32.mrf.mxu0
        %2724 = vmatprep.mubr.bf16.mxu0 %v2470
        %2725 = vmatmul.mubr.bf16.gmra.mxu0 %v2469
        %v2726 = vpop.f32.mrf.mxu0
        %v2727 = vadd.f32 %v2562, %v2726
        %v2728 = vpop.f32.mrf.mxu0
        %v2729 = vpop.f32.mrf.mxu0
        %v2730 = vadd.f32 %v2562, %v2729
        %v2731 = vpop.f32.mrf.mxu0
        %2732 = vmatprep.mubr.bf16.mxu0 %v2472
        %2733 = vmatmul.mubr.bf16.gmra.mxu0 %v2471
        %v2734 = vpop.f32.mrf.mxu0
        %v2735 = vadd.f32 %v2562, %v2734
        %v2736 = vpop.f32.mrf.mxu0
        %v2737 = vpop.f32.mrf.mxu0
        %v2738 = vadd.f32 %v2562, %v2737
        %v2739 = vpop.f32.mrf.mxu0
        %2740 = vmatprep.mubr.bf16.mxu0 %v2474
        %2741 = vmatmul.mubr.bf16.gmra.mxu0 %v2473
        %v2742 = vpop.f32.mrf.mxu0
        %v2743 = vadd.f32 %v2562, %v2742
        %v2744 = vpop.f32.mrf.mxu0
        %v2745 = vpop.f32.mrf.mxu0
        %v2746 = vadd.f32 %v2562, %v2745
        %v2747 = vpop.f32.mrf.mxu0
        %2748 = vmatprep.mubr.bf16.mxu0 %v2476
        %2749 = vmatmul.mubr.bf16.gmra.mxu0 %v2475
        %v2750 = vpop.f32.mrf.mxu0
        %v2751 = vadd.f32 %v2562, %v2750
        %v2752 = vpop.f32.mrf.mxu0
        %v2753 = vpop.f32.mrf.mxu0
        %v2754 = vadd.f32 %v2562, %v2753
        %v2755 = vpop.f32.mrf.mxu0
        %2756 = vmatprep.mubr.bf16.mxu0 %v2478
        %2757 = vmatmul.mubr.bf16.gmra.mxu0 %v2477
        %v2758 = vpop.f32.mrf.mxu0
        %v2759 = vadd.f32 %v2562, %v2758
        %v2760 = vpop.f32.mrf.mxu0
        %v2761 = vpop.f32.mrf.mxu0
        %v2762 = vadd.f32 %v2562, %v2761
        %v2763 = vpop.f32.mrf.mxu0
        %2764 = vmatprep.mubr.bf16.mxu0 %v2480
        %2765 = vmatmul.mubr.bf16.gmra.mxu0 %v2479
        %v2766 = vpop.f32.mrf.mxu0
        %v2767 = vadd.f32 %v2562, %v2766
        %v2768 = vpop.f32.mrf.mxu0
        %v2769 = vpop.f32.mrf.mxu0
        %v2770 = vadd.f32 %v2562, %v2769
        %v2771 = vpop.f32.mrf.mxu0
        %2772 = vmatprep.mubr.bf16.mxu0 %v2482
        %2773 = vmatmul.mubr.bf16.gmra.mxu0 %v2481
        %v2774 = vpop.f32.mrf.mxu0
        %v2775 = vadd.f32 %v2562, %v2774
        %v2776 = vpop.f32.mrf.mxu0
        %v2777 = vpop.f32.mrf.mxu0
        %v2778 = vadd.f32 %v2562, %v2777
        %v2779 = vpop.f32.mrf.mxu0
        %2780 = vmatprep.mubr.bf16.mxu0 %v2484
        %2781 = vmatmul.mubr.bf16.gmra.mxu0 %v2483
        %v2782 = vpop.f32.mrf.mxu0
        %v2783 = vadd.f32 %v2562, %v2782
        %v2784 = vpop.f32.mrf.mxu0
        %v2785 = vpop.f32.mrf.mxu0
        %v2786 = vadd.f32 %v2562, %v2785
        %v2787 = vpop.f32.mrf.mxu0
        %2788 = vmatprep.mubr.bf16.mxu0 %v2486
        %2789 = vmatmul.mubr.bf16.gmra.mxu0 %v2485
        %v2790 = vpop.f32.mrf.mxu0
        %v2791 = vadd.f32 %v2562, %v2790
        %v2792 = vpop.f32.mrf.mxu0
        %v2793 = vpop.f32.mrf.mxu0
        %v2794 = vadd.f32 %v2562, %v2793
        %v2795 = vpop.f32.mrf.mxu0
        %2796 = vmatprep.mubr.bf16.mxu0 %v2488
        %2797 = vmatmul.mubr.bf16.gmra.mxu0 %v2487
        %v2798 = vpop.f32.mrf.mxu0
        %v2799 = vadd.f32 %v2562, %v2798
        %v2800 = vpop.f32.mrf.mxu0
        %v2801 = vpop.f32.mrf.mxu0
        %v2802 = vadd.f32 %v2562, %v2801
        %v2803 = vpop.f32.mrf.mxu0
        %2804 = vmatprep.mubr.bf16.mxu0 %v2490
        %2805 = vmatmul.mubr.bf16.gmra.mxu0 %v2489
        %v2806 = vpop.f32.mrf.mxu0
        %v2807 = vadd.f32 %v2562, %v2806
        %v2808 = vpop.f32.mrf.mxu0
        %v2809 = vpop.f32.mrf.mxu0
        %v2810 = vadd.f32 %v2562, %v2809
        %v2811 = vpop.f32.mrf.mxu0
        %2812 = vmatprep.mubr.bf16.mxu0 %v2492
        %2813 = vmatmul.mubr.bf16.gmra.mxu0 %v2491
        %v2814 = vpop.f32.mrf.mxu0
        %v2815 = vadd.f32 %v2562, %v2814
        %v2816 = vpop.f32.mrf.mxu0
        %v2817 = vpop.f32.mrf.mxu0
        %v2818 = vadd.f32 %v2562, %v2817
        %v2819 = vpop.f32.mrf.mxu0
        %2820 = vmatprep.mubr.bf16.mxu0 %v2494
        %2821 = vmatmul.mubr.bf16.gmra.mxu0 %v2493
        %v2822 = vpop.f32.mrf.mxu0
        %v2823 = vadd.f32 %v2562, %v2822
        %v2824 = vpop.f32.mrf.mxu0
        %v2825 = vpop.f32.mrf.mxu0
        %v2826 = vadd.f32 %v2562, %v2825
        %v2827 = vpop.f32.mrf.mxu0
        %2828 = vmatprep.mubr.bf16.mxu0 %v2496
        %2829 = vmatmul.mubr.bf16.gmra.mxu0 %v2495
        %v2830 = vpop.f32.mrf.mxu0
        %v2831 = vadd.f32 %v2562, %v2830
        %v2832 = vpop.f32.mrf.mxu0
        %v2833 = vpop.f32.mrf.mxu0
        %v2834 = vadd.f32 %v2562, %v2833
        %v2835 = vpop.f32.mrf.mxu0
        %2836 = vmatprep.mubr.bf16.mxu0 %v2498
        %2837 = vmatmul.mubr.bf16.gmra.mxu0 %v2497
        %v2838 = vpop.f32.mrf.mxu0
        %v2839 = vadd.f32 %v2562, %v2838
        %v2840 = vpop.f32.mrf.mxu0
        %v2841 = vpop.f32.mrf.mxu0
        %v2842 = vadd.f32 %v2562, %v2841
        %v2843 = vpop.f32.mrf.mxu0
        %2844 = vmatprep.mubr.bf16.mxu0 %v2500
        %2845 = vmatmul.mubr.bf16.gmra.mxu0 %v2499
        %v2846 = vpop.f32.mrf.mxu0
        %v2847 = vadd.f32 %v2562, %v2846
        %v2848 = vpop.f32.mrf.mxu0
        %v2849 = vpop.f32.mrf.mxu0
        %v2850 = vadd.f32 %v2562, %v2849
        %v2851 = vpop.f32.mrf.mxu0
        %2852 = vmatprep.mubr.bf16.mxu0 %v2502
        %2853 = vmatmul.mubr.bf16.gmra.mxu0 %v2501
        %v2854 = vpop.f32.mrf.mxu0
        %v2855 = vadd.f32 %v2562, %v2854
        %v2856 = vpop.f32.mrf.mxu0
        %v2857 = vpop.f32.mrf.mxu0
        %v2858 = vadd.f32 %v2562, %v2857
        %v2859 = vpop.f32.mrf.mxu0
        %2860 = vmatprep.mubr.bf16.mxu0 %v2504
        %2861 = vmatmul.mubr.bf16.gmra.mxu0 %v2503
        %v2862 = vpop.f32.mrf.mxu0
        %v2863 = vadd.f32 %v2562, %v2862
        %v2864 = vpop.f32.mrf.mxu0
        %v2865 = vpop.f32.mrf.mxu0
        %v2866 = vadd.f32 %v2562, %v2865
        %v2867 = vpop.f32.mrf.mxu0
        %2868 = vmatprep.mubr.bf16.mxu0 %v2506
        %2869 = vmatmul.mubr.bf16.gmra.mxu0 %v2505
        %v2870 = vpop.f32.mrf.mxu0
        %v2871 = vadd.f32 %v2562, %v2870
        %v2872 = vpop.f32.mrf.mxu0
        %v2873 = vpop.f32.mrf.mxu0
        %v2874 = vadd.f32 %v2562, %v2873
        %v2875 = vpop.f32.mrf.mxu0
        %2876 = vmatprep.mubr.bf16.mxu0 %v2508
        %2877 = vmatmul.mubr.bf16.gmra.mxu0 %v2507
        %v2878 = vpop.f32.mrf.mxu0
        %v2879 = vadd.f32 %v2562, %v2878
        %v2880 = vpop.f32.mrf.mxu0
        %v2881 = vpop.f32.mrf.mxu0
        %v2882 = vadd.f32 %v2562, %v2881
        %v2883 = vpop.f32.mrf.mxu0
        %2884 = vmatprep.mubr.bf16.mxu0 %v2510
        %2885 = vmatmul.mubr.bf16.gmra.mxu0 %v2509
        %v2886 = vpop.f32.mrf.mxu0
        %v2887 = vadd.f32 %v2562, %v2886
        %v2888 = vpop.f32.mrf.mxu0
        %v2889 = vpop.f32.mrf.mxu0
        %v2890 = vadd.f32 %v2562, %v2889
        %v2891 = vpop.f32.mrf.mxu0
        %2892 = vmatprep.mubr.bf16.mxu0 %v2512
        %2893 = vmatmul.mubr.bf16.gmra.mxu0 %v2511
        %v2894 = vpop.f32.mrf.mxu0
        %v2895 = vadd.f32 %v2562, %v2894
        %v2896 = vpop.f32.mrf.mxu0
        %v2897 = vpop.f32.mrf.mxu0
        %v2898 = vadd.f32 %v2562, %v2897
        %v2899 = vpop.f32.mrf.mxu0
        %2900 = vmatprep.mubr.bf16.mxu0 %v2514
        %2901 = vmatmul.mubr.bf16.gmra.mxu0 %v2513
        %v2902 = vpop.f32.mrf.mxu0
        %v2903 = vadd.f32 %v2562, %v2902
        %v2904 = vpop.f32.mrf.mxu0
        %v2905 = vpop.f32.mrf.mxu0
        %v2906 = vadd.f32 %v2562, %v2905
        %v2907 = vpop.f32.mrf.mxu0
        %2908 = vmatprep.mubr.bf16.mxu0 %v2516
        %2909 = vmatmul.mubr.bf16.gmra.mxu0 %v2515
        %v2910 = vpop.f32.mrf.mxu0
        %v2911 = vadd.f32 %v2562, %v2910
        %v2912 = vpop.f32.mrf.mxu0
        %v2913 = vpop.f32.mrf.mxu0
        %v2914 = vadd.f32 %v2562, %v2913
        %v2915 = vpop.f32.mrf.mxu0
        %2916 = vmatprep.mubr.bf16.mxu0 %v2518
        %2917 = vmatmul.mubr.bf16.gmra.mxu0 %v2517
        %v2918 = vpop.f32.mrf.mxu0
        %v2919 = vadd.f32 %v2562, %v2918
        %v2920 = vpop.f32.mrf.mxu0
        %v2921 = vpop.f32.mrf.mxu0
        %v2922 = vadd.f32 %v2562, %v2921
        %v2923 = vpop.f32.mrf.mxu0
        %2924 = vmatprep.mubr.bf16.mxu0 %v2520
        %2925 = vmatmul.mubr.bf16.gmra.mxu0 %v2519
        %v2926 = vpop.f32.mrf.mxu0
        %v2927 = vadd.f32 %v2562, %v2926
        %v2928 = vpop.f32.mrf.mxu0
        %v2929 = vpop.f32.mrf.mxu0
        %v2930 = vadd.f32 %v2562, %v2929
        %v2931 = vpop.f32.mrf.mxu0
        %2932 = vmatprep.mubr.bf16.mxu0 %v2522
        %2933 = vmatmul.mubr.bf16.gmra.mxu0 %v2521
        %v2934 = vpop.f32.mrf.mxu0
        %v2935 = vadd.f32 %v2562, %v2934
        %v2936 = vpop.f32.mrf.mxu0
        %v2937 = vpop.f32.mrf.mxu0
        %v2938 = vadd.f32 %v2562, %v2937
        %v2939 = vpop.f32.mrf.mxu0
        %2940 = vmatprep.mubr.bf16.mxu0 %v2524
        %2941 = vmatmul.mubr.bf16.gmra.mxu0 %v2523
        %v2942 = vpop.f32.mrf.mxu0
        %v2943 = vadd.f32 %v2562, %v2942
        %v2944 = vpop.f32.mrf.mxu0
        %v2945 = vpop.f32.mrf.mxu0
        %v2946 = vadd.f32 %v2562, %v2945
        %v2947 = vpop.f32.mrf.mxu0
        %2948 = vdwg.mxu0
        %v2949 = vmax.f32 %v2695, 0.0
        %v2950 = vmax.f32 %v2698, 0.0
        %v2951 = vmax.f32 %v2703, 0.0
        %v2952 = vmax.f32 %v2706, 0.0
        %v2953 = vmax.f32 %v2711, 0.0
        %v2954 = vmax.f32 %v2714, 0.0
        %v2955 = vmax.f32 %v2719, 0.0
        %v2956 = vmax.f32 %v2722, 0.0
        %v2957 = vmax.f32 %v2727, 0.0
        %v2958 = vmax.f32 %v2730, 0.0
        %v2959 = vmax.f32 %v2735, 0.0
        %v2960 = vmax.f32 %v2738, 0.0
        %v2961 = vmax.f32 %v2743, 0.0
        %v2962 = vmax.f32 %v2746, 0.0
        %v2963 = vmax.f32 %v2751, 0.0
        %v2964 = vmax.f32 %v2754, 0.0
        %v2965 = vmax.f32 %v2759, 0.0
        %v2966 = vmax.f32 %v2762, 0.0
        %v2967 = vmax.f32 %v2767, 0.0
        %v2968 = vmax.f32 %v2770, 0.0
        %v2969 = vmax.f32 %v2775, 0.0
        %v2970 = vmax.f32 %v2778, 0.0
        %v2971 = vmax.f32 %v2783, 0.0
        %v2972 = vmax.f32 %v2786, 0.0
        %v2973 = vmax.f32 %v2791, 0.0
        %v2974 = vmax.f32 %v2794, 0.0
        %v2975 = vmax.f32 %v2799, 0.0
        %v2976 = vmax.f32 %v2802, 0.0
        %v2977 = vmax.f32 %v2807, 0.0
        %v2978 = vmax.f32 %v2810, 0.0
        %v2979 = vmax.f32 %v2815, 0.0
        %v2980 = vmax.f32 %v2818, 0.0
        %v2981 = vmax.f32 %v2823, 0.0
        %v2982 = vmax.f32 %v2826, 0.0
        %v2983 = vmax.f32 %v2831, 0.0
        %v2984 = vmax.f32 %v2834, 0.0
        %v2985 = vmax.f32 %v2839, 0.0
        %v2986 = vmax.f32 %v2842, 0.0
        %v2987 = vmax.f32 %v2847, 0.0
        %v2988 = vmax.f32 %v2850, 0.0
        %v2989 = vmax.f32 %v2855, 0.0
        %v2990 = vmax.f32 %v2858, 0.0
        %v2991 = vmax.f32 %v2863, 0.0
        %v2992 = vmax.f32 %v2866, 0.0
        %v2993 = vmax.f32 %v2871, 0.0
        %v2994 = vmax.f32 %v2874, 0.0
        %v2995 = vmax.f32 %v2879, 0.0
        %v2996 = vmax.f32 %v2882, 0.0
        %v2997 = vmax.f32 %v2887, 0.0
        %v2998 = vmax.f32 %v2890, 0.0
        %v2999 = vmax.f32 %v2895, 0.0
        %v3000 = vmax.f32 %v2898, 0.0
        %v3001 = vmax.f32 %v2903, 0.0
        %v3002 = vmax.f32 %v2906, 0.0
        %v3003 = vmax.f32 %v2911, 0.0
        %v3004 = vmax.f32 %v2914, 0.0
        %v3005 = vmax.f32 %v2919, 0.0
        %v3006 = vmax.f32 %v2922, 0.0
        %v3007 = vmax.f32 %v2927, 0.0
        %v3008 = vmax.f32 %v2930, 0.0
        %v3009 = vmax.f32 %v2935, 0.0
        %v3010 = vmax.f32 %v2938, 0.0
        %v3011 = vmax.f32 %v2943, 0.0
        %v3012 = vmax.f32 %v2946, 0.0
        %v3013 = vpack.c.bf16 %v2950, %v2949
        %v3014 = vpack.c.bf16 %v2952, %v2951
        %v3015 = vpack.c.bf16 %v2954, %v2953
        %v3016 = vpack.c.bf16 %v2956, %v2955
        %v3017 = vpack.c.bf16 %v2958, %v2957
        %v3018 = vpack.c.bf16 %v2960, %v2959
        %v3019 = vpack.c.bf16 %v2962, %v2961
        %v3020 = vpack.c.bf16 %v2964, %v2963
        %v3021 = vpack.c.bf16 %v2966, %v2965
        %v3022 = vpack.c.bf16 %v2968, %v2967
        %v3023 = vpack.c.bf16 %v2970, %v2969
        %v3024 = vpack.c.bf16 %v2972, %v2971
        %v3025 = vpack.c.bf16 %v2974, %v2973
        %v3026 = vpack.c.bf16 %v2976, %v2975
        %v3027 = vpack.c.bf16 %v2978, %v2977
        %v3028 = vpack.c.bf16 %v2980, %v2979
        %v3029 = vpack.c.bf16 %v2982, %v2981
        %v3030 = vpack.c.bf16 %v2984, %v2983
        %v3031 = vpack.c.bf16 %v2986, %v2985
        %v3032 = vpack.c.bf16 %v2988, %v2987
        %v3033 = vpack.c.bf16 %v2990, %v2989
        %v3034 = vpack.c.bf16 %v2992, %v2991
        %v3035 = vpack.c.bf16 %v2994, %v2993
        %v3036 = vpack.c.bf16 %v2996, %v2995
        %v3037 = vpack.c.bf16 %v2998, %v2997
        %v3038 = vpack.c.bf16 %v3000, %v2999
        %v3039 = vpack.c.bf16 %v3002, %v3001
        %v3040 = vpack.c.bf16 %v3004, %v3003
        %v3041 = vpack.c.bf16 %v3006, %v3005
        %v3042 = vpack.c.bf16 %v3008, %v3007
        %v3043 = vpack.c.bf16 %v3010, %v3009
        %v3044 = vpack.c.bf16 %v3012, %v3011
        %v3045 = vld [vmem:[#allocation11] sm:$0xff]
        %v3046 = vld [vmem:[#allocation11 + $0x8] sm:$0xff]
        %v3047 = vld [vmem:[#allocation11 + $0x10] sm:$0xff]
        %v3048 = vld [vmem:[#allocation11 + $0x18] sm:$0xff]
        %v3049 = vld [vmem:[#allocation11 + $0x20] sm:$0xff]
        %v3050 = vld [vmem:[#allocation11 + $0x28] sm:$0xff]
        %v3051 = vld [vmem:[#allocation11 + $0x30] sm:$0xff]
        %v3052 = vld [vmem:[#allocation11 + $0x38] sm:$0xff]
        %v3053 = vld [vmem:[#allocation11 + $0x40] sm:$0xff]
        %v3054 = vld [vmem:[#allocation11 + $0x48] sm:$0xff]
        %v3055 = vld [vmem:[#allocation11 + $0x50] sm:$0xff]
        %v3056 = vld [vmem:[#allocation11 + $0x58] sm:$0xff]
        %v3057 = vld [vmem:[#allocation11 + $0x60] sm:$0xff]
        %v3058 = vld [vmem:[#allocation11 + $0x68] sm:$0xff]
        %v3059 = vld [vmem:[#allocation11 + $0x70] sm:$0xff]
        %v3060 = vld [vmem:[#allocation11 + $0x78] sm:$0xff]
        %v3061 = vld [vmem:[#allocation13] sm:$0x3]
        %v3063 = vlaneseq
        %v3064 = vshrl.u32 %v3063, 7
        %v3065 = vsub.s32 0, %v3064
        %v3066 = vrot.slane %v3061, %v3065
        %v3067 = vlaneseq
        %v3068 = vshrl.u32 %v3067, 7
        %v3069 = vsub.s32 1, %v3068
        %v3070 = vrot.slane %v3061, %v3069
        %v3089 = vunpack.c.l.b16 %v3045
        %v3090 = vunpack.c.h.b16 %v3045
        %v3091 = vunpack.c.l.b16 %v3046
        %v3092 = vunpack.c.h.b16 %v3046
        %v3093 = vunpack.c.l.b16 %v3047
        %v3094 = vunpack.c.h.b16 %v3047
        %v3095 = vunpack.c.l.b16 %v3048
        %v3096 = vunpack.c.h.b16 %v3048
        %v3097 = vunpack.c.l.b16 %v3049
        %v3098 = vunpack.c.h.b16 %v3049
        %v3099 = vunpack.c.l.b16 %v3050
        %v3100 = vunpack.c.h.b16 %v3050
        %v3101 = vunpack.c.l.b16 %v3051
        %v3102 = vunpack.c.h.b16 %v3051
        %v3103 = vunpack.c.l.b16 %v3052
        %v3104 = vunpack.c.h.b16 %v3052
        %v3105 = vunpack.c.l.b16 %v3053
        %v3106 = vunpack.c.h.b16 %v3053
        %v3107 = vunpack.c.l.b16 %v3054
        %v3108 = vunpack.c.h.b16 %v3054
        %v3109 = vunpack.c.l.b16 %v3055
        %v3110 = vunpack.c.h.b16 %v3055
        %v3111 = vunpack.c.l.b16 %v3056
        %v3112 = vunpack.c.h.b16 %v3056
        %v3113 = vunpack.c.l.b16 %v3057
        %v3114 = vunpack.c.h.b16 %v3057
        %v3115 = vunpack.c.l.b16 %v3058
        %v3116 = vunpack.c.h.b16 %v3058
        %v3117 = vunpack.c.l.b16 %v3059
        %v3118 = vunpack.c.h.b16 %v3059
        %v3119 = vunpack.c.l.b16 %v3060
        %v3120 = vunpack.c.h.b16 %v3060
        %v3121 = vpack.c.b16 %v3091, %v3089
        %v3122 = vpack.c.b16 %v3092, %v3090
        %v3123 = vpack.c.b16 %v3095, %v3093
        %v3124 = vpack.c.b16 %v3096, %v3094
        %v3125 = vpack.c.b16 %v3099, %v3097
        %v3126 = vpack.c.b16 %v3100, %v3098
        %v3127 = vpack.c.b16 %v3103, %v3101
        %v3128 = vpack.c.b16 %v3104, %v3102
        %v3129 = vpack.c.b16 %v3107, %v3105
        %v3130 = vpack.c.b16 %v3108, %v3106
        %v3131 = vpack.c.b16 %v3111, %v3109
        %v3132 = vpack.c.b16 %v3112, %v3110
        %v3133 = vpack.c.b16 %v3115, %v3113
        %v3134 = vpack.c.b16 %v3116, %v3114
        %v3135 = vpack.c.b16 %v3119, %v3117
        %v3136 = vpack.c.b16 %v3120, %v3118
        %3153 = vmatprep.subr.bf16.mxu0 %v3136
        %3154 = vmatpush1.bf16.msra.mxu0 %v3135
        %3155 = vmatprep.subr.bf16.mxu0 %v3134
        %3156 = vmatpush1.bf16.msra.mxu0 %v3133
        %3157 = vmatprep.subr.bf16.mxu0 %v3132
        %3158 = vmatpush1.bf16.msra.mxu0 %v3131
        %3159 = vmatprep.subr.bf16.mxu0 %v3130
        %3160 = vmatpush1.bf16.msra.mxu0 %v3129
        %3161 = vmatprep.subr.bf16.mxu0 %v3128
        %3162 = vmatpush1.bf16.msra.mxu0 %v3127
        %3163 = vmatprep.subr.bf16.mxu0 %v3126
        %3164 = vmatpush1.bf16.msra.mxu0 %v3125
        %3165 = vmatprep.subr.bf16.mxu0 %v3124
        %3166 = vmatpush1.bf16.msra.mxu0 %v3123
        %3167 = vmatprep.subr.bf16.mxu0 %v3122
        %3168 = vmatpush1.bf16.msra.mxu0 %v3121
        %3169 = vmatprep.subr.bf16.mxu0 0
        %3170 = vmatpush2.bf16.msra.mxu0 0
        %3171 = vmatprep.subr.bf16.mxu0 0
        %3172 = vmatpush2.bf16.msra.mxu0 0
        %3173 = vmatprep.subr.bf16.mxu0 0
        %3174 = vmatpush2.bf16.msra.mxu0 0
        %3175 = vmatprep.subr.bf16.mxu0 0
        %3176 = vmatpush2.bf16.msra.mxu0 0
        %3177 = vmatprep.subr.bf16.mxu0 0
        %3178 = vmatpush2.bf16.msra.mxu0 0
        %3179 = vmatprep.subr.bf16.mxu0 0
        %3180 = vmatpush2.bf16.msra.mxu0 0
        %3181 = vmatprep.subr.bf16.mxu0 0
        %3182 = vmatpush2.bf16.msra.mxu0 0
        %3183 = vmatprep.subr.bf16.mxu0 0
        %3184 = vmatpush2.bf16.msra.mxu0 0
        %3185 = vmatprep.mubr.bf16.mxu0 0
        %3186 = vmatmul.mubr.bf16.gmra.mxu0 %v3013
        %v3187 = vpop.f32.mrf.mxu0
        %v3188 = vadd.f32 %v3066, %v3187
        %v3189 = vpop.f32.mrf.mxu0
        %v3190 = vadd.f32 %v3070, %v3189
        %v3191 = vpop.f32.mrf.mxu0
        %v3192 = vadd.f32 %v3066, %v3191
        %v3193 = vpop.f32.mrf.mxu0
        %v3194 = vadd.f32 %v3070, %v3193
        %3195 = vmatprep.mubr.bf16.mxu0 0
        %3196 = vmatmul.mubr.bf16.gmra.mxu0 %v3014
        %v3197 = vpop.f32.mrf.mxu0
        %v3198 = vadd.f32 %v3066, %v3197
        %v3199 = vpop.f32.mrf.mxu0
        %v3200 = vadd.f32 %v3070, %v3199
        %v3201 = vpop.f32.mrf.mxu0
        %v3202 = vadd.f32 %v3066, %v3201
        %v3203 = vpop.f32.mrf.mxu0
        %v3204 = vadd.f32 %v3070, %v3203
        %3205 = vmatprep.mubr.bf16.mxu0 0
        %3206 = vmatmul.mubr.bf16.gmra.mxu0 %v3015
        %v3207 = vpop.f32.mrf.mxu0
        %v3208 = vadd.f32 %v3066, %v3207
        %v3209 = vpop.f32.mrf.mxu0
        %v3210 = vadd.f32 %v3070, %v3209
        %v3211 = vpop.f32.mrf.mxu0
        %v3212 = vadd.f32 %v3066, %v3211
        %v3213 = vpop.f32.mrf.mxu0
        %v3214 = vadd.f32 %v3070, %v3213
        %3215 = vmatprep.mubr.bf16.mxu0 0
        %3216 = vmatmul.mubr.bf16.gmra.mxu0 %v3016
        %v3217 = vpop.f32.mrf.mxu0
        %v3218 = vadd.f32 %v3066, %v3217
        %v3219 = vpop.f32.mrf.mxu0
        %v3220 = vadd.f32 %v3070, %v3219
        %v3221 = vpop.f32.mrf.mxu0
        %v3222 = vadd.f32 %v3066, %v3221
        %v3223 = vpop.f32.mrf.mxu0
        %v3224 = vadd.f32 %v3070, %v3223
        %3225 = vmatprep.mubr.bf16.mxu0 0
        %3226 = vmatmul.mubr.bf16.gmra.mxu0 %v3017
        %v3227 = vpop.f32.mrf.mxu0
        %v3228 = vadd.f32 %v3066, %v3227
        %v3229 = vpop.f32.mrf.mxu0
        %v3230 = vadd.f32 %v3070, %v3229
        %v3231 = vpop.f32.mrf.mxu0
        %v3232 = vadd.f32 %v3066, %v3231
        %v3233 = vpop.f32.mrf.mxu0
        %v3234 = vadd.f32 %v3070, %v3233
        %3235 = vmatprep.mubr.bf16.mxu0 0
        %3236 = vmatmul.mubr.bf16.gmra.mxu0 %v3018
        %v3237 = vpop.f32.mrf.mxu0
        %v3238 = vadd.f32 %v3066, %v3237
        %v3239 = vpop.f32.mrf.mxu0
        %v3240 = vadd.f32 %v3070, %v3239
        %v3241 = vpop.f32.mrf.mxu0
        %v3242 = vadd.f32 %v3066, %v3241
        %v3243 = vpop.f32.mrf.mxu0
        %v3244 = vadd.f32 %v3070, %v3243
        %3245 = vmatprep.mubr.bf16.mxu0 0
        %3246 = vmatmul.mubr.bf16.gmra.mxu0 %v3019
        %v3247 = vpop.f32.mrf.mxu0
        %v3248 = vadd.f32 %v3066, %v3247
        %v3249 = vpop.f32.mrf.mxu0
        %v3250 = vadd.f32 %v3070, %v3249
        %v3251 = vpop.f32.mrf.mxu0
        %v3252 = vadd.f32 %v3066, %v3251
        %v3253 = vpop.f32.mrf.mxu0
        %v3254 = vadd.f32 %v3070, %v3253
        %3255 = vmatprep.mubr.bf16.mxu0 0
        %3256 = vmatmul.mubr.bf16.gmra.mxu0 %v3020
        %v3257 = vpop.f32.mrf.mxu0
        %v3258 = vadd.f32 %v3066, %v3257
        %v3259 = vpop.f32.mrf.mxu0
        %v3260 = vadd.f32 %v3070, %v3259
        %v3261 = vpop.f32.mrf.mxu0
        %v3262 = vadd.f32 %v3066, %v3261
        %v3263 = vpop.f32.mrf.mxu0
        %v3264 = vadd.f32 %v3070, %v3263
        %3265 = vmatprep.mubr.bf16.mxu0 0
        %3266 = vmatmul.mubr.bf16.gmra.mxu0 %v3021
        %v3267 = vpop.f32.mrf.mxu0
        %v3268 = vadd.f32 %v3066, %v3267
        %v3269 = vpop.f32.mrf.mxu0
        %v3270 = vadd.f32 %v3070, %v3269
        %v3271 = vpop.f32.mrf.mxu0
        %v3272 = vadd.f32 %v3066, %v3271
        %v3273 = vpop.f32.mrf.mxu0
        %v3274 = vadd.f32 %v3070, %v3273
        %3275 = vmatprep.mubr.bf16.mxu0 0
        %3276 = vmatmul.mubr.bf16.gmra.mxu0 %v3022
        %v3277 = vpop.f32.mrf.mxu0
        %v3278 = vadd.f32 %v3066, %v3277
        %v3279 = vpop.f32.mrf.mxu0
        %v3280 = vadd.f32 %v3070, %v3279
        %v3281 = vpop.f32.mrf.mxu0
        %v3282 = vadd.f32 %v3066, %v3281
        %v3283 = vpop.f32.mrf.mxu0
        %v3284 = vadd.f32 %v3070, %v3283
        %3285 = vmatprep.mubr.bf16.mxu0 0
        %3286 = vmatmul.mubr.bf16.gmra.mxu0 %v3023
        %v3287 = vpop.f32.mrf.mxu0
        %v3288 = vadd.f32 %v3066, %v3287
        %v3289 = vpop.f32.mrf.mxu0
        %v3290 = vadd.f32 %v3070, %v3289
        %v3291 = vpop.f32.mrf.mxu0
        %v3292 = vadd.f32 %v3066, %v3291
        %v3293 = vpop.f32.mrf.mxu0
        %v3294 = vadd.f32 %v3070, %v3293
        %3295 = vmatprep.mubr.bf16.mxu0 0
        %3296 = vmatmul.mubr.bf16.gmra.mxu0 %v3024
        %v3297 = vpop.f32.mrf.mxu0
        %v3298 = vadd.f32 %v3066, %v3297
        %v3299 = vpop.f32.mrf.mxu0
        %v3300 = vadd.f32 %v3070, %v3299
        %v3301 = vpop.f32.mrf.mxu0
        %v3302 = vadd.f32 %v3066, %v3301
        %v3303 = vpop.f32.mrf.mxu0
        %v3304 = vadd.f32 %v3070, %v3303
        %3305 = vmatprep.mubr.bf16.mxu0 0
        %3306 = vmatmul.mubr.bf16.gmra.mxu0 %v3025
        %v3307 = vpop.f32.mrf.mxu0
        %v3308 = vadd.f32 %v3066, %v3307
        %v3309 = vpop.f32.mrf.mxu0
        %v3310 = vadd.f32 %v3070, %v3309
        %v3311 = vpop.f32.mrf.mxu0
        %v3312 = vadd.f32 %v3066, %v3311
        %v3313 = vpop.f32.mrf.mxu0
        %v3314 = vadd.f32 %v3070, %v3313
        %3315 = vmatprep.mubr.bf16.mxu0 0
        %3316 = vmatmul.mubr.bf16.gmra.mxu0 %v3026
        %v3317 = vpop.f32.mrf.mxu0
        %v3318 = vadd.f32 %v3066, %v3317
        %v3319 = vpop.f32.mrf.mxu0
        %v3320 = vadd.f32 %v3070, %v3319
        %v3321 = vpop.f32.mrf.mxu0
        %v3322 = vadd.f32 %v3066, %v3321
        %v3323 = vpop.f32.mrf.mxu0
        %v3324 = vadd.f32 %v3070, %v3323
        %3325 = vmatprep.mubr.bf16.mxu0 0
        %3326 = vmatmul.mubr.bf16.gmra.mxu0 %v3027
        %v3327 = vpop.f32.mrf.mxu0
        %v3328 = vadd.f32 %v3066, %v3327
        %v3329 = vpop.f32.mrf.mxu0
        %v3330 = vadd.f32 %v3070, %v3329
        %v3331 = vpop.f32.mrf.mxu0
        %v3332 = vadd.f32 %v3066, %v3331
        %v3333 = vpop.f32.mrf.mxu0
        %v3334 = vadd.f32 %v3070, %v3333
        %3335 = vmatprep.mubr.bf16.mxu0 0
        %3336 = vmatmul.mubr.bf16.gmra.mxu0 %v3028
        %v3337 = vpop.f32.mrf.mxu0
        %v3338 = vadd.f32 %v3066, %v3337
        %v3339 = vpop.f32.mrf.mxu0
        %v3340 = vadd.f32 %v3070, %v3339
        %v3341 = vpop.f32.mrf.mxu0
        %v3342 = vadd.f32 %v3066, %v3341
        %v3343 = vpop.f32.mrf.mxu0
        %v3344 = vadd.f32 %v3070, %v3343
        %3345 = vmatprep.mubr.bf16.mxu0 0
        %3346 = vmatmul.mubr.bf16.gmra.mxu0 %v3029
        %v3347 = vpop.f32.mrf.mxu0
        %v3348 = vadd.f32 %v3066, %v3347
        %v3349 = vpop.f32.mrf.mxu0
        %v3350 = vadd.f32 %v3070, %v3349
        %v3351 = vpop.f32.mrf.mxu0
        %v3352 = vadd.f32 %v3066, %v3351
        %v3353 = vpop.f32.mrf.mxu0
        %v3354 = vadd.f32 %v3070, %v3353
        %3355 = vmatprep.mubr.bf16.mxu0 0
        %3356 = vmatmul.mubr.bf16.gmra.mxu0 %v3030
        %v3357 = vpop.f32.mrf.mxu0
        %v3358 = vadd.f32 %v3066, %v3357
        %v3359 = vpop.f32.mrf.mxu0
        %v3360 = vadd.f32 %v3070, %v3359
        %v3361 = vpop.f32.mrf.mxu0
        %v3362 = vadd.f32 %v3066, %v3361
        %v3363 = vpop.f32.mrf.mxu0
        %v3364 = vadd.f32 %v3070, %v3363
        %3365 = vmatprep.mubr.bf16.mxu0 0
        %3366 = vmatmul.mubr.bf16.gmra.mxu0 %v3031
        %v3367 = vpop.f32.mrf.mxu0
        %v3368 = vadd.f32 %v3066, %v3367
        %v3369 = vpop.f32.mrf.mxu0
        %v3370 = vadd.f32 %v3070, %v3369
        %v3371 = vpop.f32.mrf.mxu0
        %v3372 = vadd.f32 %v3066, %v3371
        %v3373 = vpop.f32.mrf.mxu0
        %v3374 = vadd.f32 %v3070, %v3373
        %3375 = vmatprep.mubr.bf16.mxu0 0
        %3376 = vmatmul.mubr.bf16.gmra.mxu0 %v3032
        %v3377 = vpop.f32.mrf.mxu0
        %v3378 = vadd.f32 %v3066, %v3377
        %v3379 = vpop.f32.mrf.mxu0
        %v3380 = vadd.f32 %v3070, %v3379
        %v3381 = vpop.f32.mrf.mxu0
        %v3382 = vadd.f32 %v3066, %v3381
        %v3383 = vpop.f32.mrf.mxu0
        %v3384 = vadd.f32 %v3070, %v3383
        %3385 = vmatprep.mubr.bf16.mxu0 0
        %3386 = vmatmul.mubr.bf16.gmra.mxu0 %v3033
        %v3387 = vpop.f32.mrf.mxu0
        %v3388 = vadd.f32 %v3066, %v3387
        %v3389 = vpop.f32.mrf.mxu0
        %v3390 = vadd.f32 %v3070, %v3389
        %v3391 = vpop.f32.mrf.mxu0
        %v3392 = vadd.f32 %v3066, %v3391
        %v3393 = vpop.f32.mrf.mxu0
        %v3394 = vadd.f32 %v3070, %v3393
        %3395 = vmatprep.mubr.bf16.mxu0 0
        %3396 = vmatmul.mubr.bf16.gmra.mxu0 %v3034
        %v3397 = vpop.f32.mrf.mxu0
        %v3398 = vadd.f32 %v3066, %v3397
        %v3399 = vpop.f32.mrf.mxu0
        %v3400 = vadd.f32 %v3070, %v3399
        %v3401 = vpop.f32.mrf.mxu0
        %v3402 = vadd.f32 %v3066, %v3401
        %v3403 = vpop.f32.mrf.mxu0
        %v3404 = vadd.f32 %v3070, %v3403
        %3405 = vmatprep.mubr.bf16.mxu0 0
        %3406 = vmatmul.mubr.bf16.gmra.mxu0 %v3035
        %v3407 = vpop.f32.mrf.mxu0
        %v3408 = vadd.f32 %v3066, %v3407
        %v3409 = vpop.f32.mrf.mxu0
        %v3410 = vadd.f32 %v3070, %v3409
        %v3411 = vpop.f32.mrf.mxu0
        %v3412 = vadd.f32 %v3066, %v3411
        %v3413 = vpop.f32.mrf.mxu0
        %v3414 = vadd.f32 %v3070, %v3413
        %3415 = vmatprep.mubr.bf16.mxu0 0
        %3416 = vmatmul.mubr.bf16.gmra.mxu0 %v3036
        %v3417 = vpop.f32.mrf.mxu0
        %v3418 = vadd.f32 %v3066, %v3417
        %v3419 = vpop.f32.mrf.mxu0
        %v3420 = vadd.f32 %v3070, %v3419
        %v3421 = vpop.f32.mrf.mxu0
        %v3422 = vadd.f32 %v3066, %v3421
        %v3423 = vpop.f32.mrf.mxu0
        %v3424 = vadd.f32 %v3070, %v3423
        %3425 = vmatprep.mubr.bf16.mxu0 0
        %3426 = vmatmul.mubr.bf16.gmra.mxu0 %v3037
        %v3427 = vpop.f32.mrf.mxu0
        %v3428 = vadd.f32 %v3066, %v3427
        %v3429 = vpop.f32.mrf.mxu0
        %v3430 = vadd.f32 %v3070, %v3429
        %v3431 = vpop.f32.mrf.mxu0
        %v3432 = vadd.f32 %v3066, %v3431
        %v3433 = vpop.f32.mrf.mxu0
        %v3434 = vadd.f32 %v3070, %v3433
        %3435 = vmatprep.mubr.bf16.mxu0 0
        %3436 = vmatmul.mubr.bf16.gmra.mxu0 %v3038
        %v3437 = vpop.f32.mrf.mxu0
        %v3438 = vadd.f32 %v3066, %v3437
        %v3439 = vpop.f32.mrf.mxu0
        %v3440 = vadd.f32 %v3070, %v3439
        %v3441 = vpop.f32.mrf.mxu0
        %v3442 = vadd.f32 %v3066, %v3441
        %v3443 = vpop.f32.mrf.mxu0
        %v3444 = vadd.f32 %v3070, %v3443
        %3445 = vmatprep.mubr.bf16.mxu0 0
        %3446 = vmatmul.mubr.bf16.gmra.mxu0 %v3039
        %v3447 = vpop.f32.mrf.mxu0
        %v3448 = vadd.f32 %v3066, %v3447
        %v3449 = vpop.f32.mrf.mxu0
        %v3450 = vadd.f32 %v3070, %v3449
        %v3451 = vpop.f32.mrf.mxu0
        %v3452 = vadd.f32 %v3066, %v3451
        %v3453 = vpop.f32.mrf.mxu0
        %v3454 = vadd.f32 %v3070, %v3453
        %3455 = vmatprep.mubr.bf16.mxu0 0
        %3456 = vmatmul.mubr.bf16.gmra.mxu0 %v3040
        %v3457 = vpop.f32.mrf.mxu0
        %v3458 = vadd.f32 %v3066, %v3457
        %v3459 = vpop.f32.mrf.mxu0
        %v3460 = vadd.f32 %v3070, %v3459
        %v3461 = vpop.f32.mrf.mxu0
        %v3462 = vadd.f32 %v3066, %v3461
        %v3463 = vpop.f32.mrf.mxu0
        %v3464 = vadd.f32 %v3070, %v3463
        %3465 = vmatprep.mubr.bf16.mxu0 0
        %3466 = vmatmul.mubr.bf16.gmra.mxu0 %v3041
        %v3467 = vpop.f32.mrf.mxu0
        %v3468 = vadd.f32 %v3066, %v3467
        %v3469 = vpop.f32.mrf.mxu0
        %v3470 = vadd.f32 %v3070, %v3469
        %v3471 = vpop.f32.mrf.mxu0
        %v3472 = vadd.f32 %v3066, %v3471
        %v3473 = vpop.f32.mrf.mxu0
        %v3474 = vadd.f32 %v3070, %v3473
        %3475 = vmatprep.mubr.bf16.mxu0 0
        %3476 = vmatmul.mubr.bf16.gmra.mxu0 %v3042
        %v3477 = vpop.f32.mrf.mxu0
        %v3478 = vadd.f32 %v3066, %v3477
        %v3479 = vpop.f32.mrf.mxu0
        %v3480 = vadd.f32 %v3070, %v3479
        %v3481 = vpop.f32.mrf.mxu0
        %v3482 = vadd.f32 %v3066, %v3481
        %v3483 = vpop.f32.mrf.mxu0
        %v3484 = vadd.f32 %v3070, %v3483
        %3485 = vmatprep.mubr.bf16.mxu0 0
        %3486 = vmatmul.mubr.bf16.gmra.mxu0 %v3043
        %v3487 = vpop.f32.mrf.mxu0
        %v3488 = vadd.f32 %v3066, %v3487
        %v3489 = vpop.f32.mrf.mxu0
        %v3490 = vadd.f32 %v3070, %v3489
        %v3491 = vpop.f32.mrf.mxu0
        %v3492 = vadd.f32 %v3066, %v3491
        %v3493 = vpop.f32.mrf.mxu0
        %v3494 = vadd.f32 %v3070, %v3493
        %3495 = vmatprep.mubr.bf16.mxu0 0
        %3496 = vmatmul.mubr.bf16.gmra.mxu0 %v3044
        %v3497 = vpop.f32.mrf.mxu0
        %v3498 = vadd.f32 %v3066, %v3497
        %v3499 = vpop.f32.mrf.mxu0
        %v3500 = vadd.f32 %v3070, %v3499
        %v3501 = vpop.f32.mrf.mxu0
        %v3502 = vadd.f32 %v3066, %v3501
        %v3503 = vpop.f32.mrf.mxu0
        %v3504 = vadd.f32 %v3070, %v3503
        %3505 = vdwg.mxu0
        %v3506 = vmax.f32 %v3188, 0.0
        %v3507 = vmax.f32 %v3190, 0.0
        %v3508 = vmax.f32 %v3192, 0.0
        %v3509 = vmax.f32 %v3194, 0.0
        %v3510 = vmax.f32 %v3198, 0.0
        %v3511 = vmax.f32 %v3200, 0.0
        %v3512 = vmax.f32 %v3202, 0.0
        %v3513 = vmax.f32 %v3204, 0.0
        %v3514 = vmax.f32 %v3208, 0.0
        %v3515 = vmax.f32 %v3210, 0.0
        %v3516 = vmax.f32 %v3212, 0.0
        %v3517 = vmax.f32 %v3214, 0.0
        %v3518 = vmax.f32 %v3218, 0.0
        %v3519 = vmax.f32 %v3220, 0.0
        %v3520 = vmax.f32 %v3222, 0.0
        %v3521 = vmax.f32 %v3224, 0.0
        %v3522 = vmax.f32 %v3228, 0.0
        %v3523 = vmax.f32 %v3230, 0.0
        %v3524 = vmax.f32 %v3232, 0.0
        %v3525 = vmax.f32 %v3234, 0.0
        %v3526 = vmax.f32 %v3238, 0.0
        %v3527 = vmax.f32 %v3240, 0.0
        %v3528 = vmax.f32 %v3242, 0.0
        %v3529 = vmax.f32 %v3244, 0.0
        %v3530 = vmax.f32 %v3248, 0.0
        %v3531 = vmax.f32 %v3250, 0.0
        %v3532 = vmax.f32 %v3252, 0.0
        %v3533 = vmax.f32 %v3254, 0.0
        %v3534 = vmax.f32 %v3258, 0.0
        %v3535 = vmax.f32 %v3260, 0.0
        %v3536 = vmax.f32 %v3262, 0.0
        %v3537 = vmax.f32 %v3264, 0.0
        %v3538 = vmax.f32 %v3268, 0.0
        %v3539 = vmax.f32 %v3270, 0.0
        %v3540 = vmax.f32 %v3272, 0.0
        %v3541 = vmax.f32 %v3274, 0.0
        %v3542 = vmax.f32 %v3278, 0.0
        %v3543 = vmax.f32 %v3280, 0.0
        %v3544 = vmax.f32 %v3282, 0.0
        %v3545 = vmax.f32 %v3284, 0.0
        %v3546 = vmax.f32 %v3288, 0.0
        %v3547 = vmax.f32 %v3290, 0.0
        %v3548 = vmax.f32 %v3292, 0.0
        %v3549 = vmax.f32 %v3294, 0.0
        %v3550 = vmax.f32 %v3298, 0.0
        %v3551 = vmax.f32 %v3300, 0.0
        %v3552 = vmax.f32 %v3302, 0.0
        %v3553 = vmax.f32 %v3304, 0.0
        %v3554 = vmax.f32 %v3308, 0.0
        %v3555 = vmax.f32 %v3310, 0.0
        %v3556 = vmax.f32 %v3312, 0.0
        %v3557 = vmax.f32 %v3314, 0.0
        %v3558 = vmax.f32 %v3318, 0.0
        %v3559 = vmax.f32 %v3320, 0.0
        %v3560 = vmax.f32 %v3322, 0.0
        %v3561 = vmax.f32 %v3324, 0.0
        %v3562 = vmax.f32 %v3328, 0.0
        %v3563 = vmax.f32 %v3330, 0.0
        %v3564 = vmax.f32 %v3332, 0.0
        %v3565 = vmax.f32 %v3334, 0.0
        %v3566 = vmax.f32 %v3338, 0.0
        %v3567 = vmax.f32 %v3340, 0.0
        %v3568 = vmax.f32 %v3342, 0.0
        %v3569 = vmax.f32 %v3344, 0.0
        %v3570 = vmax.f32 %v3348, 0.0
        %v3571 = vmax.f32 %v3350, 0.0
        %v3572 = vmax.f32 %v3352, 0.0
        %v3573 = vmax.f32 %v3354, 0.0
        %v3574 = vmax.f32 %v3358, 0.0
        %v3575 = vmax.f32 %v3360, 0.0
        %v3576 = vmax.f32 %v3362, 0.0
        %v3577 = vmax.f32 %v3364, 0.0
        %v3578 = vmax.f32 %v3368, 0.0
        %v3579 = vmax.f32 %v3370, 0.0
        %v3580 = vmax.f32 %v3372, 0.0
        %v3581 = vmax.f32 %v3374, 0.0
        %v3582 = vmax.f32 %v3378, 0.0
        %v3583 = vmax.f32 %v3380, 0.0
        %v3584 = vmax.f32 %v3382, 0.0
        %v3585 = vmax.f32 %v3384, 0.0
        %v3586 = vmax.f32 %v3388, 0.0
        %v3587 = vmax.f32 %v3390, 0.0
        %v3588 = vmax.f32 %v3392, 0.0
        %v3589 = vmax.f32 %v3394, 0.0
        %v3590 = vmax.f32 %v3398, 0.0
        %v3591 = vmax.f32 %v3400, 0.0
        %v3592 = vmax.f32 %v3402, 0.0
        %v3593 = vmax.f32 %v3404, 0.0
        %v3594 = vmax.f32 %v3408, 0.0
        %v3595 = vmax.f32 %v3410, 0.0
        %v3596 = vmax.f32 %v3412, 0.0
        %v3597 = vmax.f32 %v3414, 0.0
        %v3598 = vmax.f32 %v3418, 0.0
        %v3599 = vmax.f32 %v3420, 0.0
        %v3600 = vmax.f32 %v3422, 0.0
        %v3601 = vmax.f32 %v3424, 0.0
        %v3602 = vmax.f32 %v3428, 0.0
        %v3603 = vmax.f32 %v3430, 0.0
        %v3604 = vmax.f32 %v3432, 0.0
        %v3605 = vmax.f32 %v3434, 0.0
        %v3606 = vmax.f32 %v3438, 0.0
        %v3607 = vmax.f32 %v3440, 0.0
        %v3608 = vmax.f32 %v3442, 0.0
        %v3609 = vmax.f32 %v3444, 0.0
        %v3610 = vmax.f32 %v3448, 0.0
        %v3611 = vmax.f32 %v3450, 0.0
        %v3612 = vmax.f32 %v3452, 0.0
        %v3613 = vmax.f32 %v3454, 0.0
        %v3614 = vmax.f32 %v3458, 0.0
        %v3615 = vmax.f32 %v3460, 0.0
        %v3616 = vmax.f32 %v3462, 0.0
        %v3617 = vmax.f32 %v3464, 0.0
        %v3618 = vmax.f32 %v3468, 0.0
        %v3619 = vmax.f32 %v3470, 0.0
        %v3620 = vmax.f32 %v3472, 0.0
        %v3621 = vmax.f32 %v3474, 0.0
        %v3622 = vmax.f32 %v3478, 0.0
        %v3623 = vmax.f32 %v3480, 0.0
        %v3624 = vmax.f32 %v3482, 0.0
        %v3625 = vmax.f32 %v3484, 0.0
        %v3626 = vmax.f32 %v3488, 0.0
        %v3627 = vmax.f32 %v3490, 0.0
        %v3628 = vmax.f32 %v3492, 0.0
        %v3629 = vmax.f32 %v3494, 0.0
        %v3630 = vmax.f32 %v3498, 0.0
        %v3631 = vmax.f32 %v3500, 0.0
        %v3632 = vmax.f32 %v3502, 0.0
        %v3633 = vmax.f32 %v3504, 0.0
        %v3634 = vpack.c.bf16 %v3508, %v3506
        %v3635 = vpack.c.bf16 %v3509, %v3507
        %v3636 = vpack.c.bf16 %v3512, %v3510
        %v3637 = vpack.c.bf16 %v3513, %v3511
        %v3638 = vpack.c.bf16 %v3516, %v3514
        %v3639 = vpack.c.bf16 %v3517, %v3515
        %v3640 = vpack.c.bf16 %v3520, %v3518
        %v3641 = vpack.c.bf16 %v3521, %v3519
        %v3642 = vpack.c.bf16 %v3524, %v3522
        %v3643 = vpack.c.bf16 %v3525, %v3523
        %v3644 = vpack.c.bf16 %v3528, %v3526
        %v3645 = vpack.c.bf16 %v3529, %v3527
        %v3646 = vpack.c.bf16 %v3532, %v3530
        %v3647 = vpack.c.bf16 %v3533, %v3531
        %v3648 = vpack.c.bf16 %v3536, %v3534
        %v3649 = vpack.c.bf16 %v3537, %v3535
        %v3650 = vpack.c.bf16 %v3540, %v3538
        %v3651 = vpack.c.bf16 %v3541, %v3539
        %v3652 = vpack.c.bf16 %v3544, %v3542
        %v3653 = vpack.c.bf16 %v3545, %v3543
        %v3654 = vpack.c.bf16 %v3548, %v3546
        %v3655 = vpack.c.bf16 %v3549, %v3547
        %v3656 = vpack.c.bf16 %v3552, %v3550
        %v3657 = vpack.c.bf16 %v3553, %v3551
        %v3658 = vpack.c.bf16 %v3556, %v3554
        %v3659 = vpack.c.bf16 %v3557, %v3555
        %v3660 = vpack.c.bf16 %v3560, %v3558
        %v3661 = vpack.c.bf16 %v3561, %v3559
        %v3662 = vpack.c.bf16 %v3564, %v3562
        %v3663 = vpack.c.bf16 %v3565, %v3563
        %v3664 = vpack.c.bf16 %v3568, %v3566
        %v3665 = vpack.c.bf16 %v3569, %v3567
        %v3666 = vpack.c.bf16 %v3572, %v3570
        %v3667 = vpack.c.bf16 %v3573, %v3571
        %v3668 = vpack.c.bf16 %v3576, %v3574
        %v3669 = vpack.c.bf16 %v3577, %v3575
        %v3670 = vpack.c.bf16 %v3580, %v3578
        %v3671 = vpack.c.bf16 %v3581, %v3579
        %v3672 = vpack.c.bf16 %v3584, %v3582
        %v3673 = vpack.c.bf16 %v3585, %v3583
        %v3674 = vpack.c.bf16 %v3588, %v3586
        %v3675 = vpack.c.bf16 %v3589, %v3587
        %v3676 = vpack.c.bf16 %v3592, %v3590
        %v3677 = vpack.c.bf16 %v3593, %v3591
        %v3678 = vpack.c.bf16 %v3596, %v3594
        %v3679 = vpack.c.bf16 %v3597, %v3595
        %v3680 = vpack.c.bf16 %v3600, %v3598
        %v3681 = vpack.c.bf16 %v3601, %v3599
        %v3682 = vpack.c.bf16 %v3604, %v3602
        %v3683 = vpack.c.bf16 %v3605, %v3603
        %v3684 = vpack.c.bf16 %v3608, %v3606
        %v3685 = vpack.c.bf16 %v3609, %v3607
        %v3686 = vpack.c.bf16 %v3612, %v3610
        %v3687 = vpack.c.bf16 %v3613, %v3611
        %v3688 = vpack.c.bf16 %v3616, %v3614
        %v3689 = vpack.c.bf16 %v3617, %v3615
        %v3690 = vpack.c.bf16 %v3620, %v3618
        %v3691 = vpack.c.bf16 %v3621, %v3619
        %v3692 = vpack.c.bf16 %v3624, %v3622
        %v3693 = vpack.c.bf16 %v3625, %v3623
        %v3694 = vpack.c.bf16 %v3628, %v3626
        %v3695 = vpack.c.bf16 %v3629, %v3627
        %v3696 = vpack.c.bf16 %v3632, %v3630
        %v3697 = vpack.c.bf16 %v3633, %v3631
        %v3698 = vld [vmem:[#allocation14] sm:$0xff]
        %v3699 = vld [vmem:[#allocation14 + $0x8] sm:$0xff]
        %v3700 = vld [vmem:[#allocation14 + $0x10] sm:$0xff]
        %v3701 = vld [vmem:[#allocation14 + $0x18] sm:$0xff]
        %v3702 = vld [vmem:[#allocation14 + $0x20] sm:$0xff]
        %v3703 = vld [vmem:[#allocation14 + $0x28] sm:$0xff]
        %v3704 = vld [vmem:[#allocation14 + $0x30] sm:$0xff]
        %v3705 = vld [vmem:[#allocation14 + $0x38] sm:$0xff]
        %v3706 = vld [vmem:[#allocation14 + $0x40] sm:$0xff]
        %v3707 = vld [vmem:[#allocation14 + $0x48] sm:$0xff]
        %v3708 = vld [vmem:[#allocation14 + $0x50] sm:$0xff]
        %v3709 = vld [vmem:[#allocation14 + $0x58] sm:$0xff]
        %v3710 = vld [vmem:[#allocation14 + $0x60] sm:$0xff]
        %v3711 = vld [vmem:[#allocation14 + $0x68] sm:$0xff]
        %v3712 = vld [vmem:[#allocation14 + $0x70] sm:$0xff]
        %v3713 = vld [vmem:[#allocation14 + $0x78] sm:$0xff]
        %v3714 = vld [vmem:[#allocation14 + $0x80] sm:$0xff]
        %v3715 = vld [vmem:[#allocation14 + $0x88] sm:$0xff]
        %v3716 = vld [vmem:[#allocation14 + $0x90] sm:$0xff]
        %v3717 = vld [vmem:[#allocation14 + $0x98] sm:$0xff]
        %v3718 = vld [vmem:[#allocation14 + $0xa0] sm:$0xff]
        %v3719 = vld [vmem:[#allocation14 + $0xa8] sm:$0xff]
        %v3720 = vld [vmem:[#allocation14 + $0xb0] sm:$0xff]
        %v3721 = vld [vmem:[#allocation14 + $0xb8] sm:$0xff]
        %v3722 = vld [vmem:[#allocation14 + $0xc0] sm:$0xff]
        %v3723 = vld [vmem:[#allocation14 + $0xc8] sm:$0xff]
        %v3724 = vld [vmem:[#allocation14 + $0xd0] sm:$0xff]
        %v3725 = vld [vmem:[#allocation14 + $0xd8] sm:$0xff]
        %v3726 = vld [vmem:[#allocation14 + $0xe0] sm:$0xff]
        %v3727 = vld [vmem:[#allocation14 + $0xe8] sm:$0xff]
        %v3728 = vld [vmem:[#allocation14 + $0xf0] sm:$0xff]
        %v3729 = vld [vmem:[#allocation14 + $0xf8] sm:$0xff]
        %v3730 = vld [vmem:[#allocation14 + $0x100] sm:$0xff]
        %v3731 = vld [vmem:[#allocation14 + $0x108] sm:$0xff]
        %v3732 = vld [vmem:[#allocation14 + $0x110] sm:$0xff]
        %v3733 = vld [vmem:[#allocation14 + $0x118] sm:$0xff]
        %v3734 = vld [vmem:[#allocation14 + $0x120] sm:$0xff]
        %v3735 = vld [vmem:[#allocation14 + $0x128] sm:$0xff]
        %v3736 = vld [vmem:[#allocation14 + $0x130] sm:$0xff]
        %v3737 = vld [vmem:[#allocation14 + $0x138] sm:$0xff]
        %v3738 = vld [vmem:[#allocation14 + $0x140] sm:$0xff]
        %v3739 = vld [vmem:[#allocation14 + $0x148] sm:$0xff]
        %v3740 = vld [vmem:[#allocation14 + $0x150] sm:$0xff]
        %v3741 = vld [vmem:[#allocation14 + $0x158] sm:$0xff]
        %v3742 = vld [vmem:[#allocation14 + $0x160] sm:$0xff]
        %v3743 = vld [vmem:[#allocation14 + $0x168] sm:$0xff]
        %v3744 = vld [vmem:[#allocation14 + $0x170] sm:$0xff]
        %v3745 = vld [vmem:[#allocation14 + $0x178] sm:$0xff]
        %v3746 = vld [vmem:[#allocation14 + $0x180] sm:$0xff]
        %v3747 = vld [vmem:[#allocation14 + $0x188] sm:$0xff]
        %v3748 = vld [vmem:[#allocation14 + $0x190] sm:$0xff]
        %v3749 = vld [vmem:[#allocation14 + $0x198] sm:$0xff]
        %v3750 = vld [vmem:[#allocation14 + $0x1a0] sm:$0xff]
        %v3751 = vld [vmem:[#allocation14 + $0x1a8] sm:$0xff]
        %v3752 = vld [vmem:[#allocation14 + $0x1b0] sm:$0xff]
        %v3753 = vld [vmem:[#allocation14 + $0x1b8] sm:$0xff]
        %v3754 = vld [vmem:[#allocation14 + $0x1c0] sm:$0xff]
        %v3755 = vld [vmem:[#allocation14 + $0x1c8] sm:$0xff]
        %v3756 = vld [vmem:[#allocation14 + $0x1d0] sm:$0xff]
        %v3757 = vld [vmem:[#allocation14 + $0x1d8] sm:$0xff]
        %v3758 = vld [vmem:[#allocation14 + $0x1e0] sm:$0xff]
        %v3759 = vld [vmem:[#allocation14 + $0x1e8] sm:$0xff]
        %v3760 = vld [vmem:[#allocation14 + $0x1f0] sm:$0xff]
        %v3761 = vld [vmem:[#allocation14 + $0x1f8] sm:$0xff]
        %v3762 = vld [vmem:[#allocation16] sm:$0xf]
        %v3764 = vlaneseq
        %v3765 = vshrl.u32 %v3764, 7
        %v3766 = vsub.s32 0, %v3765
        %v3767 = vrot.slane %v3762, %v3766
        %v3768 = vlaneseq
        %v3769 = vshrl.u32 %v3768, 7
        %v3770 = vsub.s32 1, %v3769
        %v3771 = vrot.slane %v3762, %v3770
        %v3772 = vlaneseq
        %v3773 = vshrl.u32 %v3772, 7
        %v3774 = vsub.s32 2, %v3773
        %v3775 = vrot.slane %v3762, %v3774
        %v3776 = vlaneseq
        %v3777 = vshrl.u32 %v3776, 7
        %v3778 = vsub.s32 3, %v3777
        %v3779 = vrot.slane %v3762, %v3778
        %v3848 = vunpack.c.l.b16 %v3698
        %v3849 = vunpack.c.h.b16 %v3698
        %v3850 = vunpack.c.l.b16 %v3699
        %v3851 = vunpack.c.h.b16 %v3699
        %v3852 = vunpack.c.l.b16 %v3700
        %v3853 = vunpack.c.h.b16 %v3700
        %v3854 = vunpack.c.l.b16 %v3701
        %v3855 = vunpack.c.h.b16 %v3701
        %v3856 = vunpack.c.l.b16 %v3702
        %v3857 = vunpack.c.h.b16 %v3702
        %v3858 = vunpack.c.l.b16 %v3703
        %v3859 = vunpack.c.h.b16 %v3703
        %v3860 = vunpack.c.l.b16 %v3704
        %v3861 = vunpack.c.h.b16 %v3704
        %v3862 = vunpack.c.l.b16 %v3705
        %v3863 = vunpack.c.h.b16 %v3705
        %v3864 = vunpack.c.l.b16 %v3706
        %v3865 = vunpack.c.h.b16 %v3706
        %v3866 = vunpack.c.l.b16 %v3707
        %v3867 = vunpack.c.h.b16 %v3707
        %v3868 = vunpack.c.l.b16 %v3708
        %v3869 = vunpack.c.h.b16 %v3708
        %v3870 = vunpack.c.l.b16 %v3709
        %v3871 = vunpack.c.h.b16 %v3709
        %v3872 = vunpack.c.l.b16 %v3710
        %v3873 = vunpack.c.h.b16 %v3710
        %v3874 = vunpack.c.l.b16 %v3711
        %v3875 = vunpack.c.h.b16 %v3711
        %v3876 = vunpack.c.l.b16 %v3712
        %v3877 = vunpack.c.h.b16 %v3712
        %v3878 = vunpack.c.l.b16 %v3713
        %v3879 = vunpack.c.h.b16 %v3713
        %v3880 = vunpack.c.l.b16 %v3714
        %v3881 = vunpack.c.h.b16 %v3714
        %v3882 = vunpack.c.l.b16 %v3715
        %v3883 = vunpack.c.h.b16 %v3715
        %v3884 = vunpack.c.l.b16 %v3716
        %v3885 = vunpack.c.h.b16 %v3716
        %v3886 = vunpack.c.l.b16 %v3717
        %v3887 = vunpack.c.h.b16 %v3717
        %v3888 = vunpack.c.l.b16 %v3718
        %v3889 = vunpack.c.h.b16 %v3718
        %v3890 = vunpack.c.l.b16 %v3719
        %v3891 = vunpack.c.h.b16 %v3719
        %v3892 = vunpack.c.l.b16 %v3720
        %v3893 = vunpack.c.h.b16 %v3720
        %v3894 = vunpack.c.l.b16 %v3721
        %v3895 = vunpack.c.h.b16 %v3721
        %v3896 = vunpack.c.l.b16 %v3722
        %v3897 = vunpack.c.h.b16 %v3722
        %v3898 = vunpack.c.l.b16 %v3723
        %v3899 = vunpack.c.h.b16 %v3723
        %v3900 = vunpack.c.l.b16 %v3724
        %v3901 = vunpack.c.h.b16 %v3724
        %v3902 = vunpack.c.l.b16 %v3725
        %v3903 = vunpack.c.h.b16 %v3725
        %v3904 = vunpack.c.l.b16 %v3726
        %v3905 = vunpack.c.h.b16 %v3726
        %v3906 = vunpack.c.l.b16 %v3727
        %v3907 = vunpack.c.h.b16 %v3727
        %v3908 = vunpack.c.l.b16 %v3728
        %v3909 = vunpack.c.h.b16 %v3728
        %v3910 = vunpack.c.l.b16 %v3729
        %v3911 = vunpack.c.h.b16 %v3729
        %v3912 = vunpack.c.l.b16 %v3730
        %v3913 = vunpack.c.h.b16 %v3730
        %v3914 = vunpack.c.l.b16 %v3731
        %v3915 = vunpack.c.h.b16 %v3731
        %v3916 = vunpack.c.l.b16 %v3732
        %v3917 = vunpack.c.h.b16 %v3732
        %v3918 = vunpack.c.l.b16 %v3733
        %v3919 = vunpack.c.h.b16 %v3733
        %v3920 = vunpack.c.l.b16 %v3734
        %v3921 = vunpack.c.h.b16 %v3734
        %v3922 = vunpack.c.l.b16 %v3735
        %v3923 = vunpack.c.h.b16 %v3735
        %v3924 = vunpack.c.l.b16 %v3736
        %v3925 = vunpack.c.h.b16 %v3736
        %v3926 = vunpack.c.l.b16 %v3737
        %v3927 = vunpack.c.h.b16 %v3737
        %v3928 = vunpack.c.l.b16 %v3738
        %v3929 = vunpack.c.h.b16 %v3738
        %v3930 = vunpack.c.l.b16 %v3739
        %v3931 = vunpack.c.h.b16 %v3739
        %v3932 = vunpack.c.l.b16 %v3740
        %v3933 = vunpack.c.h.b16 %v3740
        %v3934 = vunpack.c.l.b16 %v3741
        %v3935 = vunpack.c.h.b16 %v3741
        %v3936 = vunpack.c.l.b16 %v3742
        %v3937 = vunpack.c.h.b16 %v3742
        %v3938 = vunpack.c.l.b16 %v3743
        %v3939 = vunpack.c.h.b16 %v3743
        %v3940 = vunpack.c.l.b16 %v3744
        %v3941 = vunpack.c.h.b16 %v3744
        %v3942 = vunpack.c.l.b16 %v3745
        %v3943 = vunpack.c.h.b16 %v3745
        %v3944 = vunpack.c.l.b16 %v3746
        %v3945 = vunpack.c.h.b16 %v3746
        %v3946 = vunpack.c.l.b16 %v3747
        %v3947 = vunpack.c.h.b16 %v3747
        %v3948 = vunpack.c.l.b16 %v3748
        %v3949 = vunpack.c.h.b16 %v3748
        %v3950 = vunpack.c.l.b16 %v3749
        %v3951 = vunpack.c.h.b16 %v3749
        %v3952 = vunpack.c.l.b16 %v3750
        %v3953 = vunpack.c.h.b16 %v3750
        %v3954 = vunpack.c.l.b16 %v3751
        %v3955 = vunpack.c.h.b16 %v3751
        %v3956 = vunpack.c.l.b16 %v3752
        %v3957 = vunpack.c.h.b16 %v3752
        %v3958 = vunpack.c.l.b16 %v3753
        %v3959 = vunpack.c.h.b16 %v3753
        %v3960 = vunpack.c.l.b16 %v3754
        %v3961 = vunpack.c.h.b16 %v3754
        %v3962 = vunpack.c.l.b16 %v3755
        %v3963 = vunpack.c.h.b16 %v3755
        %v3964 = vunpack.c.l.b16 %v3756
        %v3965 = vunpack.c.h.b16 %v3756
        %v3966 = vunpack.c.l.b16 %v3757
        %v3967 = vunpack.c.h.b16 %v3757
        %v3968 = vunpack.c.l.b16 %v3758
        %v3969 = vunpack.c.h.b16 %v3758
        %v3970 = vunpack.c.l.b16 %v3759
        %v3971 = vunpack.c.h.b16 %v3759
        %v3972 = vunpack.c.l.b16 %v3760
        %v3973 = vunpack.c.h.b16 %v3760
        %v3974 = vunpack.c.l.b16 %v3761
        %v3975 = vunpack.c.h.b16 %v3761
        %v3976 = vpack.c.b16 %v3852, %v3848
        %v3977 = vpack.c.b16 %v3853, %v3849
        %v3978 = vpack.c.b16 %v3854, %v3850
        %v3979 = vpack.c.b16 %v3855, %v3851
        %v3980 = vpack.c.b16 %v3860, %v3856
        %v3981 = vpack.c.b16 %v3861, %v3857
        %v3982 = vpack.c.b16 %v3862, %v3858
        %v3983 = vpack.c.b16 %v3863, %v3859
        %v3984 = vpack.c.b16 %v3868, %v3864
        %v3985 = vpack.c.b16 %v3869, %v3865
        %v3986 = vpack.c.b16 %v3870, %v3866
        %v3987 = vpack.c.b16 %v3871, %v3867
        %v3988 = vpack.c.b16 %v3876, %v3872
        %v3989 = vpack.c.b16 %v3877, %v3873
        %v3990 = vpack.c.b16 %v3878, %v3874
        %v3991 = vpack.c.b16 %v3879, %v3875
        %v3992 = vpack.c.b16 %v3884, %v3880
        %v3993 = vpack.c.b16 %v3885, %v3881
        %v3994 = vpack.c.b16 %v3886, %v3882
        %v3995 = vpack.c.b16 %v3887, %v3883
        %v3996 = vpack.c.b16 %v3892, %v3888
        %v3997 = vpack.c.b16 %v3893, %v3889
        %v3998 = vpack.c.b16 %v3894, %v3890
        %v3999 = vpack.c.b16 %v3895, %v3891
        %v4000 = vpack.c.b16 %v3900, %v3896
        %v4001 = vpack.c.b16 %v3901, %v3897
        %v4002 = vpack.c.b16 %v3902, %v3898
        %v4003 = vpack.c.b16 %v3903, %v3899
        %v4004 = vpack.c.b16 %v3908, %v3904
        %v4005 = vpack.c.b16 %v3909, %v3905
        %v4006 = vpack.c.b16 %v3910, %v3906
        %v4007 = vpack.c.b16 %v3911, %v3907
        %v4008 = vpack.c.b16 %v3916, %v3912
        %v4009 = vpack.c.b16 %v3917, %v3913
        %v4010 = vpack.c.b16 %v3918, %v3914
        %v4011 = vpack.c.b16 %v3919, %v3915
        %v4012 = vpack.c.b16 %v3924, %v3920
        %v4013 = vpack.c.b16 %v3925, %v3921
        %v4014 = vpack.c.b16 %v3926, %v3922
        %v4015 = vpack.c.b16 %v3927, %v3923
        %v4016 = vpack.c.b16 %v3932, %v3928
        %v4017 = vpack.c.b16 %v3933, %v3929
        %v4018 = vpack.c.b16 %v3934, %v3930
        %v4019 = vpack.c.b16 %v3935, %v3931
        %v4020 = vpack.c.b16 %v3940, %v3936
        %v4021 = vpack.c.b16 %v3941, %v3937
        %v4022 = vpack.c.b16 %v3942, %v3938
        %v4023 = vpack.c.b16 %v3943, %v3939
        %v4024 = vpack.c.b16 %v3948, %v3944
        %v4025 = vpack.c.b16 %v3949, %v3945
        %v4026 = vpack.c.b16 %v3950, %v3946
        %v4027 = vpack.c.b16 %v3951, %v3947
        %v4028 = vpack.c.b16 %v3956, %v3952
        %v4029 = vpack.c.b16 %v3957, %v3953
        %v4030 = vpack.c.b16 %v3958, %v3954
        %v4031 = vpack.c.b16 %v3959, %v3955
        %v4032 = vpack.c.b16 %v3964, %v3960
        %v4033 = vpack.c.b16 %v3965, %v3961
        %v4034 = vpack.c.b16 %v3966, %v3962
        %v4035 = vpack.c.b16 %v3967, %v3963
        %v4036 = vpack.c.b16 %v3972, %v3968
        %v4037 = vpack.c.b16 %v3973, %v3969
        %v4038 = vpack.c.b16 %v3974, %v3970
        %v4039 = vpack.c.b16 %v3975, %v3971
        %4104 = vmatprep.subr.bf16.mxu0 %v4005
        %4105 = vmatpush1.bf16.msra.mxu0 %v4004
        %4106 = vmatprep.subr.bf16.mxu0 %v4001
        %4107 = vmatpush1.bf16.msra.mxu0 %v4000
        %4108 = vmatprep.subr.bf16.mxu0 %v3997
        %4109 = vmatpush1.bf16.msra.mxu0 %v3996
        %4110 = vmatprep.subr.bf16.mxu0 %v3993
        %4111 = vmatpush1.bf16.msra.mxu0 %v3992
        %4112 = vmatprep.subr.bf16.mxu0 %v3989
        %4113 = vmatpush1.bf16.msra.mxu0 %v3988
        %4114 = vmatprep.subr.bf16.mxu0 %v3985
        %4115 = vmatpush1.bf16.msra.mxu0 %v3984
        %4116 = vmatprep.subr.bf16.mxu0 %v3981
        %4117 = vmatpush1.bf16.msra.mxu0 %v3980
        %4118 = vmatprep.subr.bf16.mxu0 %v3977
        %4119 = vmatpush1.bf16.msra.mxu0 %v3976
        %4120 = vmatprep.subr.bf16.mxu0 %v4037
        %4121 = vmatpush2.bf16.msra.mxu0 %v4036
        %4122 = vmatprep.subr.bf16.mxu0 %v4033
        %4123 = vmatpush2.bf16.msra.mxu0 %v4032
        %4124 = vmatprep.subr.bf16.mxu0 %v4029
        %4125 = vmatpush2.bf16.msra.mxu0 %v4028
        %4126 = vmatprep.subr.bf16.mxu0 %v4025
        %4127 = vmatpush2.bf16.msra.mxu0 %v4024
        %4128 = vmatprep.subr.bf16.mxu0 %v4021
        %4129 = vmatpush2.bf16.msra.mxu0 %v4020
        %4130 = vmatprep.subr.bf16.mxu0 %v4017
        %4131 = vmatpush2.bf16.msra.mxu0 %v4016
        %4132 = vmatprep.subr.bf16.mxu0 %v4013
        %4133 = vmatpush2.bf16.msra.mxu0 %v4012
        %4134 = vmatprep.subr.bf16.mxu0 %v4009
        %4135 = vmatpush2.bf16.msra.mxu0 %v4008
        %4136 = vmatprep.mubr.bf16.mxu0 %v3635
        %4137 = vmatmul.mubr.bf16.gmra.mxu0 %v3634
        %v4138 = vpop.f32.mrf.mxu0
        %v4139 = vadd.f32 %v3767, %v4138
        %v4140 = vpop.f32.mrf.mxu0
        %v4141 = vadd.f32 %v3771, %v4140
        %v4142 = vpop.f32.mrf.mxu0
        %v4143 = vadd.f32 %v3767, %v4142
        %v4144 = vpop.f32.mrf.mxu0
        %v4145 = vadd.f32 %v3771, %v4144
        %4146 = vmatprep.mubr.bf16.mxu0 %v3637
        %4147 = vmatmul.mubr.bf16.gmra.mxu0 %v3636
        %v4148 = vpop.f32.mrf.mxu0
        %v4149 = vadd.f32 %v3767, %v4148
        %v4150 = vpop.f32.mrf.mxu0
        %v4151 = vadd.f32 %v3771, %v4150
        %v4152 = vpop.f32.mrf.mxu0
        %v4153 = vadd.f32 %v3767, %v4152
        %v4154 = vpop.f32.mrf.mxu0
        %v4155 = vadd.f32 %v3771, %v4154
        %4156 = vmatprep.mubr.bf16.mxu0 %v3639
        %4157 = vmatmul.mubr.bf16.gmra.mxu0 %v3638
        %v4158 = vpop.f32.mrf.mxu0
        %v4159 = vadd.f32 %v3767, %v4158
        %v4160 = vpop.f32.mrf.mxu0
        %v4161 = vadd.f32 %v3771, %v4160
        %v4162 = vpop.f32.mrf.mxu0
        %v4163 = vadd.f32 %v3767, %v4162
        %v4164 = vpop.f32.mrf.mxu0
        %v4165 = vadd.f32 %v3771, %v4164
        %4166 = vmatprep.mubr.bf16.mxu0 %v3641
        %4167 = vmatmul.mubr.bf16.gmra.mxu0 %v3640
        %v4168 = vpop.f32.mrf.mxu0
        %v4169 = vadd.f32 %v3767, %v4168
        %v4170 = vpop.f32.mrf.mxu0
        %v4171 = vadd.f32 %v3771, %v4170
        %v4172 = vpop.f32.mrf.mxu0
        %v4173 = vadd.f32 %v3767, %v4172
        %v4174 = vpop.f32.mrf.mxu0
        %v4175 = vadd.f32 %v3771, %v4174
        %4176 = vmatprep.mubr.bf16.mxu0 %v3643
        %4177 = vmatmul.mubr.bf16.gmra.mxu0 %v3642
        %v4178 = vpop.f32.mrf.mxu0
        %v4179 = vadd.f32 %v3767, %v4178
        %v4180 = vpop.f32.mrf.mxu0
        %v4181 = vadd.f32 %v3771, %v4180
        %v4182 = vpop.f32.mrf.mxu0
        %v4183 = vadd.f32 %v3767, %v4182
        %v4184 = vpop.f32.mrf.mxu0
        %v4185 = vadd.f32 %v3771, %v4184
        %4186 = vmatprep.mubr.bf16.mxu0 %v3645
        %4187 = vmatmul.mubr.bf16.gmra.mxu0 %v3644
        %v4188 = vpop.f32.mrf.mxu0
        %v4189 = vadd.f32 %v3767, %v4188
        %v4190 = vpop.f32.mrf.mxu0
        %v4191 = vadd.f32 %v3771, %v4190
        %v4192 = vpop.f32.mrf.mxu0
        %v4193 = vadd.f32 %v3767, %v4192
        %v4194 = vpop.f32.mrf.mxu0
        %v4195 = vadd.f32 %v3771, %v4194
        %4196 = vmatprep.mubr.bf16.mxu0 %v3647
        %4197 = vmatmul.mubr.bf16.gmra.mxu0 %v3646
        %v4198 = vpop.f32.mrf.mxu0
        %v4199 = vadd.f32 %v3767, %v4198
        %v4200 = vpop.f32.mrf.mxu0
        %v4201 = vadd.f32 %v3771, %v4200
        %v4202 = vpop.f32.mrf.mxu0
        %v4203 = vadd.f32 %v3767, %v4202
        %v4204 = vpop.f32.mrf.mxu0
        %v4205 = vadd.f32 %v3771, %v4204
        %4206 = vmatprep.mubr.bf16.mxu0 %v3649
        %4207 = vmatmul.mubr.bf16.gmra.mxu0 %v3648
        %v4208 = vpop.f32.mrf.mxu0
        %v4209 = vadd.f32 %v3767, %v4208
        %v4210 = vpop.f32.mrf.mxu0
        %v4211 = vadd.f32 %v3771, %v4210
        %v4212 = vpop.f32.mrf.mxu0
        %v4213 = vadd.f32 %v3767, %v4212
        %v4214 = vpop.f32.mrf.mxu0
        %v4215 = vadd.f32 %v3771, %v4214
        %4216 = vmatprep.mubr.bf16.mxu0 %v3651
        %4217 = vmatmul.mubr.bf16.gmra.mxu0 %v3650
        %v4218 = vpop.f32.mrf.mxu0
        %v4219 = vadd.f32 %v3767, %v4218
        %v4220 = vpop.f32.mrf.mxu0
        %v4221 = vadd.f32 %v3771, %v4220
        %v4222 = vpop.f32.mrf.mxu0
        %v4223 = vadd.f32 %v3767, %v4222
        %v4224 = vpop.f32.mrf.mxu0
        %v4225 = vadd.f32 %v3771, %v4224
        %4226 = vmatprep.mubr.bf16.mxu0 %v3653
        %4227 = vmatmul.mubr.bf16.gmra.mxu0 %v3652
        %v4228 = vpop.f32.mrf.mxu0
        %v4229 = vadd.f32 %v3767, %v4228
        %v4230 = vpop.f32.mrf.mxu0
        %v4231 = vadd.f32 %v3771, %v4230
        %v4232 = vpop.f32.mrf.mxu0
        %v4233 = vadd.f32 %v3767, %v4232
        %v4234 = vpop.f32.mrf.mxu0
        %v4235 = vadd.f32 %v3771, %v4234
        %4236 = vmatprep.mubr.bf16.mxu0 %v3655
        %4237 = vmatmul.mubr.bf16.gmra.mxu0 %v3654
        %v4238 = vpop.f32.mrf.mxu0
        %v4239 = vadd.f32 %v3767, %v4238
        %v4240 = vpop.f32.mrf.mxu0
        %v4241 = vadd.f32 %v3771, %v4240
        %v4242 = vpop.f32.mrf.mxu0
        %v4243 = vadd.f32 %v3767, %v4242
        %v4244 = vpop.f32.mrf.mxu0
        %v4245 = vadd.f32 %v3771, %v4244
        %4246 = vmatprep.mubr.bf16.mxu0 %v3657
        %4247 = vmatmul.mubr.bf16.gmra.mxu0 %v3656
        %v4248 = vpop.f32.mrf.mxu0
        %v4249 = vadd.f32 %v3767, %v4248
        %v4250 = vpop.f32.mrf.mxu0
        %v4251 = vadd.f32 %v3771, %v4250
        %v4252 = vpop.f32.mrf.mxu0
        %v4253 = vadd.f32 %v3767, %v4252
        %v4254 = vpop.f32.mrf.mxu0
        %v4255 = vadd.f32 %v3771, %v4254
        %4256 = vmatprep.mubr.bf16.mxu0 %v3659
        %4257 = vmatmul.mubr.bf16.gmra.mxu0 %v3658
        %v4258 = vpop.f32.mrf.mxu0
        %v4259 = vadd.f32 %v3767, %v4258
        %v4260 = vpop.f32.mrf.mxu0
        %v4261 = vadd.f32 %v3771, %v4260
        %v4262 = vpop.f32.mrf.mxu0
        %v4263 = vadd.f32 %v3767, %v4262
        %v4264 = vpop.f32.mrf.mxu0
        %v4265 = vadd.f32 %v3771, %v4264
        %4266 = vmatprep.mubr.bf16.mxu0 %v3661
        %4267 = vmatmul.mubr.bf16.gmra.mxu0 %v3660
        %v4268 = vpop.f32.mrf.mxu0
        %v4269 = vadd.f32 %v3767, %v4268
        %v4270 = vpop.f32.mrf.mxu0
        %v4271 = vadd.f32 %v3771, %v4270
        %v4272 = vpop.f32.mrf.mxu0
        %v4273 = vadd.f32 %v3767, %v4272
        %v4274 = vpop.f32.mrf.mxu0
        %v4275 = vadd.f32 %v3771, %v4274
        %4276 = vmatprep.mubr.bf16.mxu0 %v3663
        %4277 = vmatmul.mubr.bf16.gmra.mxu0 %v3662
        %v4278 = vpop.f32.mrf.mxu0
        %v4279 = vadd.f32 %v3767, %v4278
        %v4280 = vpop.f32.mrf.mxu0
        %v4281 = vadd.f32 %v3771, %v4280
        %v4282 = vpop.f32.mrf.mxu0
        %v4283 = vadd.f32 %v3767, %v4282
        %v4284 = vpop.f32.mrf.mxu0
        %v4285 = vadd.f32 %v3771, %v4284
        %4286 = vmatprep.mubr.bf16.mxu0 %v3665
        %4287 = vmatmul.mubr.bf16.gmra.mxu0 %v3664
        %v4288 = vpop.f32.mrf.mxu0
        %v4289 = vadd.f32 %v3767, %v4288
        %v4290 = vpop.f32.mrf.mxu0
        %v4291 = vadd.f32 %v3771, %v4290
        %v4292 = vpop.f32.mrf.mxu0
        %v4293 = vadd.f32 %v3767, %v4292
        %v4294 = vpop.f32.mrf.mxu0
        %v4295 = vadd.f32 %v3771, %v4294
        %4296 = vmatprep.mubr.bf16.mxu0 %v3667
        %4297 = vmatmul.mubr.bf16.gmra.mxu0 %v3666
        %v4298 = vpop.f32.mrf.mxu0
        %v4299 = vadd.f32 %v3767, %v4298
        %v4300 = vpop.f32.mrf.mxu0
        %v4301 = vadd.f32 %v3771, %v4300
        %v4302 = vpop.f32.mrf.mxu0
        %v4303 = vadd.f32 %v3767, %v4302
        %v4304 = vpop.f32.mrf.mxu0
        %v4305 = vadd.f32 %v3771, %v4304
        %4306 = vmatprep.mubr.bf16.mxu0 %v3669
        %4307 = vmatmul.mubr.bf16.gmra.mxu0 %v3668
        %v4308 = vpop.f32.mrf.mxu0
        %v4309 = vadd.f32 %v3767, %v4308
        %v4310 = vpop.f32.mrf.mxu0
        %v4311 = vadd.f32 %v3771, %v4310
        %v4312 = vpop.f32.mrf.mxu0
        %v4313 = vadd.f32 %v3767, %v4312
        %v4314 = vpop.f32.mrf.mxu0
        %v4315 = vadd.f32 %v3771, %v4314
        %4316 = vmatprep.mubr.bf16.mxu0 %v3671
        %4317 = vmatmul.mubr.bf16.gmra.mxu0 %v3670
        %v4318 = vpop.f32.mrf.mxu0
        %v4319 = vadd.f32 %v3767, %v4318
        %v4320 = vpop.f32.mrf.mxu0
        %v4321 = vadd.f32 %v3771, %v4320
        %v4322 = vpop.f32.mrf.mxu0
        %v4323 = vadd.f32 %v3767, %v4322
        %v4324 = vpop.f32.mrf.mxu0
        %v4325 = vadd.f32 %v3771, %v4324
        %4326 = vmatprep.mubr.bf16.mxu0 %v3673
        %4327 = vmatmul.mubr.bf16.gmra.mxu0 %v3672
        %v4328 = vpop.f32.mrf.mxu0
        %v4329 = vadd.f32 %v3767, %v4328
        %v4330 = vpop.f32.mrf.mxu0
        %v4331 = vadd.f32 %v3771, %v4330
        %v4332 = vpop.f32.mrf.mxu0
        %v4333 = vadd.f32 %v3767, %v4332
        %v4334 = vpop.f32.mrf.mxu0
        %v4335 = vadd.f32 %v3771, %v4334
        %4336 = vmatprep.mubr.bf16.mxu0 %v3675
        %4337 = vmatmul.mubr.bf16.gmra.mxu0 %v3674
        %v4338 = vpop.f32.mrf.mxu0
        %v4339 = vadd.f32 %v3767, %v4338
        %v4340 = vpop.f32.mrf.mxu0
        %v4341 = vadd.f32 %v3771, %v4340
        %v4342 = vpop.f32.mrf.mxu0
        %v4343 = vadd.f32 %v3767, %v4342
        %v4344 = vpop.f32.mrf.mxu0
        %v4345 = vadd.f32 %v3771, %v4344
        %4346 = vmatprep.mubr.bf16.mxu0 %v3677
        %4347 = vmatmul.mubr.bf16.gmra.mxu0 %v3676
        %v4348 = vpop.f32.mrf.mxu0
        %v4349 = vadd.f32 %v3767, %v4348
        %v4350 = vpop.f32.mrf.mxu0
        %v4351 = vadd.f32 %v3771, %v4350
        %v4352 = vpop.f32.mrf.mxu0
        %v4353 = vadd.f32 %v3767, %v4352
        %v4354 = vpop.f32.mrf.mxu0
        %v4355 = vadd.f32 %v3771, %v4354
        %4356 = vmatprep.mubr.bf16.mxu0 %v3679
        %4357 = vmatmul.mubr.bf16.gmra.mxu0 %v3678
        %v4358 = vpop.f32.mrf.mxu0
        %v4359 = vadd.f32 %v3767, %v4358
        %v4360 = vpop.f32.mrf.mxu0
        %v4361 = vadd.f32 %v3771, %v4360
        %v4362 = vpop.f32.mrf.mxu0
        %v4363 = vadd.f32 %v3767, %v4362
        %v4364 = vpop.f32.mrf.mxu0
        %v4365 = vadd.f32 %v3771, %v4364
        %4366 = vmatprep.mubr.bf16.mxu0 %v3681
        %4367 = vmatmul.mubr.bf16.gmra.mxu0 %v3680
        %v4368 = vpop.f32.mrf.mxu0
        %v4369 = vadd.f32 %v3767, %v4368
        %v4370 = vpop.f32.mrf.mxu0
        %v4371 = vadd.f32 %v3771, %v4370
        %v4372 = vpop.f32.mrf.mxu0
        %v4373 = vadd.f32 %v3767, %v4372
        %v4374 = vpop.f32.mrf.mxu0
        %v4375 = vadd.f32 %v3771, %v4374
        %4376 = vmatprep.mubr.bf16.mxu0 %v3683
        %4377 = vmatmul.mubr.bf16.gmra.mxu0 %v3682
        %v4378 = vpop.f32.mrf.mxu0
        %v4379 = vadd.f32 %v3767, %v4378
        %v4380 = vpop.f32.mrf.mxu0
        %v4381 = vadd.f32 %v3771, %v4380
        %v4382 = vpop.f32.mrf.mxu0
        %v4383 = vadd.f32 %v3767, %v4382
        %v4384 = vpop.f32.mrf.mxu0
        %v4385 = vadd.f32 %v3771, %v4384
        %4386 = vmatprep.mubr.bf16.mxu0 %v3685
        %4387 = vmatmul.mubr.bf16.gmra.mxu0 %v3684
        %v4388 = vpop.f32.mrf.mxu0
        %v4389 = vadd.f32 %v3767, %v4388
        %v4390 = vpop.f32.mrf.mxu0
        %v4391 = vadd.f32 %v3771, %v4390
        %v4392 = vpop.f32.mrf.mxu0
        %v4393 = vadd.f32 %v3767, %v4392
        %v4394 = vpop.f32.mrf.mxu0
        %v4395 = vadd.f32 %v3771, %v4394
        %4396 = vmatprep.mubr.bf16.mxu0 %v3687
        %4397 = vmatmul.mubr.bf16.gmra.mxu0 %v3686
        %v4398 = vpop.f32.mrf.mxu0
        %v4399 = vadd.f32 %v3767, %v4398
        %v4400 = vpop.f32.mrf.mxu0
        %v4401 = vadd.f32 %v3771, %v4400
        %v4402 = vpop.f32.mrf.mxu0
        %v4403 = vadd.f32 %v3767, %v4402
        %v4404 = vpop.f32.mrf.mxu0
        %v4405 = vadd.f32 %v3771, %v4404
        %4406 = vmatprep.mubr.bf16.mxu0 %v3689
        %4407 = vmatmul.mubr.bf16.gmra.mxu0 %v3688
        %v4408 = vpop.f32.mrf.mxu0
        %v4409 = vadd.f32 %v3767, %v4408
        %v4410 = vpop.f32.mrf.mxu0
        %v4411 = vadd.f32 %v3771, %v4410
        %v4412 = vpop.f32.mrf.mxu0
        %v4413 = vadd.f32 %v3767, %v4412
        %v4414 = vpop.f32.mrf.mxu0
        %v4415 = vadd.f32 %v3771, %v4414
        %4416 = vmatprep.mubr.bf16.mxu0 %v3691
        %4417 = vmatmul.mubr.bf16.gmra.mxu0 %v3690
        %v4418 = vpop.f32.mrf.mxu0
        %v4419 = vadd.f32 %v3767, %v4418
        %v4420 = vpop.f32.mrf.mxu0
        %v4421 = vadd.f32 %v3771, %v4420
        %v4422 = vpop.f32.mrf.mxu0
        %v4423 = vadd.f32 %v3767, %v4422
        %v4424 = vpop.f32.mrf.mxu0
        %v4425 = vadd.f32 %v3771, %v4424
        %4426 = vmatprep.mubr.bf16.mxu0 %v3693
        %4427 = vmatmul.mubr.bf16.gmra.mxu0 %v3692
        %v4428 = vpop.f32.mrf.mxu0
        %v4429 = vadd.f32 %v3767, %v4428
        %v4430 = vpop.f32.mrf.mxu0
        %v4431 = vadd.f32 %v3771, %v4430
        %v4432 = vpop.f32.mrf.mxu0
        %v4433 = vadd.f32 %v3767, %v4432
        %v4434 = vpop.f32.mrf.mxu0
        %v4435 = vadd.f32 %v3771, %v4434
        %4436 = vmatprep.mubr.bf16.mxu0 %v3695
        %4437 = vmatmul.mubr.bf16.gmra.mxu0 %v3694
        %v4438 = vpop.f32.mrf.mxu0
        %v4439 = vadd.f32 %v3767, %v4438
        %v4440 = vpop.f32.mrf.mxu0
        %v4441 = vadd.f32 %v3771, %v4440
        %v4442 = vpop.f32.mrf.mxu0
        %v4443 = vadd.f32 %v3767, %v4442
        %v4444 = vpop.f32.mrf.mxu0
        %v4445 = vadd.f32 %v3771, %v4444
        %4446 = vmatprep.mubr.bf16.mxu0 %v3697
        %4447 = vmatmul.mubr.bf16.gmra.mxu0 %v3696
        %v4448 = vpop.f32.mrf.mxu0
        %v4449 = vadd.f32 %v3767, %v4448
        %v4450 = vpop.f32.mrf.mxu0
        %v4451 = vadd.f32 %v3771, %v4450
        %v4452 = vpop.f32.mrf.mxu0
        %v4453 = vadd.f32 %v3767, %v4452
        %v4454 = vpop.f32.mrf.mxu0
        %v4455 = vadd.f32 %v3771, %v4454
        %4456 = vdwg.mxu0
        %4457 = vmatprep.subr.bf16.mxu0 %v4007
        %4458 = vmatpush1.bf16.msra.mxu0 %v4006
        %4459 = vmatprep.subr.bf16.mxu0 %v4003
        %4460 = vmatpush1.bf16.msra.mxu0 %v4002
        %4461 = vmatprep.subr.bf16.mxu0 %v3999
        %4462 = vmatpush1.bf16.msra.mxu0 %v3998
        %4463 = vmatprep.subr.bf16.mxu0 %v3995
        %4464 = vmatpush1.bf16.msra.mxu0 %v3994
        %4465 = vmatprep.subr.bf16.mxu0 %v3991
        %4466 = vmatpush1.bf16.msra.mxu0 %v3990
        %4467 = vmatprep.subr.bf16.mxu0 %v3987
        %4468 = vmatpush1.bf16.msra.mxu0 %v3986
        %4469 = vmatprep.subr.bf16.mxu0 %v3983
        %4470 = vmatpush1.bf16.msra.mxu0 %v3982
        %4471 = vmatprep.subr.bf16.mxu0 %v3979
        %4472 = vmatpush1.bf16.msra.mxu0 %v3978
        %4473 = vmatprep.subr.bf16.mxu0 %v4039
        %4474 = vmatpush2.bf16.msra.mxu0 %v4038
        %4475 = vmatprep.subr.bf16.mxu0 %v4035
        %4476 = vmatpush2.bf16.msra.mxu0 %v4034
        %4477 = vmatprep.subr.bf16.mxu0 %v4031
        %4478 = vmatpush2.bf16.msra.mxu0 %v4030
        %4479 = vmatprep.subr.bf16.mxu0 %v4027
        %4480 = vmatpush2.bf16.msra.mxu0 %v4026
        %4481 = vmatprep.subr.bf16.mxu0 %v4023
        %4482 = vmatpush2.bf16.msra.mxu0 %v4022
        %4483 = vmatprep.subr.bf16.mxu0 %v4019
        %4484 = vmatpush2.bf16.msra.mxu0 %v4018
        %4485 = vmatprep.subr.bf16.mxu0 %v4015
        %4486 = vmatpush2.bf16.msra.mxu0 %v4014
        %4487 = vmatprep.subr.bf16.mxu0 %v4011
        %4488 = vmatpush2.bf16.msra.mxu0 %v4010
        %4489 = vmatprep.mubr.bf16.mxu0 %v3635
        %4490 = vmatmul.mubr.bf16.gmra.mxu0 %v3634
        %v4491 = vpop.f32.mrf.mxu0
        %v4492 = vadd.f32 %v3775, %v4491
        %v4493 = vpop.f32.mrf.mxu0
        %v4494 = vadd.f32 %v3779, %v4493
        %v4495 = vpop.f32.mrf.mxu0
        %v4496 = vadd.f32 %v3775, %v4495
        %v4497 = vpop.f32.mrf.mxu0
        %v4498 = vadd.f32 %v3779, %v4497
        %4499 = vmatprep.mubr.bf16.mxu0 %v3637
        %4500 = vmatmul.mubr.bf16.gmra.mxu0 %v3636
        %v4501 = vpop.f32.mrf.mxu0
        %v4502 = vadd.f32 %v3775, %v4501
        %v4503 = vpop.f32.mrf.mxu0
        %v4504 = vadd.f32 %v3779, %v4503
        %v4505 = vpop.f32.mrf.mxu0
        %v4506 = vadd.f32 %v3775, %v4505
        %v4507 = vpop.f32.mrf.mxu0
        %v4508 = vadd.f32 %v3779, %v4507
        %4509 = vmatprep.mubr.bf16.mxu0 %v3639
        %4510 = vmatmul.mubr.bf16.gmra.mxu0 %v3638
        %v4511 = vpop.f32.mrf.mxu0
        %v4512 = vadd.f32 %v3775, %v4511
        %v4513 = vpop.f32.mrf.mxu0
        %v4514 = vadd.f32 %v3779, %v4513
        %v4515 = vpop.f32.mrf.mxu0
        %v4516 = vadd.f32 %v3775, %v4515
        %v4517 = vpop.f32.mrf.mxu0
        %v4518 = vadd.f32 %v3779, %v4517
        %4519 = vmatprep.mubr.bf16.mxu0 %v3641
        %4520 = vmatmul.mubr.bf16.gmra.mxu0 %v3640
        %v4521 = vpop.f32.mrf.mxu0
        %v4522 = vadd.f32 %v3775, %v4521
        %v4523 = vpop.f32.mrf.mxu0
        %v4524 = vadd.f32 %v3779, %v4523
        %v4525 = vpop.f32.mrf.mxu0
        %v4526 = vadd.f32 %v3775, %v4525
        %v4527 = vpop.f32.mrf.mxu0
        %v4528 = vadd.f32 %v3779, %v4527
        %4529 = vmatprep.mubr.bf16.mxu0 %v3643
        %4530 = vmatmul.mubr.bf16.gmra.mxu0 %v3642
        %v4531 = vpop.f32.mrf.mxu0
        %v4532 = vadd.f32 %v3775, %v4531
        %v4533 = vpop.f32.mrf.mxu0
        %v4534 = vadd.f32 %v3779, %v4533
        %v4535 = vpop.f32.mrf.mxu0
        %v4536 = vadd.f32 %v3775, %v4535
        %v4537 = vpop.f32.mrf.mxu0
        %v4538 = vadd.f32 %v3779, %v4537
        %4539 = vmatprep.mubr.bf16.mxu0 %v3645
        %4540 = vmatmul.mubr.bf16.gmra.mxu0 %v3644
        %v4541 = vpop.f32.mrf.mxu0
        %v4542 = vadd.f32 %v3775, %v4541
        %v4543 = vpop.f32.mrf.mxu0
        %v4544 = vadd.f32 %v3779, %v4543
        %v4545 = vpop.f32.mrf.mxu0
        %v4546 = vadd.f32 %v3775, %v4545
        %v4547 = vpop.f32.mrf.mxu0
        %v4548 = vadd.f32 %v3779, %v4547
        %4549 = vmatprep.mubr.bf16.mxu0 %v3647
        %4550 = vmatmul.mubr.bf16.gmra.mxu0 %v3646
        %v4551 = vpop.f32.mrf.mxu0
        %v4552 = vadd.f32 %v3775, %v4551
        %v4553 = vpop.f32.mrf.mxu0
        %v4554 = vadd.f32 %v3779, %v4553
        %v4555 = vpop.f32.mrf.mxu0
        %v4556 = vadd.f32 %v3775, %v4555
        %v4557 = vpop.f32.mrf.mxu0
        %v4558 = vadd.f32 %v3779, %v4557
        %4559 = vmatprep.mubr.bf16.mxu0 %v3649
        %4560 = vmatmul.mubr.bf16.gmra.mxu0 %v3648
        %v4561 = vpop.f32.mrf.mxu0
        %v4562 = vadd.f32 %v3775, %v4561
        %v4563 = vpop.f32.mrf.mxu0
        %v4564 = vadd.f32 %v3779, %v4563
        %v4565 = vpop.f32.mrf.mxu0
        %v4566 = vadd.f32 %v3775, %v4565
        %v4567 = vpop.f32.mrf.mxu0
        %v4568 = vadd.f32 %v3779, %v4567
        %4569 = vmatprep.mubr.bf16.mxu0 %v3651
        %4570 = vmatmul.mubr.bf16.gmra.mxu0 %v3650
        %v4571 = vpop.f32.mrf.mxu0
        %v4572 = vadd.f32 %v3775, %v4571
        %v4573 = vpop.f32.mrf.mxu0
        %v4574 = vadd.f32 %v3779, %v4573
        %v4575 = vpop.f32.mrf.mxu0
        %v4576 = vadd.f32 %v3775, %v4575
        %v4577 = vpop.f32.mrf.mxu0
        %v4578 = vadd.f32 %v3779, %v4577
        %4579 = vmatprep.mubr.bf16.mxu0 %v3653
        %4580 = vmatmul.mubr.bf16.gmra.mxu0 %v3652
        %v4581 = vpop.f32.mrf.mxu0
        %v4582 = vadd.f32 %v3775, %v4581
        %v4583 = vpop.f32.mrf.mxu0
        %v4584 = vadd.f32 %v3779, %v4583
        %v4585 = vpop.f32.mrf.mxu0
        %v4586 = vadd.f32 %v3775, %v4585
        %v4587 = vpop.f32.mrf.mxu0
        %v4588 = vadd.f32 %v3779, %v4587
        %4589 = vmatprep.mubr.bf16.mxu0 %v3655
        %4590 = vmatmul.mubr.bf16.gmra.mxu0 %v3654
        %v4591 = vpop.f32.mrf.mxu0
        %v4592 = vadd.f32 %v3775, %v4591
        %v4593 = vpop.f32.mrf.mxu0
        %v4594 = vadd.f32 %v3779, %v4593
        %v4595 = vpop.f32.mrf.mxu0
        %v4596 = vadd.f32 %v3775, %v4595
        %v4597 = vpop.f32.mrf.mxu0
        %v4598 = vadd.f32 %v3779, %v4597
        %4599 = vmatprep.mubr.bf16.mxu0 %v3657
        %4600 = vmatmul.mubr.bf16.gmra.mxu0 %v3656
        %v4601 = vpop.f32.mrf.mxu0
        %v4602 = vadd.f32 %v3775, %v4601
        %v4603 = vpop.f32.mrf.mxu0
        %v4604 = vadd.f32 %v3779, %v4603
        %v4605 = vpop.f32.mrf.mxu0
        %v4606 = vadd.f32 %v3775, %v4605
        %v4607 = vpop.f32.mrf.mxu0
        %v4608 = vadd.f32 %v3779, %v4607
        %4609 = vmatprep.mubr.bf16.mxu0 %v3659
        %4610 = vmatmul.mubr.bf16.gmra.mxu0 %v3658
        %v4611 = vpop.f32.mrf.mxu0
        %v4612 = vadd.f32 %v3775, %v4611
        %v4613 = vpop.f32.mrf.mxu0
        %v4614 = vadd.f32 %v3779, %v4613
        %v4615 = vpop.f32.mrf.mxu0
        %v4616 = vadd.f32 %v3775, %v4615
        %v4617 = vpop.f32.mrf.mxu0
        %v4618 = vadd.f32 %v3779, %v4617
        %4619 = vmatprep.mubr.bf16.mxu0 %v3661
        %4620 = vmatmul.mubr.bf16.gmra.mxu0 %v3660
        %v4621 = vpop.f32.mrf.mxu0
        %v4622 = vadd.f32 %v3775, %v4621
        %v4623 = vpop.f32.mrf.mxu0
        %v4624 = vadd.f32 %v3779, %v4623
        %v4625 = vpop.f32.mrf.mxu0
        %v4626 = vadd.f32 %v3775, %v4625
        %v4627 = vpop.f32.mrf.mxu0
        %v4628 = vadd.f32 %v3779, %v4627
        %4629 = vmatprep.mubr.bf16.mxu0 %v3663
        %4630 = vmatmul.mubr.bf16.gmra.mxu0 %v3662
        %v4631 = vpop.f32.mrf.mxu0
        %v4632 = vadd.f32 %v3775, %v4631
        %v4633 = vpop.f32.mrf.mxu0
        %v4634 = vadd.f32 %v3779, %v4633
        %v4635 = vpop.f32.mrf.mxu0
        %v4636 = vadd.f32 %v3775, %v4635
        %v4637 = vpop.f32.mrf.mxu0
        %v4638 = vadd.f32 %v3779, %v4637
        %4639 = vmatprep.mubr.bf16.mxu0 %v3665
        %4640 = vmatmul.mubr.bf16.gmra.mxu0 %v3664
        %v4641 = vpop.f32.mrf.mxu0
        %v4642 = vadd.f32 %v3775, %v4641
        %v4643 = vpop.f32.mrf.mxu0
        %v4644 = vadd.f32 %v3779, %v4643
        %v4645 = vpop.f32.mrf.mxu0
        %v4646 = vadd.f32 %v3775, %v4645
        %v4647 = vpop.f32.mrf.mxu0
        %v4648 = vadd.f32 %v3779, %v4647
        %4649 = vmatprep.mubr.bf16.mxu0 %v3667
        %4650 = vmatmul.mubr.bf16.gmra.mxu0 %v3666
        %v4651 = vpop.f32.mrf.mxu0
        %v4652 = vadd.f32 %v3775, %v4651
        %v4653 = vpop.f32.mrf.mxu0
        %v4654 = vadd.f32 %v3779, %v4653
        %v4655 = vpop.f32.mrf.mxu0
        %v4656 = vadd.f32 %v3775, %v4655
        %v4657 = vpop.f32.mrf.mxu0
        %v4658 = vadd.f32 %v3779, %v4657
        %4659 = vmatprep.mubr.bf16.mxu0 %v3669
        %4660 = vmatmul.mubr.bf16.gmra.mxu0 %v3668
        %v4661 = vpop.f32.mrf.mxu0
        %v4662 = vadd.f32 %v3775, %v4661
        %v4663 = vpop.f32.mrf.mxu0
        %v4664 = vadd.f32 %v3779, %v4663
        %v4665 = vpop.f32.mrf.mxu0
        %v4666 = vadd.f32 %v3775, %v4665
        %v4667 = vpop.f32.mrf.mxu0
        %v4668 = vadd.f32 %v3779, %v4667
        %4669 = vmatprep.mubr.bf16.mxu0 %v3671
        %4670 = vmatmul.mubr.bf16.gmra.mxu0 %v3670
        %v4671 = vpop.f32.mrf.mxu0
        %v4672 = vadd.f32 %v3775, %v4671
        %v4673 = vpop.f32.mrf.mxu0
        %v4674 = vadd.f32 %v3779, %v4673
        %v4675 = vpop.f32.mrf.mxu0
        %v4676 = vadd.f32 %v3775, %v4675
        %v4677 = vpop.f32.mrf.mxu0
        %v4678 = vadd.f32 %v3779, %v4677
        %4679 = vmatprep.mubr.bf16.mxu0 %v3673
        %4680 = vmatmul.mubr.bf16.gmra.mxu0 %v3672
        %v4681 = vpop.f32.mrf.mxu0
        %v4682 = vadd.f32 %v3775, %v4681
        %v4683 = vpop.f32.mrf.mxu0
        %v4684 = vadd.f32 %v3779, %v4683
        %v4685 = vpop.f32.mrf.mxu0
        %v4686 = vadd.f32 %v3775, %v4685
        %v4687 = vpop.f32.mrf.mxu0
        %v4688 = vadd.f32 %v3779, %v4687
        %4689 = vmatprep.mubr.bf16.mxu0 %v3675
        %4690 = vmatmul.mubr.bf16.gmra.mxu0 %v3674
        %v4691 = vpop.f32.mrf.mxu0
        %v4692 = vadd.f32 %v3775, %v4691
        %v4693 = vpop.f32.mrf.mxu0
        %v4694 = vadd.f32 %v3779, %v4693
        %v4695 = vpop.f32.mrf.mxu0
        %v4696 = vadd.f32 %v3775, %v4695
        %v4697 = vpop.f32.mrf.mxu0
        %v4698 = vadd.f32 %v3779, %v4697
        %4699 = vmatprep.mubr.bf16.mxu0 %v3677
        %4700 = vmatmul.mubr.bf16.gmra.mxu0 %v3676
        %v4701 = vpop.f32.mrf.mxu0
        %v4702 = vadd.f32 %v3775, %v4701
        %v4703 = vpop.f32.mrf.mxu0
        %v4704 = vadd.f32 %v3779, %v4703
        %v4705 = vpop.f32.mrf.mxu0
        %v4706 = vadd.f32 %v3775, %v4705
        %v4707 = vpop.f32.mrf.mxu0
        %v4708 = vadd.f32 %v3779, %v4707
        %4709 = vmatprep.mubr.bf16.mxu0 %v3679
        %4710 = vmatmul.mubr.bf16.gmra.mxu0 %v3678
        %v4711 = vpop.f32.mrf.mxu0
        %v4712 = vadd.f32 %v3775, %v4711
        %v4713 = vpop.f32.mrf.mxu0
        %v4714 = vadd.f32 %v3779, %v4713
        %v4715 = vpop.f32.mrf.mxu0
        %v4716 = vadd.f32 %v3775, %v4715
        %v4717 = vpop.f32.mrf.mxu0
        %v4718 = vadd.f32 %v3779, %v4717
        %4719 = vmatprep.mubr.bf16.mxu0 %v3681
        %4720 = vmatmul.mubr.bf16.gmra.mxu0 %v3680
        %v4721 = vpop.f32.mrf.mxu0
        %v4722 = vadd.f32 %v3775, %v4721
        %v4723 = vpop.f32.mrf.mxu0
        %v4724 = vadd.f32 %v3779, %v4723
        %v4725 = vpop.f32.mrf.mxu0
        %v4726 = vadd.f32 %v3775, %v4725
        %v4727 = vpop.f32.mrf.mxu0
        %v4728 = vadd.f32 %v3779, %v4727
        %4729 = vmatprep.mubr.bf16.mxu0 %v3683
        %4730 = vmatmul.mubr.bf16.gmra.mxu0 %v3682
        %v4731 = vpop.f32.mrf.mxu0
        %v4732 = vadd.f32 %v3775, %v4731
        %v4733 = vpop.f32.mrf.mxu0
        %v4734 = vadd.f32 %v3779, %v4733
        %v4735 = vpop.f32.mrf.mxu0
        %v4736 = vadd.f32 %v3775, %v4735
        %v4737 = vpop.f32.mrf.mxu0
        %v4738 = vadd.f32 %v3779, %v4737
        %4739 = vmatprep.mubr.bf16.mxu0 %v3685
        %4740 = vmatmul.mubr.bf16.gmra.mxu0 %v3684
        %v4741 = vpop.f32.mrf.mxu0
        %v4742 = vadd.f32 %v3775, %v4741
        %v4743 = vpop.f32.mrf.mxu0
        %v4744 = vadd.f32 %v3779, %v4743
        %v4745 = vpop.f32.mrf.mxu0
        %v4746 = vadd.f32 %v3775, %v4745
        %v4747 = vpop.f32.mrf.mxu0
        %v4748 = vadd.f32 %v3779, %v4747
        %4749 = vmatprep.mubr.bf16.mxu0 %v3687
        %4750 = vmatmul.mubr.bf16.gmra.mxu0 %v3686
        %v4751 = vpop.f32.mrf.mxu0
        %v4752 = vadd.f32 %v3775, %v4751
        %v4753 = vpop.f32.mrf.mxu0
        %v4754 = vadd.f32 %v3779, %v4753
        %v4755 = vpop.f32.mrf.mxu0
        %v4756 = vadd.f32 %v3775, %v4755
        %v4757 = vpop.f32.mrf.mxu0
        %v4758 = vadd.f32 %v3779, %v4757
        %4759 = vmatprep.mubr.bf16.mxu0 %v3689
        %4760 = vmatmul.mubr.bf16.gmra.mxu0 %v3688
        %v4761 = vpop.f32.mrf.mxu0
        %v4762 = vadd.f32 %v3775, %v4761
        %v4763 = vpop.f32.mrf.mxu0
        %v4764 = vadd.f32 %v3779, %v4763
        %v4765 = vpop.f32.mrf.mxu0
        %v4766 = vadd.f32 %v3775, %v4765
        %v4767 = vpop.f32.mrf.mxu0
        %v4768 = vadd.f32 %v3779, %v4767
        %4769 = vmatprep.mubr.bf16.mxu0 %v3691
        %4770 = vmatmul.mubr.bf16.gmra.mxu0 %v3690
        %v4771 = vpop.f32.mrf.mxu0
        %v4772 = vadd.f32 %v3775, %v4771
        %v4773 = vpop.f32.mrf.mxu0
        %v4774 = vadd.f32 %v3779, %v4773
        %v4775 = vpop.f32.mrf.mxu0
        %v4776 = vadd.f32 %v3775, %v4775
        %v4777 = vpop.f32.mrf.mxu0
        %v4778 = vadd.f32 %v3779, %v4777
        %4779 = vmatprep.mubr.bf16.mxu0 %v3693
        %4780 = vmatmul.mubr.bf16.gmra.mxu0 %v3692
        %v4781 = vpop.f32.mrf.mxu0
        %v4782 = vadd.f32 %v3775, %v4781
        %v4783 = vpop.f32.mrf.mxu0
        %v4784 = vadd.f32 %v3779, %v4783
        %v4785 = vpop.f32.mrf.mxu0
        %v4786 = vadd.f32 %v3775, %v4785
        %v4787 = vpop.f32.mrf.mxu0
        %v4788 = vadd.f32 %v3779, %v4787
        %4789 = vmatprep.mubr.bf16.mxu0 %v3695
        %4790 = vmatmul.mubr.bf16.gmra.mxu0 %v3694
        %v4791 = vpop.f32.mrf.mxu0
        %v4792 = vadd.f32 %v3775, %v4791
        %v4793 = vpop.f32.mrf.mxu0
        %v4794 = vadd.f32 %v3779, %v4793
        %v4795 = vpop.f32.mrf.mxu0
        %v4796 = vadd.f32 %v3775, %v4795
        %v4797 = vpop.f32.mrf.mxu0
        %v4798 = vadd.f32 %v3779, %v4797
        %4799 = vmatprep.mubr.bf16.mxu0 %v3697
        %4800 = vmatmul.mubr.bf16.gmra.mxu0 %v3696
        %v4801 = vpop.f32.mrf.mxu0
        %v4802 = vadd.f32 %v3775, %v4801
        %v4803 = vpop.f32.mrf.mxu0
        %v4804 = vadd.f32 %v3779, %v4803
        %v4805 = vpop.f32.mrf.mxu0
        %v4806 = vadd.f32 %v3775, %v4805
        %v4807 = vpop.f32.mrf.mxu0
        %v4808 = vadd.f32 %v3779, %v4807
        %4809 = vdwg.mxu0
        %4810 = vst [vmem:[%s459] sm:$0xff] %v4139
        %4811 = vst [vmem:[%s459 + $0x8] sm:$0xff] %v4141
        %4812 = vst [vmem:[%s459 + $0x10] sm:$0xff] %v4492
        %4813 = vst [vmem:[%s459 + $0x18] sm:$0xff] %v4494
        %4814 = vst [vmem:[%s459 + $0x20] sm:$0xff] %v4143
        %4815 = vst [vmem:[%s459 + $0x28] sm:$0xff] %v4145
        %4816 = vst [vmem:[%s459 + $0x30] sm:$0xff] %v4496
        %4817 = vst [vmem:[%s459 + $0x38] sm:$0xff] %v4498
        %4818 = vst [vmem:[%s459 + $0x40] sm:$0xff] %v4149
        %4819 = vst [vmem:[%s459 + $0x48] sm:$0xff] %v4151
        %4820 = vst [vmem:[%s459 + $0x50] sm:$0xff] %v4502
        %4821 = vst [vmem:[%s459 + $0x58] sm:$0xff] %v4504
        %4822 = vst [vmem:[%s459 + $0x60] sm:$0xff] %v4153
        %4823 = vst [vmem:[%s459 + $0x68] sm:$0xff] %v4155
        %4824 = vst [vmem:[%s459 + $0x70] sm:$0xff] %v4506
        %4825 = vst [vmem:[%s459 + $0x78] sm:$0xff] %v4508
        %4826 = vst [vmem:[%s459 + $0x80] sm:$0xff] %v4159
        %4827 = vst [vmem:[%s459 + $0x88] sm:$0xff] %v4161
        %4828 = vst [vmem:[%s459 + $0x90] sm:$0xff] %v4512
        %4829 = vst [vmem:[%s459 + $0x98] sm:$0xff] %v4514
        %4830 = vst [vmem:[%s459 + $0xa0] sm:$0xff] %v4163
        %4831 = vst [vmem:[%s459 + $0xa8] sm:$0xff] %v4165
        %4832 = vst [vmem:[%s459 + $0xb0] sm:$0xff] %v4516
        %4833 = vst [vmem:[%s459 + $0xb8] sm:$0xff] %v4518
        %4834 = vst [vmem:[%s459 + $0xc0] sm:$0xff] %v4169
        %4835 = vst [vmem:[%s459 + $0xc8] sm:$0xff] %v4171
        %4836 = vst [vmem:[%s459 + $0xd0] sm:$0xff] %v4522
        %4837 = vst [vmem:[%s459 + $0xd8] sm:$0xff] %v4524
        %4838 = vst [vmem:[%s459 + $0xe0] sm:$0xff] %v4173
        %4839 = vst [vmem:[%s459 + $0xe8] sm:$0xff] %v4175
        %4840 = vst [vmem:[%s459 + $0xf0] sm:$0xff] %v4526
        %4841 = vst [vmem:[%s459 + $0xf8] sm:$0xff] %v4528
        %4842 = vst [vmem:[%s459 + $0x100] sm:$0xff] %v4179
        %4843 = vst [vmem:[%s459 + $0x108] sm:$0xff] %v4181
        %4844 = vst [vmem:[%s459 + $0x110] sm:$0xff] %v4532
        %4845 = vst [vmem:[%s459 + $0x118] sm:$0xff] %v4534
        %4846 = vst [vmem:[%s459 + $0x120] sm:$0xff] %v4183
        %4847 = vst [vmem:[%s459 + $0x128] sm:$0xff] %v4185
        %4848 = vst [vmem:[%s459 + $0x130] sm:$0xff] %v4536
        %4849 = vst [vmem:[%s459 + $0x138] sm:$0xff] %v4538
        %4850 = vst [vmem:[%s459 + $0x140] sm:$0xff] %v4189
        %4851 = vst [vmem:[%s459 + $0x148] sm:$0xff] %v4191
        %4852 = vst [vmem:[%s459 + $0x150] sm:$0xff] %v4542
        %4853 = vst [vmem:[%s459 + $0x158] sm:$0xff] %v4544
        %4854 = vst [vmem:[%s459 + $0x160] sm:$0xff] %v4193
        %4855 = vst [vmem:[%s459 + $0x168] sm:$0xff] %v4195
        %4856 = vst [vmem:[%s459 + $0x170] sm:$0xff] %v4546
        %4857 = vst [vmem:[%s459 + $0x178] sm:$0xff] %v4548
        %4858 = vst [vmem:[%s459 + $0x180] sm:$0xff] %v4199
        %4859 = vst [vmem:[%s459 + $0x188] sm:$0xff] %v4201
        %4860 = vst [vmem:[%s459 + $0x190] sm:$0xff] %v4552
        %4861 = vst [vmem:[%s459 + $0x198] sm:$0xff] %v4554
        %4862 = vst [vmem:[%s459 + $0x1a0] sm:$0xff] %v4203
        %4863 = vst [vmem:[%s459 + $0x1a8] sm:$0xff] %v4205
        %4864 = vst [vmem:[%s459 + $0x1b0] sm:$0xff] %v4556
        %4865 = vst [vmem:[%s459 + $0x1b8] sm:$0xff] %v4558
        %4866 = vst [vmem:[%s459 + $0x1c0] sm:$0xff] %v4209
        %4867 = vst [vmem:[%s459 + $0x1c8] sm:$0xff] %v4211
        %4868 = vst [vmem:[%s459 + $0x1d0] sm:$0xff] %v4562
        %4869 = vst [vmem:[%s459 + $0x1d8] sm:$0xff] %v4564
        %4870 = vst [vmem:[%s459 + $0x1e0] sm:$0xff] %v4213
        %4871 = vst [vmem:[%s459 + $0x1e8] sm:$0xff] %v4215
        %4872 = vst [vmem:[%s459 + $0x1f0] sm:$0xff] %v4566
        %4873 = vst [vmem:[%s459 + $0x1f8] sm:$0xff] %v4568
        %4874 = vst [vmem:[%s459 + $0x200] sm:$0xff] %v4219
        %4875 = vst [vmem:[%s459 + $0x208] sm:$0xff] %v4221
        %4876 = vst [vmem:[%s459 + $0x210] sm:$0xff] %v4572
        %4877 = vst [vmem:[%s459 + $0x218] sm:$0xff] %v4574
        %4878 = vst [vmem:[%s459 + $0x220] sm:$0xff] %v4223
        %4879 = vst [vmem:[%s459 + $0x228] sm:$0xff] %v4225
        %4880 = vst [vmem:[%s459 + $0x230] sm:$0xff] %v4576
        %4881 = vst [vmem:[%s459 + $0x238] sm:$0xff] %v4578
        %4882 = vst [vmem:[%s459 + $0x240] sm:$0xff] %v4229
        %4883 = vst [vmem:[%s459 + $0x248] sm:$0xff] %v4231
        %4884 = vst [vmem:[%s459 + $0x250] sm:$0xff] %v4582
        %4885 = vst [vmem:[%s459 + $0x258] sm:$0xff] %v4584
        %4886 = vst [vmem:[%s459 + $0x260] sm:$0xff] %v4233
        %4887 = vst [vmem:[%s459 + $0x268] sm:$0xff] %v4235
        %4888 = vst [vmem:[%s459 + $0x270] sm:$0xff] %v4586
        %4889 = vst [vmem:[%s459 + $0x278] sm:$0xff] %v4588
        %4890 = vst [vmem:[%s459 + $0x280] sm:$0xff] %v4239
        %4891 = vst [vmem:[%s459 + $0x288] sm:$0xff] %v4241
        %4892 = vst [vmem:[%s459 + $0x290] sm:$0xff] %v4592
        %4893 = vst [vmem:[%s459 + $0x298] sm:$0xff] %v4594
        %4894 = vst [vmem:[%s459 + $0x2a0] sm:$0xff] %v4243
        %4895 = vst [vmem:[%s459 + $0x2a8] sm:$0xff] %v4245
        %4896 = vst [vmem:[%s459 + $0x2b0] sm:$0xff] %v4596
        %4897 = vst [vmem:[%s459 + $0x2b8] sm:$0xff] %v4598
        %4898 = vst [vmem:[%s459 + $0x2c0] sm:$0xff] %v4249
        %4899 = vst [vmem:[%s459 + $0x2c8] sm:$0xff] %v4251
        %4900 = vst [vmem:[%s459 + $0x2d0] sm:$0xff] %v4602
        %4901 = vst [vmem:[%s459 + $0x2d8] sm:$0xff] %v4604
        %4902 = vst [vmem:[%s459 + $0x2e0] sm:$0xff] %v4253
        %4903 = vst [vmem:[%s459 + $0x2e8] sm:$0xff] %v4255
        %4904 = vst [vmem:[%s459 + $0x2f0] sm:$0xff] %v4606
        %4905 = vst [vmem:[%s459 + $0x2f8] sm:$0xff] %v4608
        %4906 = vst [vmem:[%s459 + $0x300] sm:$0xff] %v4259
        %4907 = vst [vmem:[%s459 + $0x308] sm:$0xff] %v4261
        %4908 = vst [vmem:[%s459 + $0x310] sm:$0xff] %v4612
        %4909 = vst [vmem:[%s459 + $0x318] sm:$0xff] %v4614
        %4910 = vst [vmem:[%s459 + $0x320] sm:$0xff] %v4263
        %4911 = vst [vmem:[%s459 + $0x328] sm:$0xff] %v4265
        %4912 = vst [vmem:[%s459 + $0x330] sm:$0xff] %v4616
        %4913 = vst [vmem:[%s459 + $0x338] sm:$0xff] %v4618
        %4914 = vst [vmem:[%s459 + $0x340] sm:$0xff] %v4269
        %4915 = vst [vmem:[%s459 + $0x348] sm:$0xff] %v4271
        %4916 = vst [vmem:[%s459 + $0x350] sm:$0xff] %v4622
        %4917 = vst [vmem:[%s459 + $0x358] sm:$0xff] %v4624
        %4918 = vst [vmem:[%s459 + $0x360] sm:$0xff] %v4273
        %4919 = vst [vmem:[%s459 + $0x368] sm:$0xff] %v4275
        %4920 = vst [vmem:[%s459 + $0x370] sm:$0xff] %v4626
        %4921 = vst [vmem:[%s459 + $0x378] sm:$0xff] %v4628
        %4922 = vst [vmem:[%s459 + $0x380] sm:$0xff] %v4279
        %4923 = vst [vmem:[%s459 + $0x388] sm:$0xff] %v4281
        %4924 = vst [vmem:[%s459 + $0x390] sm:$0xff] %v4632
        %4925 = vst [vmem:[%s459 + $0x398] sm:$0xff] %v4634
        %4926 = vst [vmem:[%s459 + $0x3a0] sm:$0xff] %v4283
        %4927 = vst [vmem:[%s459 + $0x3a8] sm:$0xff] %v4285
        %4928 = vst [vmem:[%s459 + $0x3b0] sm:$0xff] %v4636
        %4929 = vst [vmem:[%s459 + $0x3b8] sm:$0xff] %v4638
        %4930 = vst [vmem:[%s459 + $0x3c0] sm:$0xff] %v4289
        %4931 = vst [vmem:[%s459 + $0x3c8] sm:$0xff] %v4291
        %4932 = vst [vmem:[%s459 + $0x3d0] sm:$0xff] %v4642
        %4933 = vst [vmem:[%s459 + $0x3d8] sm:$0xff] %v4644
        %4934 = vst [vmem:[%s459 + $0x3e0] sm:$0xff] %v4293
        %4935 = vst [vmem:[%s459 + $0x3e8] sm:$0xff] %v4295
        %4936 = vst [vmem:[%s459 + $0x3f0] sm:$0xff] %v4646
        %4937 = vst [vmem:[%s459 + $0x3f8] sm:$0xff] %v4648
        %4938 = vst [vmem:[%s459 + $0x400] sm:$0xff] %v4299
        %4939 = vst [vmem:[%s459 + $0x408] sm:$0xff] %v4301
        %4940 = vst [vmem:[%s459 + $0x410] sm:$0xff] %v4652
        %4941 = vst [vmem:[%s459 + $0x418] sm:$0xff] %v4654
        %4942 = vst [vmem:[%s459 + $0x420] sm:$0xff] %v4303
        %4943 = vst [vmem:[%s459 + $0x428] sm:$0xff] %v4305
        %4944 = vst [vmem:[%s459 + $0x430] sm:$0xff] %v4656
        %4945 = vst [vmem:[%s459 + $0x438] sm:$0xff] %v4658
        %4946 = vst [vmem:[%s459 + $0x440] sm:$0xff] %v4309
        %4947 = vst [vmem:[%s459 + $0x448] sm:$0xff] %v4311
        %4948 = vst [vmem:[%s459 + $0x450] sm:$0xff] %v4662
        %4949 = vst [vmem:[%s459 + $0x458] sm:$0xff] %v4664
        %4950 = vst [vmem:[%s459 + $0x460] sm:$0xff] %v4313
        %4951 = vst [vmem:[%s459 + $0x468] sm:$0xff] %v4315
        %4952 = vst [vmem:[%s459 + $0x470] sm:$0xff] %v4666
        %4953 = vst [vmem:[%s459 + $0x478] sm:$0xff] %v4668
        %4954 = vst [vmem:[%s459 + $0x480] sm:$0xff] %v4319
        %4955 = vst [vmem:[%s459 + $0x488] sm:$0xff] %v4321
        %4956 = vst [vmem:[%s459 + $0x490] sm:$0xff] %v4672
        %4957 = vst [vmem:[%s459 + $0x498] sm:$0xff] %v4674
        %4958 = vst [vmem:[%s459 + $0x4a0] sm:$0xff] %v4323
        %4959 = vst [vmem:[%s459 + $0x4a8] sm:$0xff] %v4325
        %4960 = vst [vmem:[%s459 + $0x4b0] sm:$0xff] %v4676
        %4961 = vst [vmem:[%s459 + $0x4b8] sm:$0xff] %v4678
        %4962 = vst [vmem:[%s459 + $0x4c0] sm:$0xff] %v4329
        %4963 = vst [vmem:[%s459 + $0x4c8] sm:$0xff] %v4331
        %4964 = vst [vmem:[%s459 + $0x4d0] sm:$0xff] %v4682
        %4965 = vst [vmem:[%s459 + $0x4d8] sm:$0xff] %v4684
        %4966 = vst [vmem:[%s459 + $0x4e0] sm:$0xff] %v4333
        %4967 = vst [vmem:[%s459 + $0x4e8] sm:$0xff] %v4335
        %4968 = vst [vmem:[%s459 + $0x4f0] sm:$0xff] %v4686
        %4969 = vst [vmem:[%s459 + $0x4f8] sm:$0xff] %v4688
        %4970 = vst [vmem:[%s459 + $0x500] sm:$0xff] %v4339
        %4971 = vst [vmem:[%s459 + $0x508] sm:$0xff] %v4341
        %4972 = vst [vmem:[%s459 + $0x510] sm:$0xff] %v4692
        %4973 = vst [vmem:[%s459 + $0x518] sm:$0xff] %v4694
        %4974 = vst [vmem:[%s459 + $0x520] sm:$0xff] %v4343
        %4975 = vst [vmem:[%s459 + $0x528] sm:$0xff] %v4345
        %4976 = vst [vmem:[%s459 + $0x530] sm:$0xff] %v4696
        %4977 = vst [vmem:[%s459 + $0x538] sm:$0xff] %v4698
        %4978 = vst [vmem:[%s459 + $0x540] sm:$0xff] %v4349
        %4979 = vst [vmem:[%s459 + $0x548] sm:$0xff] %v4351
        %4980 = vst [vmem:[%s459 + $0x550] sm:$0xff] %v4702
        %4981 = vst [vmem:[%s459 + $0x558] sm:$0xff] %v4704
        %4982 = vst [vmem:[%s459 + $0x560] sm:$0xff] %v4353
        %4983 = vst [vmem:[%s459 + $0x568] sm:$0xff] %v4355
        %4984 = vst [vmem:[%s459 + $0x570] sm:$0xff] %v4706
        %4985 = vst [vmem:[%s459 + $0x578] sm:$0xff] %v4708
        %4986 = vst [vmem:[%s459 + $0x580] sm:$0xff] %v4359
        %4987 = vst [vmem:[%s459 + $0x588] sm:$0xff] %v4361
        %4988 = vst [vmem:[%s459 + $0x590] sm:$0xff] %v4712
        %4989 = vst [vmem:[%s459 + $0x598] sm:$0xff] %v4714
        %4990 = vst [vmem:[%s459 + $0x5a0] sm:$0xff] %v4363
        %4991 = vst [vmem:[%s459 + $0x5a8] sm:$0xff] %v4365
        %4992 = vst [vmem:[%s459 + $0x5b0] sm:$0xff] %v4716
        %4993 = vst [vmem:[%s459 + $0x5b8] sm:$0xff] %v4718
        %4994 = vst [vmem:[%s459 + $0x5c0] sm:$0xff] %v4369
        %4995 = vst [vmem:[%s459 + $0x5c8] sm:$0xff] %v4371
        %4996 = vst [vmem:[%s459 + $0x5d0] sm:$0xff] %v4722
        %4997 = vst [vmem:[%s459 + $0x5d8] sm:$0xff] %v4724
        %4998 = vst [vmem:[%s459 + $0x5e0] sm:$0xff] %v4373
        %4999 = vst [vmem:[%s459 + $0x5e8] sm:$0xff] %v4375
        %5000 = vst [vmem:[%s459 + $0x5f0] sm:$0xff] %v4726
        %5001 = vst [vmem:[%s459 + $0x5f8] sm:$0xff] %v4728
        %5002 = vst [vmem:[%s459 + $0x600] sm:$0xff] %v4379
        %5003 = vst [vmem:[%s459 + $0x608] sm:$0xff] %v4381
        %5004 = vst [vmem:[%s459 + $0x610] sm:$0xff] %v4732
        %5005 = vst [vmem:[%s459 + $0x618] sm:$0xff] %v4734
        %5006 = vst [vmem:[%s459 + $0x620] sm:$0xff] %v4383
        %5007 = vst [vmem:[%s459 + $0x628] sm:$0xff] %v4385
        %5008 = vst [vmem:[%s459 + $0x630] sm:$0xff] %v4736
        %5009 = vst [vmem:[%s459 + $0x638] sm:$0xff] %v4738
        %5010 = vst [vmem:[%s459 + $0x640] sm:$0xff] %v4389
        %5011 = vst [vmem:[%s459 + $0x648] sm:$0xff] %v4391
        %5012 = vst [vmem:[%s459 + $0x650] sm:$0xff] %v4742
        %5013 = vst [vmem:[%s459 + $0x658] sm:$0xff] %v4744
        %5014 = vst [vmem:[%s459 + $0x660] sm:$0xff] %v4393
        %5015 = vst [vmem:[%s459 + $0x668] sm:$0xff] %v4395
        %5016 = vst [vmem:[%s459 + $0x670] sm:$0xff] %v4746
        %5017 = vst [vmem:[%s459 + $0x678] sm:$0xff] %v4748
        %5018 = vst [vmem:[%s459 + $0x680] sm:$0xff] %v4399
        %5019 = vst [vmem:[%s459 + $0x688] sm:$0xff] %v4401
        %5020 = vst [vmem:[%s459 + $0x690] sm:$0xff] %v4752
        %5021 = vst [vmem:[%s459 + $0x698] sm:$0xff] %v4754
        %5022 = vst [vmem:[%s459 + $0x6a0] sm:$0xff] %v4403
        %5023 = vst [vmem:[%s459 + $0x6a8] sm:$0xff] %v4405
        %5024 = vst [vmem:[%s459 + $0x6b0] sm:$0xff] %v4756
        %5025 = vst [vmem:[%s459 + $0x6b8] sm:$0xff] %v4758
        %5026 = vst [vmem:[%s459 + $0x6c0] sm:$0xff] %v4409
        %5027 = vst [vmem:[%s459 + $0x6c8] sm:$0xff] %v4411
        %5028 = vst [vmem:[%s459 + $0x6d0] sm:$0xff] %v4762
        %5029 = vst [vmem:[%s459 + $0x6d8] sm:$0xff] %v4764
        %5030 = vst [vmem:[%s459 + $0x6e0] sm:$0xff] %v4413
        %5031 = vst [vmem:[%s459 + $0x6e8] sm:$0xff] %v4415
        %5032 = vst [vmem:[%s459 + $0x6f0] sm:$0xff] %v4766
        %5033 = vst [vmem:[%s459 + $0x6f8] sm:$0xff] %v4768
        %5034 = vst [vmem:[%s459 + $0x700] sm:$0xff] %v4419
        %5035 = vst [vmem:[%s459 + $0x708] sm:$0xff] %v4421
        %5036 = vst [vmem:[%s459 + $0x710] sm:$0xff] %v4772
        %5037 = vst [vmem:[%s459 + $0x718] sm:$0xff] %v4774
        %5038 = vst [vmem:[%s459 + $0x720] sm:$0xff] %v4423
        %5039 = vst [vmem:[%s459 + $0x728] sm:$0xff] %v4425
        %5040 = vst [vmem:[%s459 + $0x730] sm:$0xff] %v4776
        %5041 = vst [vmem:[%s459 + $0x738] sm:$0xff] %v4778
        %5042 = vst [vmem:[%s459 + $0x740] sm:$0xff] %v4429
        %5043 = vst [vmem:[%s459 + $0x748] sm:$0xff] %v4431
        %5044 = vst [vmem:[%s459 + $0x750] sm:$0xff] %v4782
        %5045 = vst [vmem:[%s459 + $0x758] sm:$0xff] %v4784
        %5046 = vst [vmem:[%s459 + $0x760] sm:$0xff] %v4433
        %5047 = vst [vmem:[%s459 + $0x768] sm:$0xff] %v4435
        %5048 = vst [vmem:[%s459 + $0x770] sm:$0xff] %v4786
        %5049 = vst [vmem:[%s459 + $0x778] sm:$0xff] %v4788
        %5050 = vst [vmem:[%s459 + $0x780] sm:$0xff] %v4439
        %5051 = vst [vmem:[%s459 + $0x788] sm:$0xff] %v4441
        %5052 = vst [vmem:[%s459 + $0x790] sm:$0xff] %v4792
        %5053 = vst [vmem:[%s459 + $0x798] sm:$0xff] %v4794
        %5054 = vst [vmem:[%s459 + $0x7a0] sm:$0xff] %v4443
        %5055 = vst [vmem:[%s459 + $0x7a8] sm:$0xff] %v4445
        %5056 = vst [vmem:[%s459 + $0x7b0] sm:$0xff] %v4796
        %5057 = vst [vmem:[%s459 + $0x7b8] sm:$0xff] %v4798
        %5058 = vst [vmem:[%s459 + $0x7c0] sm:$0xff] %v4449
        %5059 = vst [vmem:[%s459 + $0x7c8] sm:$0xff] %v4451
        %5060 = vst [vmem:[%s459 + $0x7d0] sm:$0xff] %v4802
        %5061 = vst [vmem:[%s459 + $0x7d8] sm:$0xff] %v4804
        %5062 = vst [vmem:[%s459 + $0x7e0] sm:$0xff] %v4453
        %5063 = vst [vmem:[%s459 + $0x7e8] sm:$0xff] %v4455
        %5064 = vst [vmem:[%s459 + $0x7f0] sm:$0xff] %v4806
        %5065 = vst [vmem:[%s459 + $0x7f8] sm:$0xff] %v4808
        %s5066 = sand.u32 %s232, 1
        %s5067 = scalar_lea.sflag [#allocation4], %s5066
        %s5068 = sand.u32 %s232, 1
        %s5069 = smul.addr %s5068, 2048
        %s5070 = scalar_lea.vmem [#allocation17], %s5069
        // Predicated region
        $region93: #{tpu_custom_call.1} parent=55 // pred_check
          %p5071 = pneg %p242
        $region94: #{tpu_custom_call.1} parent=55 // pred_check_branch
          %5073 = sbr.rel (%p5071) target = $region96
        $region95: #{tpu_custom_call.1} parent=55 // pred_region
          %s5074 = smul.u32 64, %s30
          %s5076 = ssub.s32 32768, 32768
          %5077 = vsyncadd %s5067, %s5076
          %s5078 = smul.addr %s5074, 4
          %s5079 = smul.addr %s5078, 128
          %s5080 = scalar_lea.hbm %s9, %s5079
          %s5081 = sshll.u32 %s5070, 4
          %s5082 = int_to_ptr.vmem [resolvable:$true] %s5081
          %5087 = dma.vmem_to_hbm [thread:$0]  %s5082, 32768, %s5080, %s5067, 512, 512, 32
        $region96: #{tpu_custom_call.1} parent=55 // pred_fallthru
          _
      $region56: #{tpu_custom_call.1} parent=5 // pred_fallthru
        _
      %p5088 = scmp.le.s32.totalorder 2, %s25
      // Predicated region
      $region97: #{tpu_custom_call.1} parent=5 // pred_check
        %p5089 = pneg %p5088
      $region98: #{tpu_custom_call.1} parent=5 // pred_check_branch
        %5091 = sbr.rel (%p5089) target = $region100
      $region99: #{tpu_custom_call.1} parent=5 // pred_region
        %s5092 = ssub.s32 %s25, 2
        // Predicated region
        $region101: #{tpu_custom_call.1} parent=99 // pred_check
          %p5093 = pneg %p248
        $region102: #{tpu_custom_call.1} parent=99 // pred_check_branch
          %5095 = sbr.rel (%p5093) target = $region104
        $region103: #{tpu_custom_call.1} parent=99 // pred_region
          %s5096 = sand.u32 %s233, 1
          %s5097 = scalar_lea.sflag [#allocation4], %s5096
          %s5098 = sand.u32 %s233, 1
          %s5099 = smul.addr %s5098, 2048
          %s5100 = scalar_lea.vmem [#allocation17], %s5099
          %5101 = dma.done %s5097, 32768
        $region104: #{tpu_custom_call.1} parent=99 // pred_fallthru
          _
      $region100: #{tpu_custom_call.1} parent=5 // pred_fallthru
        _
    $region6: #{tpu_custom_call.1} parent=1 // loop_footer
      %s29 = sadd.s32 1, %s25
    $region7: #{tpu_custom_call.1} parent=1 // loop_footer_branch
      %24 = sbr.rel target = $region3
    $region8: #{tpu_custom_call.1} parent=1 // loop_exit
      _
    %5102 = vsyncpa [#allocation3], 1
    %s5103 = scalar_lea.sflag [#allocation3], 1
    %5104 = vsyncpa %s5103, 1
    %5105 = vsyncpa [#allocation6], 1
    %5106 = vsyncpa [#allocation9], 1
    %5107 = vsyncpa [#allocation12], 1
    %5108 = vsyncpa [#allocation15], 1
    %5109 = vsyncpa [#allocation4], 1
    %s5110 = scalar_lea.sflag [#allocation4], 1
    %5111 = vsyncpa %s5110, 1

</llo_original>
